<compile_context>
chip_gen: v5e
topology: v5e:2x2
jax: 0.10.0
libtpu: 0.0.40
codegen_flags: <defaults>
</compile_context>

<pallas_src>
import functools

import jax
import jax.numpy as jnp
import numpy as np
from jax import lax
from jax.experimental import pallas as pl
from jax.experimental.pallas import tpu as pltpu

_LANE = 128      # channel dims are padded to a multiple of the lane width
_SUBLANE = 8     # padded image width is a multiple of the sublane width


def _round_up(x, m):
    return (x + m - 1) // m * m


def _fused_double_conv_kernel(x_hbm, w1_ref, b1_ref, w2_ref, b2_ref, o_ref,
                              xwin_ref, dma_sem, *, th, height, width):
    """One (batch, row-tile) step of Conv3x3+ReLU -> Conv3x3+ReLU."""
    n = pl.program_id(0)
    t = pl.program_id(1)
    r0 = pl.multiple_of(t * th, _SUBLANE)   # first output row of this tile

    # Manual halo DMA: rows [r0, r0 + th + 4) of the padded input (overlapping
    # row windows cannot be expressed with a plain blocked index_map).
    cp = pltpu.make_async_copy(
        x_hbm.at[n, pl.ds(r0, th + 4)], xwin_ref, dma_sem.at[0])
    cp.start()
    cp.wait()
    # TODO(synk): double-buffer this input DMA across grid steps so the load
    # overlaps compute (weights/output traffic is already auto-pipelined).

    wp = xwin_ref.shape[1]                       # padded width, multiple of 8
    x = xwin_ref[...].astype(jnp.float32)        # (th+4, wp, Ci)

    def shift_w(a, dx):
        # a[:, w, :] -> a[:, w + dx, :], zero-filled on the right.
        if dx == 0:
            return a
        z = jnp.zeros((a.shape[0], dx, a.shape[2]), a.dtype)
        return jnp.concatenate([a[:, dx:, :], z], axis=1)

    def conv3x3_relu(a, wf_ref, b_ref, rows_out):
        # a: (rows_in, wp, c).  wf_ref: (3, 3*c, co), dy-major / dx-major /
        # channel-minor, matching the shifted-channel concat below.
        rows_in, _, c = a.shape
        co = wf_ref.shape[2]
        # Fold the three dx taps into the contraction depth: (rows_in*wp, 3c).
        cat = jnp.concatenate(
            [shift_w(a, 0), shift_w(a, 1), shift_w(a, 2)], axis=-1)
        cat = cat.reshape(rows_in * wp, 3 * c)   # tile-exact: wp%8==0, 3c%128==0
        acc = jnp.zeros((rows_out * wp, co), jnp.float32)
        for dy in range(3):
            lhs = cat[dy * wp:(dy + rows_out) * wp, :]   # aligned row slice
            acc = acc + jnp.dot(lhs, wf_ref[dy],
                                preferred_element_type=jnp.float32)
        return jnp.maximum(acc + b_ref[...], 0.0)

    cm = w1_ref.shape[2]
    co = w2_ref.shape[2]

    # First conv + ReLU: intermediate rows [r0-1, r0+th+1), full padded width.
    mid = conv3x3_relu(x, w1_ref, b1_ref, th + 2).reshape(th + 2, wp, cm)

    # Zero everything that must act as the second conv's zero padding (and any
    # rows/cols outside the real image).  Intermediate row index i maps to
    # global row r0-1+i (valid iff in [0, H)); padded col u maps to image col
    # u-1 (valid iff 1 <= u <= W).
    ri = lax.broadcasted_iota(jnp.int32, (th + 2, wp, cm), 0)
    ui = lax.broadcasted_iota(jnp.int32, (th + 2, wp, cm), 1)
    g = ri + (r0 - 1)
    keep = (g >= 0) & (g < height) & (ui >= 1) & (ui <= width)
    mid = jnp.where(keep, mid, 0.0)

    # Second conv + ReLU: final output rows [r0, r0+th).
    out = conv3x3_relu(mid, w2_ref, b2_ref, th).reshape(th, wp, co)
    o_ref[0] = out.astype(o_ref.dtype)


def double_convolution(x_nchw, params, *, row_tile=8):
    """Forward pass of DoubleConvolution. Input/output are NCHW like PyTorch."""
    w1, b1, w2, b2 = params                 # w: (3, 3, Cin, Cout), b: (Cout,)
    nb, cin, h, w = x_nchw.shape
    cout = w1.shape[-1]
    assert row_tile % _SUBLANE == 0

    ci = _round_up(cin, _LANE)              # lane-dense channel padding
    cm = _round_up(cout, _LANE)
    co = cm
    hp = _round_up(h, row_tile)             # row-tileable height
    wp = _round_up(w + 4, _SUBLANE)         # 2 zero cols left, >=1 right

    # NCHW -> NHWC, zero-pad: 2 halo rows top/bottom, 2 cols left, the rest of
    # the width/height/channel padding is zeros that get masked / dropped.
    x = jnp.transpose(x_nchw, (0, 2, 3, 1))
    x = jnp.pad(x, ((0, 0), (2, hp - h + 2), (2, wp - w - 2), (0, ci - cin)))

    # Fold weights to (3, 3*Cin_p, Cout_p): dy major, then dx-major / ch-minor.
    w1f = jnp.pad(w1, ((0, 0), (0, 0), (0, ci - cin), (0, cm - cout)))
    w1f = w1f.reshape(3, 3 * ci, cm)
    w2f = jnp.pad(w2, ((0, 0), (0, 0), (0, cm - cout), (0, co - cout)))
    w2f = w2f.reshape(3, 3 * cm, co)
    b1f = jnp.pad(b1, (0, cm - cout)).reshape(1, cm)
    b2f = jnp.pad(b2, (0, co - cout)).reshape(1, co)

    n_row_tiles = hp // row_tile
    kernel = functools.partial(_fused_double_conv_kernel,
                               th=row_tile, height=h, width=w)

    out = pl.pallas_call(
        kernel,
        out_shape=jax.ShapeDtypeStruct((nb, hp, wp, co), x_nchw.dtype),
        grid_spec=pltpu.PrefetchScalarGridSpec(
            num_scalar_prefetch=0,
            grid=(nb, n_row_tiles),
            in_specs=[
                pl.BlockSpec(memory_space=pl.ANY),             # manual halo DMA
                pl.BlockSpec((3, 3 * ci, cm), lambda b, t: (0, 0, 0)),
                pl.BlockSpec((1, cm), lambda b, t: (0, 0)),
                pl.BlockSpec((3, 3 * cm, co), lambda b, t: (0, 0, 0)),
                pl.BlockSpec((1, co), lambda b, t: (0, 0)),
            ],
            out_specs=pl.BlockSpec((1, row_tile, wp, co),
                                   lambda b, t: (b, t, 0, 0)),
            scratch_shapes=[
                pltpu.VMEM((row_tile + 4, wp, ci), x.dtype),
                pltpu.SemaphoreType.DMA((1,)),
            ],
        ),
        compiler_params=pltpu.CompilerParams(
            dimension_semantics=("parallel", "parallel"),
            vmem_limit_bytes=48 * 1024 * 1024,   # headroom above 16/32 MiB default
        ),
    )(x, w1f, b1f, w2f, b2f)

    out = out[:, :h, :w, :cout]                 # drop alignment padding
    return jnp.transpose(out, (0, 3, 1, 2))     # NHWC -> NCHW


def init_params(key, in_channels, out_channels, dtype=jnp.float32):
    """Deterministic parameter init (shapes match nn.Conv2d(k=3, padding=1))."""
    k1, k2, k3, k4 = jax.random.split(key, 4)
    fan1 = in_channels * 9
    fan2 = out_channels * 9
    w1 = jax.random.uniform(k1, (3, 3, in_channels, out_channels), dtype,
                            minval=-1.0, maxval=1.0) / np.sqrt(fan1)
    b1 = jax.random.uniform(k2, (out_channels,), dtype,
                            minval=-1.0, maxval=1.0) / np.sqrt(fan1)
    w2 = jax.random.uniform(k3, (3, 3, out_channels, out_channels), dtype,
                            minval=-1.0, maxval=1.0) / np.sqrt(fan2)
    b2 = jax.random.uniform(k4, (out_channels,), dtype,
                            minval=-1.0, maxval=1.0) / np.sqrt(fan2)
    return w1, b1, w2, b2


def _reference(x_nchw, params):
    """Pure-JAX reference (lax conv) for correctness checking."""
    w1, b1, w2, b2 = params

    def conv(x, wk, b):
        w_oihw = jnp.transpose(wk, (3, 2, 0, 1))
        y = lax.conv_general_dilated(
            x, w_oihw, window_strides=(1, 1), padding=((1, 1), (1, 1)),
            dimension_numbers=("NCHW", "OIHW", "NCHW"),
            precision=lax.Precision.HIGHEST)
        return jnp.maximum(y + b.reshape(1, -1, 1, 1), 0.0)

    return conv(conv(x_nchw, w1, b1), w2, b2)


if __name__ == "__main__":
    key = jax.random.PRNGKey(0)
    k_x, k_p = jax.random.split(key)

    N, Cin, Cout, H, W = 2, 4, 8, 16, 16
    x = jax.random.normal(k_x, (N, Cin, H, W), dtype=jnp.float32)
    params = init_params(k_p, Cin, Cout)

    fwd = jax.jit(functools.partial(double_convolution, params=params))
    out = jax.block_until_ready(fwd(x))

    ref = _reference(x, params)
    assert out.shape == (N, Cout, H, W), out.shape
    np.testing.assert_allclose(np.asarray(out), np.asarray(ref),
                               rtol=1e-5, atol=1e-5)
    print("KERNEL_OK")
</pallas_src>

<mosaic_0001>
module attributes {stable_mosaic.version = 11 : i64} {
  func.func @_fused_double_conv_kernel(%arg0: i32, %arg1: i32, %arg2: memref<2x20x24x128xf32, #tpu.memory_space<any>>, %arg3: memref<3x384x128xf32, #tpu.memory_space<vmem>>, %arg4: memref<1x128xf32, #tpu.memory_space<vmem>>, %arg5: memref<3x384x128xf32, #tpu.memory_space<vmem>>, %arg6: memref<1x128xf32, #tpu.memory_space<vmem>>, %arg7: memref<1x8x24x128xf32, #tpu.memory_space<vmem>>, %arg8: memref<12x24x128xf32, #tpu.memory_space<vmem>>, %arg9: memref<1x!tpu.dma_semaphore, #tpu.memory_space<semaphore_mem>>) attributes {dimension_semantics = [#tpu.dimension_semantics<parallel>, #tpu.dimension_semantics<parallel>], iteration_bounds = array<i64: 2, 2>, scalar_prefetch = 0 : i64, scratch_operands = 2 : i64, tpu.core_type = #tpu.core_type<tc>, window_params = [{}, {pipeline_mode = #tpu.pipeline_mode<synchronous>, transform_indices = @transform_1, window_bounds = array<i64: 3, 384, 128>}, {pipeline_mode = #tpu.pipeline_mode<synchronous>, transform_indices = @transform_2, window_bounds = array<i64: 1, 128>}, {pipeline_mode = #tpu.pipeline_mode<synchronous>, transform_indices = @transform_3, window_bounds = array<i64: 3, 384, 128>}, {pipeline_mode = #tpu.pipeline_mode<synchronous>, transform_indices = @transform_4, window_bounds = array<i64: 1, 128>}, {transform_indices = @transform_5, window_bounds = array<i64: 1, 8, 24, 128>}]} {
    %c8_i32 = arith.constant 8 : i32
    %0 = arith.muli %arg1, %c8_i32 : i32
    %1 = tpu.assume_multiple %0, 8 : i32
    %c0_i32 = arith.constant 0 : i32
    %c0_i32_0 = arith.constant 0 : i32
    %c0_i32_1 = arith.constant 0 : i32
    %2 = tpu.memref_slice %arg2[%arg0, %1, %c0_i32_0, %c0_i32_1] : memref<2x20x24x128xf32, #tpu.memory_space<any>> -> memref<1x12x24x128xf32, #tpu.memory_space<any>>
    %3 = tpu.memref_squeeze %2 : memref<1x12x24x128xf32, #tpu.memory_space<any>> -> memref<12x24x128xf32, #tpu.memory_space<any>>
    %4 = tpu.memref_slice %arg9[%c0_i32] : memref<1x!tpu.dma_semaphore, #tpu.memory_space<semaphore_mem>> -> memref<1x!tpu.dma_semaphore, #tpu.memory_space<semaphore_mem>>
    %5 = tpu.memref_squeeze %4 : memref<1x!tpu.dma_semaphore, #tpu.memory_space<semaphore_mem>> -> memref<!tpu.dma_semaphore, #tpu.memory_space<semaphore_mem>>
    tpu.enqueue_dma source(%3 : memref<12x24x128xf32, #tpu.memory_space<any>>) target(%arg8 : memref<12x24x128xf32, #tpu.memory_space<vmem>>) target_semaphore(%5 : memref<!tpu.dma_semaphore, #tpu.memory_space<semaphore_mem>>)
    %c0_i32_2 = arith.constant 0 : i32
    %c0_i32_3 = arith.constant 0 : i32
    %c0_i32_4 = arith.constant 0 : i32
    %6 = tpu.memref_slice %arg2[%arg0, %1, %c0_i32_3, %c0_i32_4] : memref<2x20x24x128xf32, #tpu.memory_space<any>> -> memref<1x12x24x128xf32, #tpu.memory_space<any>>
    %7 = tpu.memref_squeeze %6 : memref<1x12x24x128xf32, #tpu.memory_space<any>> -> memref<12x24x128xf32, #tpu.memory_space<any>>
    %8 = tpu.memref_slice %arg9[%c0_i32_2] : memref<1x!tpu.dma_semaphore, #tpu.memory_space<semaphore_mem>> -> memref<1x!tpu.dma_semaphore, #tpu.memory_space<semaphore_mem>>
    %9 = tpu.memref_squeeze %8 : memref<1x!tpu.dma_semaphore, #tpu.memory_space<semaphore_mem>> -> memref<!tpu.dma_semaphore, #tpu.memory_space<semaphore_mem>>
    tpu.wait_dma2 semaphore(%9 : memref<!tpu.dma_semaphore, #tpu.memory_space<semaphore_mem>>) src(%7 : memref<12x24x128xf32, #tpu.memory_space<any>>) dst(%arg8 : memref<12x24x128xf32, #tpu.memory_space<vmem>>)
    %c0 = arith.constant 0 : index
    %c0_5 = arith.constant 0 : index
    %c0_6 = arith.constant 0 : index
    %10 = vector.load %arg8[%c0, %c0_5, %c0_6] : memref<12x24x128xf32, #tpu.memory_space<vmem>>, vector<12x24x128xf32>
    %cst = arith.constant 0.000000e+00 : f32
    %11 = vector.broadcast %cst : f32 to vector<12x1x128xf32>
    %12 = vector.extract_strided_slice %10 {offsets = [0, 1, 0], sizes = [12, 23, 128], strides = [1, 1, 1]} : vector<12x24x128xf32> to vector<12x23x128xf32>
    %13 = tpu.concatenate %12, %11 in 1 : vector<12x23x128xf32>, vector<12x1x128xf32> -> vector<12x24x128xf32>
    %cst_7 = arith.constant 0.000000e+00 : f32
    %14 = vector.broadcast %cst_7 : f32 to vector<12x2x128xf32>
    %15 = vector.extract_strided_slice %10 {offsets = [0, 2, 0], sizes = [12, 22, 128], strides = [1, 1, 1]} : vector<12x24x128xf32> to vector<12x22x128xf32>
    %16 = tpu.concatenate %15, %14 in 1 : vector<12x22x128xf32>, vector<12x2x128xf32> -> vector<12x24x128xf32>
    %17 = tpu.concatenate %10, %13, %16 in 2 : vector<12x24x128xf32>, vector<12x24x128xf32>, vector<12x24x128xf32> -> vector<12x24x384xf32>
    %18 = vector.shape_cast %17 : vector<12x24x384xf32> to vector<288x384xf32>
    %cst_8 = arith.constant 0.000000e+00 : f32
    %19 = vector.broadcast %cst_8 : f32 to vector<240x128xf32>
    %20 = vector.extract_strided_slice %18 {offsets = [0, 0], sizes = [240, 384], strides = [1, 1]} : vector<288x384xf32> to vector<240x384xf32>
    %c0_9 = arith.constant 0 : index
    %c0_10 = arith.constant 0 : index
    %c0_11 = arith.constant 0 : index
    %21 = vector.load %arg3[%c0_9, %c0_10, %c0_11] : memref<3x384x128xf32, #tpu.memory_space<vmem>>, vector<1x384x128xf32>
    %22 = vector.shape_cast %21 : vector<1x384x128xf32> to vector<384x128xf32>
    %cst_12 = arith.constant dense<0.000000e+00> : vector<240x128xf32>
    %23 = tpu.matmul %20, %22, %cst_12 {dimension_numbers = #tpu.dot_dimension_numbers<[1], [0], [0], [1], [0, 0, 1, 1], [], []>} : vector<240x384xf32>, vector<384x128xf32>, vector<240x128xf32> -> vector<240x128xf32>
    %24 = arith.addf %19, %23 : vector<240x128xf32>
    %25 = vector.extract_strided_slice %18 {offsets = [24, 0], sizes = [240, 384], strides = [1, 1]} : vector<288x384xf32> to vector<240x384xf32>
    %c1 = arith.constant 1 : index
    %c0_13 = arith.constant 0 : index
    %c0_14 = arith.constant 0 : index
    %26 = vector.load %arg3[%c1, %c0_13, %c0_14] : memref<3x384x128xf32, #tpu.memory_space<vmem>>, vector<1x384x128xf32>
    %27 = vector.shape_cast %26 : vector<1x384x128xf32> to vector<384x128xf32>
    %cst_15 = arith.constant dense<0.000000e+00> : vector<240x128xf32>
    %28 = tpu.matmul %25, %27, %cst_15 {dimension_numbers = #tpu.dot_dimension_numbers<[1], [0], [0], [1], [0, 0, 1, 1], [], []>} : vector<240x384xf32>, vector<384x128xf32>, vector<240x128xf32> -> vector<240x128xf32>
    %29 = arith.addf %24, %28 : vector<240x128xf32>
    %30 = vector.extract_strided_slice %18 {offsets = [48, 0], sizes = [240, 384], strides = [1, 1]} : vector<288x384xf32> to vector<240x384xf32>
    %c2 = arith.constant 2 : index
    %c0_16 = arith.constant 0 : index
    %c0_17 = arith.constant 0 : index
    %31 = vector.load %arg3[%c2, %c0_16, %c0_17] : memref<3x384x128xf32, #tpu.memory_space<vmem>>, vector<1x384x128xf32>
    %32 = vector.shape_cast %31 : vector<1x384x128xf32> to vector<384x128xf32>
    %cst_18 = arith.constant dense<0.000000e+00> : vector<240x128xf32>
    %33 = tpu.matmul %30, %32, %cst_18 {dimension_numbers = #tpu.dot_dimension_numbers<[1], [0], [0], [1], [0, 0, 1, 1], [], []>} : vector<240x384xf32>, vector<384x128xf32>, vector<240x128xf32> -> vector<240x128xf32>
    %34 = arith.addf %29, %33 : vector<240x128xf32>
    %c0_19 = arith.constant 0 : index
    %c0_20 = arith.constant 0 : index
    %35 = vector.load %arg4[%c0_19, %c0_20] : memref<1x128xf32, #tpu.memory_space<vmem>>, vector<1x128xf32>
    %36 = vector.broadcast %35 : vector<1x128xf32> to vector<240x128xf32>
    %37 = arith.addf %34, %36 : vector<240x128xf32>
    %cst_21 = arith.constant 0.000000e+00 : f32
    %38 = vector.broadcast %cst_21 : f32 to vector<240x128xf32>
    %39 = arith.maximumf %37, %38 : vector<240x128xf32>
    %40 = vector.shape_cast %39 : vector<240x128xf32> to vector<10x24x128xf32>
    %41 = tpu.iota {dimensions = array<i32: 0>} : vector<10x24x128xi32>
    %42 = tpu.iota {dimensions = array<i32: 1>} : vector<10x24x128xi32>
    %c1_i32 = arith.constant 1 : i32
    %43 = arith.subi %1, %c1_i32 : i32
    %44 = vector.broadcast %43 : i32 to vector<10x24x128xi32>
    %45 = arith.addi %41, %44 : vector<10x24x128xi32>
    %c0_i32_22 = arith.constant 0 : i32
    %46 = vector.broadcast %c0_i32_22 : i32 to vector<10x24x128xi32>
    %47 = arith.cmpi sge, %45, %46 : vector<10x24x128xi32>
    %c16_i32 = arith.constant 16 : i32
    %48 = vector.broadcast %c16_i32 : i32 to vector<10x24x128xi32>
    %49 = arith.cmpi slt, %45, %48 : vector<10x24x128xi32>
    %50 = arith.andi %47, %49 : vector<10x24x128xi1>
    %c1_i32_23 = arith.constant 1 : i32
    %51 = vector.broadcast %c1_i32_23 : i32 to vector<10x24x128xi32>
    %52 = arith.cmpi sge, %42, %51 : vector<10x24x128xi32>
    %53 = arith.andi %50, %52 : vector<10x24x128xi1>
    %c16_i32_24 = arith.constant 16 : i32
    %54 = vector.broadcast %c16_i32_24 : i32 to vector<10x24x128xi32>
    %55 = arith.cmpi sle, %42, %54 : vector<10x24x128xi32>
    %56 = arith.andi %53, %55 : vector<10x24x128xi1>
    %cst_25 = arith.constant 0.000000e+00 : f32
    %57 = vector.broadcast %cst_25 : f32 to vector<10x24x128xf32>
    %58 = arith.select %56, %40, %57 : vector<10x24x128xi1>, vector<10x24x128xf32>
    %cst_26 = arith.constant 0.000000e+00 : f32
    %59 = vector.broadcast %cst_26 : f32 to vector<10x1x128xf32>
    %60 = vector.extract_strided_slice %58 {offsets = [0, 1, 0], sizes = [10, 23, 128], strides = [1, 1, 1]} : vector<10x24x128xf32> to vector<10x23x128xf32>
    %61 = tpu.concatenate %60, %59 in 1 : vector<10x23x128xf32>, vector<10x1x128xf32> -> vector<10x24x128xf32>
    %cst_27 = arith.constant 0.000000e+00 : f32
    %62 = vector.broadcast %cst_27 : f32 to vector<10x2x128xf32>
    %63 = vector.extract_strided_slice %58 {offsets = [0, 2, 0], sizes = [10, 22, 128], strides = [1, 1, 1]} : vector<10x24x128xf32> to vector<10x22x128xf32>
    %64 = tpu.concatenate %63, %62 in 1 : vector<10x22x128xf32>, vector<10x2x128xf32> -> vector<10x24x128xf32>
    %65 = tpu.concatenate %58, %61, %64 in 2 : vector<10x24x128xf32>, vector<10x24x128xf32>, vector<10x24x128xf32> -> vector<10x24x384xf32>
    %66 = vector.shape_cast %65 : vector<10x24x384xf32> to vector<240x384xf32>
    %cst_28 = arith.constant 0.000000e+00 : f32
    %67 = vector.broadcast %cst_28 : f32 to vector<192x128xf32>
    %68 = vector.extract_strided_slice %66 {offsets = [0, 0], sizes = [192, 384], strides = [1, 1]} : vector<240x384xf32> to vector<192x384xf32>
    %c0_29 = arith.constant 0 : index
    %c0_30 = arith.constant 0 : index
    %c0_31 = arith.constant 0 : index
    %69 = vector.load %arg5[%c0_29, %c0_30, %c0_31] : memref<3x384x128xf32, #tpu.memory_space<vmem>>, vector<1x384x128xf32>
    %70 = vector.shape_cast %69 : vector<1x384x128xf32> to vector<384x128xf32>
    %cst_32 = arith.constant dense<0.000000e+00> : vector<192x128xf32>
    %71 = tpu.matmul %68, %70, %cst_32 {dimension_numbers = #tpu.dot_dimension_numbers<[1], [0], [0], [1], [0, 0, 1, 1], [], []>} : vector<192x384xf32>, vector<384x128xf32>, vector<192x128xf32> -> vector<192x128xf32>
    %72 = arith.addf %67, %71 : vector<192x128xf32>
    %73 = vector.extract_strided_slice %66 {offsets = [24, 0], sizes = [192, 384], strides = [1, 1]} : vector<240x384xf32> to vector<192x384xf32>
    %c1_33 = arith.constant 1 : index
    %c0_34 = arith.constant 0 : index
    %c0_35 = arith.constant 0 : index
    %74 = vector.load %arg5[%c1_33, %c0_34, %c0_35] : memref<3x384x128xf32, #tpu.memory_space<vmem>>, vector<1x384x128xf32>
    %75 = vector.shape_cast %74 : vector<1x384x128xf32> to vector<384x128xf32>
    %cst_36 = arith.constant dense<0.000000e+00> : vector<192x128xf32>
    %76 = tpu.matmul %73, %75, %cst_36 {dimension_numbers = #tpu.dot_dimension_numbers<[1], [0], [0], [1], [0, 0, 1, 1], [], []>} : vector<192x384xf32>, vector<384x128xf32>, vector<192x128xf32> -> vector<192x128xf32>
    %77 = arith.addf %72, %76 : vector<192x128xf32>
    %78 = vector.extract_strided_slice %66 {offsets = [48, 0], sizes = [192, 384], strides = [1, 1]} : vector<240x384xf32> to vector<192x384xf32>
    %c2_37 = arith.constant 2 : index
    %c0_38 = arith.constant 0 : index
    %c0_39 = arith.constant 0 : index
    %79 = vector.load %arg5[%c2_37, %c0_38, %c0_39] : memref<3x384x128xf32, #tpu.memory_space<vmem>>, vector<1x384x128xf32>
    %80 = vector.shape_cast %79 : vector<1x384x128xf32> to vector<384x128xf32>
    %cst_40 = arith.constant dense<0.000000e+00> : vector<192x128xf32>
    %81 = tpu.matmul %78, %80, %cst_40 {dimension_numbers = #tpu.dot_dimension_numbers<[1], [0], [0], [1], [0, 0, 1, 1], [], []>} : vector<192x384xf32>, vector<384x128xf32>, vector<192x128xf32> -> vector<192x128xf32>
    %82 = arith.addf %77, %81 : vector<192x128xf32>
    %c0_41 = arith.constant 0 : index
    %c0_42 = arith.constant 0 : index
    %83 = vector.load %arg6[%c0_41, %c0_42] : memref<1x128xf32, #tpu.memory_space<vmem>>, vector<1x128xf32>
    %84 = vector.broadcast %83 : vector<1x128xf32> to vector<192x128xf32>
    %85 = arith.addf %82, %84 : vector<192x128xf32>
    %cst_43 = arith.constant 0.000000e+00 : f32
    %86 = vector.broadcast %cst_43 : f32 to vector<192x128xf32>
    %87 = arith.maximumf %85, %86 : vector<192x128xf32>
    %88 = vector.shape_cast %87 : vector<192x128xf32> to vector<8x24x128xf32>
    %c0_44 = arith.constant 0 : index
    %c0_45 = arith.constant 0 : index
    %c0_46 = arith.constant 0 : index
    %c0_47 = arith.constant 0 : index
    %89 = vector.load %arg7[%c0_44, %c0_45, %c0_46, %c0_47] : memref<1x8x24x128xf32, #tpu.memory_space<vmem>>, vector<1x8x24x128xf32>
    %90 = vector.shape_cast %89 : vector<1x8x24x128xf32> to vector<8x24x128xf32>
    %91 = vector.shape_cast %88 : vector<8x24x128xf32> to vector<1x8x24x128xf32>
    tpu.vector_store %arg7[%c0_44, %c0_45, %c0_46, %c0_47], %91 {strides = array<i32>} : memref<1x8x24x128xf32, #tpu.memory_space<vmem>>, vector<1x8x24x128xf32>,
    return
  }
  func.func @transform_1(%arg0: i32, %arg1: i32) -> (i32, i32, i32) {
    %c0_i32 = arith.constant 0 : i32
    %c0_i32_0 = arith.constant 0 : i32
    %c0_i32_1 = arith.constant 0 : i32
    %c0_i32_2 = arith.constant 0 : i32
    return %c0_i32, %c0_i32_0, %c0_i32_1 : i32, i32, i32
  }
  func.func @transform_2(%arg0: i32, %arg1: i32) -> (i32, i32) {
    %c0_i32 = arith.constant 0 : i32
    %c0_i32_0 = arith.constant 0 : i32
    %c0_i32_1 = arith.constant 0 : i32
    return %c0_i32, %c0_i32_0 : i32, i32
  }
  func.func @transform_3(%arg0: i32, %arg1: i32) -> (i32, i32, i32) {
    %c0_i32 = arith.constant 0 : i32
    %c0_i32_0 = arith.constant 0 : i32
    %c0_i32_1 = arith.constant 0 : i32
    %c0_i32_2 = arith.constant 0 : i32
    return %c0_i32, %c0_i32_0, %c0_i32_1 : i32, i32, i32
  }
  func.func @transform_4(%arg0: i32, %arg1: i32) -> (i32, i32) {
    %c0_i32 = arith.constant 0 : i32
    %c0_i32_0 = arith.constant 0 : i32
    %c0_i32_1 = arith.constant 0 : i32
    return %c0_i32, %c0_i32_0 : i32, i32
  }
  func.func @transform_5(%arg0: i32, %arg1: i32) -> (i32, i32, i32, i32) {
    %c0_i32 = arith.constant 0 : i32
    %c0_i32_0 = arith.constant 0 : i32
    %c0_i32_1 = arith.constant 0 : i32
    return %arg0, %arg1, %c0_i32, %c0_i32_0 : i32, i32, i32, i32
  }
}

</mosaic_0001>

<llo_original>
// kernel: double_convolution.1
$region0: #{double_convolution.1}
  #allocation0 [shape = 'u32[]', space=smem, size = 0x4, offset = 0x4, fixed_abs, tag = 'smem constant byte address 0x4 - core index']
  #allocation1 [shape = 'u32[72,128]{1,0:T(1,128)}', space=vmem, size = 0x9000, scoped, tag = 'internal scratch']
  #allocation2 [shape = 'f32[12,24,128]{2,1,0:T(8,128)}', space=vmem, size = 0x24000, scoped, tag = 'scratch operand']
  #allocation3 [shape = 's32[1]{0}', space=sflag, size = 0x4, scoped, tag = 'scratch operand']
  #allocation6 [shape = 's32[]', space=sflag, size = 0x4, offset = 0, fixed_abs, tag = 'sflag constant byte address 0x0 - dummy sync flag']
  %s0 = inlined_call_operand.vmem [shape: f32[2,20,24,128], index: 0, kind: input, shape index: {}]
  %s1 = inlined_call_operand.hbm [shape: f32[3,384,128], index: 1, kind: input, shape index: {}]
  %s2 = inlined_call_operand.vmem [shape: f32[1,128], index: 2, kind: input, shape index: {}]
  %s3 = inlined_call_operand.vmem [shape: f32[3,384,128], index: 3, kind: input, shape index: {}]
  %s4 = inlined_call_operand.vmem [shape: f32[1,128], index: 4, kind: input, shape index: {}]
  %s5 = inlined_call_operand.vmem [shape: f32[2,16,24,128], index: 5, kind: output, shape index: {}]
  %s6 = sld [smem:[#allocation0]]
  $region72: #{double_convolution.1} parent=0
    _
  %s8 = ssub.s32 1, %s6
  %s9 = scalar_select 0, %s8, %s6
  $region1: #{double_convolution.1} parent=0
    #allocation4 [shape = 'u8[589824]{0}', space=vmem, size = 0x90000, scoped, tag = 'input window, operand 1, single buffered']
    #allocation5 [shape = 's32[2]{0}', space=sflag, size = 0x8, scoped, tag = 'scoped memory for double_convolution.1']
    %10 = vsyncpa [#allocation5], 0
    loop: start=0, step=1, limit=6
    $region2: #{double_convolution.1} parent=1 // loop_pre_header
      _
    $region3: #{double_convolution.1} parent=1 // loop_header
      %s12 = sphi 0, %s16
      %p13 = scmp.ge.s32.totalorder %s12, 6
      %s19 = sphi 0, %s31
      %s20 = sphi 0, %s27
      %s21 = sphi 0, %s19
      %s22 = sphi 0, %s20
      %s23 = sphi 0, %s21
      %s24 = sphi 0, %s22
      %s32 = sphi 0, %s32
      %s34 = sphi 0, %s32
      %s35 = sphi 0, %s34
      %s49 = sphi 0, %s35
      %s53 = sphi 0, %s53
      %s55 = sphi 0, %s53
      %s56 = sphi 0, %s55
      %s70 = sphi 0, %s56
      %s74 = sphi 0, %s74
      %s76 = sphi 0, %s74
      %s77 = sphi 0, %s76
      %s91 = sphi 0, %s77
      %s95 = sphi 0, %s95
      %s97 = sphi 0, %s95
      %s98 = sphi 0, %s97
      %s112 = sphi 0, %s98
      %s120 = sphi 0, %s122
      %s123 = sphi 0, %s120
      %s124 = sphi 0, %s123
      %s140 = sphi 0, %s124
    $region4: #{double_convolution.1} parent=1 // loop_header_branch
      %15 = sbr.rel (%p13) target = $region8
    $region5: #{double_convolution.1} parent=1 // loop_body
      %s17 = ssub.s32 %s12, 1
      %s18 = ssub.s32 %s12, 2
      %s25 = sadd.s32 1, %s20
      %p26 = scmp.ge.s32.totalorder %s25, 2
      %s27 = scalar_select %p26, 0, %s25
      %s28 = sadd.s32 1, %s19
      %s29 = scalar_select %p26, %s28, %s19
      %p30 = scmp.ge.s32.totalorder %s29, 2
      %s31 = scalar_select %p30, 0, %s29
      %s33 = sadd.s32 %s32, 1
      %p36 = scmp.eq.s32.totalorder %s12, 3
      %p37 = scmp.ne.s32.totalorder %s32, %s34
      %p38 = scmp.eq.s32.totalorder %s12, 0
      %p39 = por %p37, %p38
      %p40 = scmp.ne.s32.totalorder %s32, %s34
      %p41 = scmp.eq.s32.totalorder %s17, 3
      %p42 = por %p40, %p41
      %p43 = scmp.ne.s32.totalorder %s34, %s35
      %p44 = scmp.eq.s32.totalorder %s17, 0
      %p45 = por %p43, %p44
      %p46 = scmp.ne.s32.totalorder %s34, %s35
      %p47 = scmp.eq.s32.totalorder %s18, 3
      %p48 = por %p46, %p47
      %p50 = scmp.ne.s32.totalorder %s35, %s49
      %p51 = scmp.eq.s32.totalorder %s18, 0
      %p52 = por %p50, %p51
      %s54 = sadd.s32 %s53, 1
      %p57 = scmp.eq.s32.totalorder %s12, 3
      %p58 = scmp.ne.s32.totalorder %s53, %s55
      %p59 = scmp.eq.s32.totalorder %s12, 0
      %p60 = por %p58, %p59
      %p61 = scmp.ne.s32.totalorder %s53, %s55
      %p62 = scmp.eq.s32.totalorder %s17, 3
      %p63 = por %p61, %p62
      %p64 = scmp.ne.s32.totalorder %s55, %s56
      %p65 = scmp.eq.s32.totalorder %s17, 0
      %p66 = por %p64, %p65
      %p67 = scmp.ne.s32.totalorder %s55, %s56
      %p68 = scmp.eq.s32.totalorder %s18, 3
      %p69 = por %p67, %p68
      %p71 = scmp.ne.s32.totalorder %s56, %s70
      %p72 = scmp.eq.s32.totalorder %s18, 0
      %p73 = por %p71, %p72
      %s75 = sadd.s32 %s74, 1
      %p78 = scmp.eq.s32.totalorder %s12, 3
      %p79 = scmp.ne.s32.totalorder %s74, %s76
      %p80 = scmp.eq.s32.totalorder %s12, 0
      %p81 = por %p79, %p80
      %p82 = scmp.ne.s32.totalorder %s74, %s76
      %p83 = scmp.eq.s32.totalorder %s17, 3
      %p84 = por %p82, %p83
      %p85 = scmp.ne.s32.totalorder %s76, %s77
      %p86 = scmp.eq.s32.totalorder %s17, 0
      %p87 = por %p85, %p86
      %p88 = scmp.ne.s32.totalorder %s76, %s77
      %p89 = scmp.eq.s32.totalorder %s18, 3
      %p90 = por %p88, %p89
      %p92 = scmp.ne.s32.totalorder %s77, %s91
      %p93 = scmp.eq.s32.totalorder %s18, 0
      %p94 = por %p92, %p93
      %s96 = sadd.s32 %s95, 1
      %p99 = scmp.eq.s32.totalorder %s12, 3
      %p100 = scmp.ne.s32.totalorder %s95, %s97
      %p101 = scmp.eq.s32.totalorder %s12, 0
      %p102 = por %p100, %p101
      %p103 = scmp.ne.s32.totalorder %s95, %s97
      %p104 = scmp.eq.s32.totalorder %s17, 3
      %p105 = por %p103, %p104
      %p106 = scmp.ne.s32.totalorder %s97, %s98
      %p107 = scmp.eq.s32.totalorder %s17, 0
      %p108 = por %p106, %p107
      %p109 = scmp.ne.s32.totalorder %s97, %s98
      %p110 = scmp.eq.s32.totalorder %s18, 3
      %p111 = por %p109, %p110
      %p113 = scmp.ne.s32.totalorder %s98, %s112
      %p114 = scmp.eq.s32.totalorder %s18, 0
      %p115 = por %p113, %p114
      %s116 = ssub.s32 %s19, %s31
      %s117 = ssub.s32 %s20, %s27
      %s118 = sor.u32 %s116, %s117
      %p119 = scmp.eq.s32.totalorder %s118, 0
      %s121 = sadd.s32 %s120, 1
      %s122 = scalar_select %p119, %s120, %s121
      %p125 = pneg %p119
      %p126 = scmp.eq.s32.totalorder %s12, 3
      %p127 = por %p125, %p126
      %p128 = scmp.ne.s32.totalorder %s120, %s123
      %p129 = scmp.eq.s32.totalorder %s12, 0
      %p130 = por %p128, %p129
      %p131 = scmp.ne.s32.totalorder %s120, %s123
      %p132 = scmp.eq.s32.totalorder %s17, 3
      %p133 = por %p131, %p132
      %p134 = scmp.ne.s32.totalorder %s123, %s124
      %p135 = scmp.eq.s32.totalorder %s17, 0
      %p136 = por %p134, %p135
      %p137 = scmp.ne.s32.totalorder %s123, %s124
      %p138 = scmp.eq.s32.totalorder %s18, 3
      %p139 = por %p137, %p138
      %p141 = scmp.ne.s32.totalorder %s124, %s140
      %p142 = scmp.eq.s32.totalorder %s18, 0
      %p143 = por %p141, %p142
      %p144 = scmp.le.s32.totalorder 1, %s12
      %p145 = scmp.lt.s32.totalorder %s12, 5
      %p146 = pnand %p144, %p145
      %p147 = pneg %p146
      // Predicated region
      $region9: #{double_convolution.1} parent=5 // pred_check
        _
      $region10: #{double_convolution.1} parent=5 // pred_check_branch
        %149 = sbr.rel (%p146) target = $region12
      $region11: #{double_convolution.1} parent=5 // pred_region
        %s150 = ssub.s32 %s12, 1
        // Predicated region
        $region13: #{double_convolution.1} parent=11 // pred_check
          %p151 = pneg %p45
        $region14: #{double_convolution.1} parent=11 // pred_check_branch
          %153 = sbr.rel (%p151) target = $region16
        $region15: #{double_convolution.1} parent=11 // pred_region
          %155 = vsyncadd [#allocation5], 0
          %s156 = sshll.u32 %s1, 4
          %s157 = int_to_ptr.hbm [resolvable:$true] %s156
          %s158 = sshll.u32 [#allocation4], 4
          %s159 = int_to_ptr.vmem [resolvable:$true] %s158
          %164 = dma.hbm_to_vmem [thread:$0]  %s157, 18432, %s159, [#allocation5], 128, 128, 8
        $region16: #{double_convolution.1} parent=11 // pred_fallthru
          _
        // Predicated region
        $region17: #{double_convolution.1} parent=11 // pred_check
          %p165 = pneg %p66
        $region18: #{double_convolution.1} parent=11 // pred_check_branch
          %167 = sbr.rel (%p165) target = $region20
        $region19: #{double_convolution.1} parent=11 // pred_region
          _
        $region20: #{double_convolution.1} parent=11 // pred_fallthru
          _
        // Predicated region
        $region21: #{double_convolution.1} parent=11 // pred_check
          %p168 = pneg %p87
        $region22: #{double_convolution.1} parent=11 // pred_check_branch
          %170 = sbr.rel (%p168) target = $region24
        $region23: #{double_convolution.1} parent=11 // pred_region
          _
        $region24: #{double_convolution.1} parent=11 // pred_fallthru
          _
        // Predicated region
        $region25: #{double_convolution.1} parent=11 // pred_check
          %p171 = pneg %p108
        $region26: #{double_convolution.1} parent=11 // pred_check_branch
          %173 = sbr.rel (%p171) target = $region28
        $region27: #{double_convolution.1} parent=11 // pred_region
          _
        $region28: #{double_convolution.1} parent=11 // pred_fallthru
          _
      $region12: #{double_convolution.1} parent=5 // pred_fallthru
        _
      %p174 = scmp.lt.s32.totalorder %s12, 4
      // Predicated region
      $region29: #{double_convolution.1} parent=5 // pred_check
        %p175 = pneg %p174
      $region30: #{double_convolution.1} parent=5 // pred_check_branch
        %177 = sbr.rel (%p175) target = $region32
      $region31: #{double_convolution.1} parent=5 // pred_region
        _
      $region32: #{double_convolution.1} parent=5 // pred_fallthru
        _
      %p178 = scmp.le.s32.totalorder 1, %s12
      %p179 = scmp.lt.s32.totalorder %s12, 5
      %p180 = pnand %p178, %p179
      %p181 = pneg %p180
      // Predicated region
      $region33: #{double_convolution.1} parent=5 // pred_check
        _
      $region34: #{double_convolution.1} parent=5 // pred_check_branch
        %183 = sbr.rel (%p180) target = $region36
      $region35: #{double_convolution.1} parent=5 // pred_region
        %s184 = ssub.s32 %s12, 1
        // Predicated region
        $region37: #{double_convolution.1} parent=35 // pred_check
          %p185 = pneg %p45
        $region38: #{double_convolution.1} parent=35 // pred_check_branch
          %187 = sbr.rel (%p185) target = $region40
        $region39: #{double_convolution.1} parent=35 // pred_region
          %189 = dma.done [#allocation5], 18432
        $region40: #{double_convolution.1} parent=35 // pred_fallthru
          _
        %p190 = pneg %p45
        %p191 = pneg %p42
        %p192 = pneg %p66
        %p193 = pneg %p63
        %p194 = pneg %p87
        %p195 = pneg %p84
        %p196 = pneg %p108
        %p197 = pneg %p105
        %p198 = pneg %p136
        %p199 = pneg %p133
        %s200 = smul.u32 8, %s22
        %p201 = scmp.lt.s32.totalorder %s21, 1
        %s202 = scalar_select %p201, %s21, 1
        %p203 = scmp.lt.s32.totalorder %s200, 15
        %s204 = scalar_select %p203, %s200, 15
        %s205 = smul.addr %s204, 3
        %s206 = smul.addr %s202, 48
        %s207 = sadd.s32 %s205, %s206
        %s208 = smul.addr %s207, 8
        %s209 = scalar_lea.vmem %s5, %s208
        %s210 = smul.u32 8, %s22
        %p211 = scmp.lt.s32.totalorder %s21, 1
        %s212 = scalar_select %p211, %s21, 1
        %p213 = scmp.lt.s32.totalorder %s210, 15
        %s214 = scalar_select %p213, %s210, 15
        %s215 = smul.addr %s214, 3
        %s216 = smul.addr %s212, 48
        %s217 = sadd.s32 %s215, %s216
        %s218 = smul.addr %s217, 8
        %s219 = scalar_lea.vmem %s5, %s218
        %s220 = smul.u32 8, %s22
        %s221 = smul.u32 %s22, 8
        %s222 = smul.u32 %s221, 24
        %s223 = smul.u32 %s21, 480
        %s224 = sadd.s32 %s222, %s223
        %s225 = scalar_lea.vmem %s0, %s224
        // Predicated region
        $region41: #{double_convolution.1} parent=35 // pred_check
          _
        $region42: #{double_convolution.1} parent=35 // pred_check_branch
          %227 = sbr.rel (0) target = $region44
        $region43: #{double_convolution.1} parent=35 // pred_region
          loop: start=0, step=1, limit=1
          $region45: #{double_convolution.1} parent=43 // loop_pre_header
            _
          $region46: #{double_convolution.1} parent=43 // loop_header
            %s229 = sphi 0, %s233
            %p230 = scmp.ge.s32.totalorder %s229, 1
            %s234 = sphi %s225, %s225
            %s235 = sphi [#allocation2], [#allocation2]
          $region47: #{double_convolution.1} parent=43 // loop_header_branch
            %232 = sbr.rel (%p230) target = $region51
          $region48: #{double_convolution.1} parent=43 // loop_body
            %v236 = vld [vmem:[%s234] sm:$0xff]
            %237 = vst [vmem:[%s235] sm:$0xff] %v236
            %v238 = vld [vmem:[%s234 + $0x8] sm:$0xff]
            %239 = vst [vmem:[%s235 + $0x8] sm:$0xff] %v238
            %v240 = vld [vmem:[%s234 + $0x10] sm:$0xff]
            %241 = vst [vmem:[%s235 + $0x10] sm:$0xff] %v240
            %v242 = vld [vmem:[%s234 + $0x18] sm:$0xff]
            %243 = vst [vmem:[%s235 + $0x18] sm:$0xff] %v242
            %v244 = vld [vmem:[%s234 + $0x20] sm:$0xff]
            %245 = vst [vmem:[%s235 + $0x20] sm:$0xff] %v244
            %v246 = vld [vmem:[%s234 + $0x28] sm:$0xff]
            %247 = vst [vmem:[%s235 + $0x28] sm:$0xff] %v246
            %v248 = vld [vmem:[%s234 + $0x30] sm:$0xff]
            %249 = vst [vmem:[%s235 + $0x30] sm:$0xff] %v248
            %v250 = vld [vmem:[%s234 + $0x38] sm:$0xff]
            %251 = vst [vmem:[%s235 + $0x38] sm:$0xff] %v250
            %v252 = vld [vmem:[%s234 + $0x40] sm:$0xff]
            %253 = vst [vmem:[%s235 + $0x40] sm:$0xff] %v252
            %v254 = vld [vmem:[%s234 + $0x48] sm:$0xff]
            %255 = vst [vmem:[%s235 + $0x48] sm:$0xff] %v254
            %v256 = vld [vmem:[%s234 + $0x50] sm:$0xff]
            %257 = vst [vmem:[%s235 + $0x50] sm:$0xff] %v256
            %v258 = vld [vmem:[%s234 + $0x58] sm:$0xff]
            %259 = vst [vmem:[%s235 + $0x58] sm:$0xff] %v258
            %v260 = vld [vmem:[%s234 + $0x60] sm:$0xff]
            %261 = vst [vmem:[%s235 + $0x60] sm:$0xff] %v260
            %v262 = vld [vmem:[%s234 + $0x68] sm:$0xff]
            %263 = vst [vmem:[%s235 + $0x68] sm:$0xff] %v262
            %v264 = vld [vmem:[%s234 + $0x70] sm:$0xff]
            %265 = vst [vmem:[%s235 + $0x70] sm:$0xff] %v264
            %v266 = vld [vmem:[%s234 + $0x78] sm:$0xff]
            %267 = vst [vmem:[%s235 + $0x78] sm:$0xff] %v266
            %v268 = vld [vmem:[%s234 + $0x80] sm:$0xff]
            %269 = vst [vmem:[%s235 + $0x80] sm:$0xff] %v268
            %v270 = vld [vmem:[%s234 + $0x88] sm:$0xff]
            %271 = vst [vmem:[%s235 + $0x88] sm:$0xff] %v270
            %v272 = vld [vmem:[%s234 + $0x90] sm:$0xff]
            %273 = vst [vmem:[%s235 + $0x90] sm:$0xff] %v272
            %v274 = vld [vmem:[%s234 + $0x98] sm:$0xff]
            %275 = vst [vmem:[%s235 + $0x98] sm:$0xff] %v274
            %v276 = vld [vmem:[%s234 + $0xa0] sm:$0xff]
            %277 = vst [vmem:[%s235 + $0xa0] sm:$0xff] %v276
            %v278 = vld [vmem:[%s234 + $0xa8] sm:$0xff]
            %279 = vst [vmem:[%s235 + $0xa8] sm:$0xff] %v278
            %v280 = vld [vmem:[%s234 + $0xb0] sm:$0xff]
            %281 = vst [vmem:[%s235 + $0xb0] sm:$0xff] %v280
            %v282 = vld [vmem:[%s234 + $0xb8] sm:$0xff]
            %283 = vst [vmem:[%s235 + $0xb8] sm:$0xff] %v282
            %v284 = vld [vmem:[%s234 + $0xc0] sm:$0xff]
            %285 = vst [vmem:[%s235 + $0xc0] sm:$0xff] %v284
            %v286 = vld [vmem:[%s234 + $0xc8] sm:$0xff]
            %287 = vst [vmem:[%s235 + $0xc8] sm:$0xff] %v286
            %v288 = vld [vmem:[%s234 + $0xd0] sm:$0xff]
            %289 = vst [vmem:[%s235 + $0xd0] sm:$0xff] %v288
            %v290 = vld [vmem:[%s234 + $0xd8] sm:$0xff]
            %291 = vst [vmem:[%s235 + $0xd8] sm:$0xff] %v290
            %v292 = vld [vmem:[%s234 + $0xe0] sm:$0xff]
            %293 = vst [vmem:[%s235 + $0xe0] sm:$0xff] %v292
            %v294 = vld [vmem:[%s234 + $0xe8] sm:$0xff]
            %295 = vst [vmem:[%s235 + $0xe8] sm:$0xff] %v294
            %v296 = vld [vmem:[%s234 + $0xf0] sm:$0xff]
            %297 = vst [vmem:[%s235 + $0xf0] sm:$0xff] %v296
            %v298 = vld [vmem:[%s234 + $0xf8] sm:$0xff]
            %299 = vst [vmem:[%s235 + $0xf8] sm:$0xff] %v298
            %v300 = vld [vmem:[%s234 + $0x100] sm:$0xff]
            %301 = vst [vmem:[%s235 + $0x100] sm:$0xff] %v300
            %v302 = vld [vmem:[%s234 + $0x108] sm:$0xff]
            %303 = vst [vmem:[%s235 + $0x108] sm:$0xff] %v302
            %v304 = vld [vmem:[%s234 + $0x110] sm:$0xff]
            %305 = vst [vmem:[%s235 + $0x110] sm:$0xff] %v304
            %v306 = vld [vmem:[%s234 + $0x118] sm:$0xff]
            %307 = vst [vmem:[%s235 + $0x118] sm:$0xff] %v306
          $region49: #{double_convolution.1} parent=43 // loop_footer
            %s233 = sadd.s32 1, %s229
          $region50: #{double_convolution.1} parent=43 // loop_footer_branch
            %228 = sbr.rel target = $region46
          $region51: #{double_convolution.1} parent=43 // loop_exit
            _
        $region44: #{double_convolution.1} parent=35 // pred_fallthru
          _
        // Predicated region
        $region52: #{double_convolution.1} parent=35 // pred_check
          _
        $region53: #{double_convolution.1} parent=35 // pred_check_branch
          %309 = sbr.rel target = $region55
        $region54: #{double_convolution.1} parent=35 // pred_region
          _
        $region55: #{double_convolution.1} parent=35 // pred_fallthru
          _
        // Predicated region
        $region56: #{double_convolution.1} parent=35 // pred_check
          _
        $region57: #{double_convolution.1} parent=35 // pred_check_branch
          %312 = sbr.rel (0) target = $region59
        $region58: #{double_convolution.1} parent=35 // pred_region
          %313 = vsyncadd [#allocation3], 4608
        $region59: #{double_convolution.1} parent=35 // pred_fallthru
          _
        %s314 = smul.u32 12, 24
        %s315 = smul.u32 %s314, 1
        %s316 = sshll.u32 %s315, 4
        %317 = dma.done [#allocation3], %s316
        %v318 = vld [vmem:[#allocation2] sm:$0xff]
        %v319 = vld [vmem:[#allocation2 + $0x8] sm:$0xff]
        %v320 = vld [vmem:[#allocation2 + $0x10] sm:$0xff]
        %v321 = vld [vmem:[#allocation2 + $0x18] sm:$0xff]
        %v322 = vld [vmem:[#allocation2 + $0x20] sm:$0xff]
        %v323 = vld [vmem:[#allocation2 + $0x28] sm:$0xff]
        %v324 = vld [vmem:[#allocation2 + $0x30] sm:$0xff]
        %v325 = vld [vmem:[#allocation2 + $0x38] sm:$0xff]
        %v326 = vld [vmem:[#allocation2 + $0x40] sm:$0xff]
        %v327 = vld [vmem:[#allocation2 + $0x48] sm:$0xff]
        %v328 = vld [vmem:[#allocation2 + $0x50] sm:$0xff]
        %v329 = vld [vmem:[#allocation2 + $0x58] sm:$0xff]
        %v330 = vld [vmem:[#allocation2 + $0x60] sm:$0xff]
        %v331 = vld [vmem:[#allocation2 + $0x68] sm:$0xff]
        %v332 = vld [vmem:[#allocation2 + $0x70] sm:$0xff]
        %v333 = vld [vmem:[#allocation2 + $0x78] sm:$0xff]
        %v334 = vld [vmem:[#allocation2 + $0x80] sm:$0xff]
        %v335 = vld [vmem:[#allocation2 + $0x88] sm:$0xff]
        %v336 = vld [vmem:[#allocation2 + $0x90] sm:$0xff]
        %v337 = vld [vmem:[#allocation2 + $0x98] sm:$0xff]
        %v338 = vld [vmem:[#allocation2 + $0xa0] sm:$0xff]
        %v339 = vld [vmem:[#allocation2 + $0xa8] sm:$0xff]
        %v340 = vld [vmem:[#allocation2 + $0xb0] sm:$0xff]
        %v341 = vld [vmem:[#allocation2 + $0xb8] sm:$0xff]
        %v342 = vld [vmem:[#allocation2 + $0xc0] sm:$0xff]
        %v343 = vld [vmem:[#allocation2 + $0xc8] sm:$0xff]
        %v344 = vld [vmem:[#allocation2 + $0xd0] sm:$0xff]
        %v345 = vld [vmem:[#allocation2 + $0xd8] sm:$0xff]
        %v346 = vld [vmem:[#allocation2 + $0xe0] sm:$0xff]
        %v347 = vld [vmem:[#allocation2 + $0xe8] sm:$0xff]
        %v348 = vld [vmem:[#allocation2 + $0xf0] sm:$0xff]
        %v349 = vld [vmem:[#allocation2 + $0xf8] sm:$0xff]
        %v350 = vld [vmem:[#allocation2 + $0x100] sm:$0xff]
        %v351 = vld [vmem:[#allocation2 + $0x108] sm:$0xff]
        %v352 = vld [vmem:[#allocation2 + $0x110] sm:$0xff]
        %v353 = vld [vmem:[#allocation2 + $0x118] sm:$0xff]
        %vm390 = vcmask 1046528
        %v391 = vrot.slane %v318, 1
        %v392 = vrot.slane %v319, 1
        %v393 = vsel %vm390, %v391, %v392
        %v394 = vrot.slane %v320, 1
        %v395 = vsel %vm390, %v392, %v394
        %v396 = vrot.slane %v321, 1
        %v397 = vrot.slane %v322, 1
        %v398 = vsel %vm390, %v396, %v397
        %v399 = vrot.slane %v323, 1
        %v400 = vsel %vm390, %v397, %v399
        %v401 = vrot.slane %v324, 1
        %v402 = vrot.slane %v325, 1
        %v403 = vsel %vm390, %v401, %v402
        %v404 = vrot.slane %v326, 1
        %v405 = vsel %vm390, %v402, %v404
        %v406 = vrot.slane %v327, 1
        %v407 = vrot.slane %v328, 1
        %v408 = vsel %vm390, %v406, %v407
        %v409 = vrot.slane %v329, 1
        %v410 = vsel %vm390, %v407, %v409
        %v411 = vrot.slane %v330, 1
        %v412 = vrot.slane %v331, 1
        %v413 = vsel %vm390, %v411, %v412
        %v414 = vrot.slane %v332, 1
        %v415 = vsel %vm390, %v412, %v414
        %v416 = vrot.slane %v333, 1
        %v417 = vrot.slane %v334, 1
        %v418 = vsel %vm390, %v416, %v417
        %v419 = vrot.slane %v335, 1
        %v420 = vsel %vm390, %v417, %v419
        %v421 = vrot.slane %v336, 1
        %v422 = vrot.slane %v337, 1
        %v423 = vsel %vm390, %v421, %v422
        %v424 = vrot.slane %v338, 1
        %v425 = vsel %vm390, %v422, %v424
        %v426 = vrot.slane %v339, 1
        %v427 = vrot.slane %v340, 1
        %v428 = vsel %vm390, %v426, %v427
        %v429 = vrot.slane %v341, 1
        %v430 = vsel %vm390, %v427, %v429
        %v431 = vrot.slane %v342, 1
        %v432 = vrot.slane %v343, 1
        %v433 = vsel %vm390, %v431, %v432
        %v434 = vrot.slane %v344, 1
        %v435 = vsel %vm390, %v432, %v434
        %v436 = vrot.slane %v345, 1
        %v437 = vrot.slane %v346, 1
        %v438 = vsel %vm390, %v436, %v437
        %v439 = vrot.slane %v347, 1
        %v440 = vsel %vm390, %v437, %v439
        %v441 = vrot.slane %v348, 1
        %v442 = vrot.slane %v349, 1
        %v443 = vsel %vm390, %v441, %v442
        %v444 = vrot.slane %v350, 1
        %v445 = vsel %vm390, %v442, %v444
        %v446 = vrot.slane %v351, 1
        %v447 = vrot.slane %v352, 1
        %v448 = vsel %vm390, %v446, %v447
        %v449 = vrot.slane %v353, 1
        %v450 = vsel %vm390, %v447, %v449
        %v487 = vsel %vm390, %v394, 0.0
        %v488 = vsel %vm390, %v399, 0.0
        %v489 = vsel %vm390, %v404, 0.0
        %v490 = vsel %vm390, %v409, 0.0
        %v491 = vsel %vm390, %v414, 0.0
        %v492 = vsel %vm390, %v419, 0.0
        %v493 = vsel %vm390, %v424, 0.0
        %v494 = vsel %vm390, %v429, 0.0
        %v495 = vsel %vm390, %v434, 0.0
        %v496 = vsel %vm390, %v439, 0.0
        %v497 = vsel %vm390, %v444, 0.0
        %v498 = vsel %vm390, %v449, 0.0
        %vm499 = vcmask 1045504
        %v500 = vrot.slane %v318, 2
        %v501 = vrot.slane %v319, 2
        %v502 = vsel %vm499, %v500, %v501
        %v503 = vrot.slane %v320, 2
        %v504 = vsel %vm499, %v501, %v503
        %v505 = vrot.slane %v321, 2
        %v506 = vrot.slane %v322, 2
        %v507 = vsel %vm499, %v505, %v506
        %v508 = vrot.slane %v323, 2
        %v509 = vsel %vm499, %v506, %v508
        %v510 = vrot.slane %v324, 2
        %v511 = vrot.slane %v325, 2
        %v512 = vsel %vm499, %v510, %v511
        %v513 = vrot.slane %v326, 2
        %v514 = vsel %vm499, %v511, %v513
        %v515 = vrot.slane %v327, 2
        %v516 = vrot.slane %v328, 2
        %v517 = vsel %vm499, %v515, %v516
        %v518 = vrot.slane %v329, 2
        %v519 = vsel %vm499, %v516, %v518
        %v520 = vrot.slane %v330, 2
        %v521 = vrot.slane %v331, 2
        %v522 = vsel %vm499, %v520, %v521
        %v523 = vrot.slane %v332, 2
        %v524 = vsel %vm499, %v521, %v523
        %v525 = vrot.slane %v333, 2
        %v526 = vrot.slane %v334, 2
        %v527 = vsel %vm499, %v525, %v526
        %v528 = vrot.slane %v335, 2
        %v529 = vsel %vm499, %v526, %v528
        %v530 = vrot.slane %v336, 2
        %v531 = vrot.slane %v337, 2
        %v532 = vsel %vm499, %v530, %v531
        %v533 = vrot.slane %v338, 2
        %v534 = vsel %vm499, %v531, %v533
        %v535 = vrot.slane %v339, 2
        %v536 = vrot.slane %v340, 2
        %v537 = vsel %vm499, %v535, %v536
        %v538 = vrot.slane %v341, 2
        %v539 = vsel %vm499, %v536, %v538
        %v540 = vrot.slane %v342, 2
        %v541 = vrot.slane %v343, 2
        %v542 = vsel %vm499, %v540, %v541
        %v543 = vrot.slane %v344, 2
        %v544 = vsel %vm499, %v541, %v543
        %v545 = vrot.slane %v345, 2
        %v546 = vrot.slane %v346, 2
        %v547 = vsel %vm499, %v545, %v546
        %v548 = vrot.slane %v347, 2
        %v549 = vsel %vm499, %v546, %v548
        %v550 = vrot.slane %v348, 2
        %v551 = vrot.slane %v349, 2
        %v552 = vsel %vm499, %v550, %v551
        %v553 = vrot.slane %v350, 2
        %v554 = vsel %vm499, %v551, %v553
        %v555 = vrot.slane %v351, 2
        %v556 = vrot.slane %v352, 2
        %v557 = vsel %vm499, %v555, %v556
        %v558 = vrot.slane %v353, 2
        %v559 = vsel %vm499, %v556, %v558
        %v596 = vsel %vm499, %v503, 0.0
        %v597 = vsel %vm499, %v508, 0.0
        %v598 = vsel %vm499, %v513, 0.0
        %v599 = vsel %vm499, %v518, 0.0
        %v600 = vsel %vm499, %v523, 0.0
        %v601 = vsel %vm499, %v528, 0.0
        %v602 = vsel %vm499, %v533, 0.0
        %v603 = vsel %vm499, %v538, 0.0
        %v604 = vsel %vm499, %v543, 0.0
        %v605 = vsel %vm499, %v548, 0.0
        %v606 = vsel %vm499, %v553, 0.0
        %v607 = vsel %vm499, %v558, 0.0
        %v608 = vld [vmem:[#allocation4] sm:$0xff]
        %v609 = vld [vmem:[#allocation4 + $0x8] sm:$0xff]
        %v610 = vld [vmem:[#allocation4 + $0x10] sm:$0xff]
        %v611 = vld [vmem:[#allocation4 + $0x18] sm:$0xff]
        %v612 = vld [vmem:[#allocation4 + $0x20] sm:$0xff]
        %v613 = vld [vmem:[#allocation4 + $0x28] sm:$0xff]
        %v614 = vld [vmem:[#allocation4 + $0x30] sm:$0xff]
        %v615 = vld [vmem:[#allocation4 + $0x38] sm:$0xff]
        %v616 = vld [vmem:[#allocation4 + $0x40] sm:$0xff]
        %v617 = vld [vmem:[#allocation4 + $0x48] sm:$0xff]
        %v618 = vld [vmem:[#allocation4 + $0x50] sm:$0xff]
        %v619 = vld [vmem:[#allocation4 + $0x58] sm:$0xff]
        %v620 = vld [vmem:[#allocation4 + $0x60] sm:$0xff]
        %v621 = vld [vmem:[#allocation4 + $0x68] sm:$0xff]
        %v622 = vld [vmem:[#allocation4 + $0x70] sm:$0xff]
        %v623 = vld [vmem:[#allocation4 + $0x78] sm:$0xff]
        %v624 = vld [vmem:[#allocation4 + $0x80] sm:$0xff]
        %v625 = vld [vmem:[#allocation4 + $0x88] sm:$0xff]
        %v626 = vld [vmem:[#allocation4 + $0x90] sm:$0xff]
        %v627 = vld [vmem:[#allocation4 + $0x98] sm:$0xff]
        %v628 = vld [vmem:[#allocation4 + $0xa0] sm:$0xff]
        %v629 = vld [vmem:[#allocation4 + $0xa8] sm:$0xff]
        %v630 = vld [vmem:[#allocation4 + $0xb0] sm:$0xff]
        %v631 = vld [vmem:[#allocation4 + $0xb8] sm:$0xff]
        %v632 = vld [vmem:[#allocation4 + $0xc0] sm:$0xff]
        %v633 = vld [vmem:[#allocation4 + $0xc8] sm:$0xff]
        %v634 = vld [vmem:[#allocation4 + $0xd0] sm:$0xff]
        %v635 = vld [vmem:[#allocation4 + $0xd8] sm:$0xff]
        %v636 = vld [vmem:[#allocation4 + $0xe0] sm:$0xff]
        %v637 = vld [vmem:[#allocation4 + $0xe8] sm:$0xff]
        %v638 = vld [vmem:[#allocation4 + $0xf0] sm:$0xff]
        %v639 = vld [vmem:[#allocation4 + $0xf8] sm:$0xff]
        %v640 = vld [vmem:[#allocation4 + $0x100] sm:$0xff]
        %v641 = vld [vmem:[#allocation4 + $0x108] sm:$0xff]
        %v642 = vld [vmem:[#allocation4 + $0x110] sm:$0xff]
        %v643 = vld [vmem:[#allocation4 + $0x118] sm:$0xff]
        %v644 = vld [vmem:[#allocation4 + $0x120] sm:$0xff]
        %v645 = vld [vmem:[#allocation4 + $0x128] sm:$0xff]
        %v646 = vld [vmem:[#allocation4 + $0x130] sm:$0xff]
        %v647 = vld [vmem:[#allocation4 + $0x138] sm:$0xff]
        %v648 = vld [vmem:[#allocation4 + $0x140] sm:$0xff]
        %v649 = vld [vmem:[#allocation4 + $0x148] sm:$0xff]
        %v650 = vld [vmem:[#allocation4 + $0x150] sm:$0xff]
        %v651 = vld [vmem:[#allocation4 + $0x158] sm:$0xff]
        %v652 = vld [vmem:[#allocation4 + $0x160] sm:$0xff]
        %v653 = vld [vmem:[#allocation4 + $0x168] sm:$0xff]
        %v654 = vld [vmem:[#allocation4 + $0x170] sm:$0xff]
        %v655 = vld [vmem:[#allocation4 + $0x178] sm:$0xff]
        %s656 = scalar_lea.vmem [#allocation4], 384
        %v657 = vld [vmem:[%s656] sm:$0xff]
        %v658 = vld [vmem:[%s656 + $0x8] sm:$0xff]
        %v659 = vld [vmem:[%s656 + $0x10] sm:$0xff]
        %v660 = vld [vmem:[%s656 + $0x18] sm:$0xff]
        %v661 = vld [vmem:[%s656 + $0x20] sm:$0xff]
        %v662 = vld [vmem:[%s656 + $0x28] sm:$0xff]
        %v663 = vld [vmem:[%s656 + $0x30] sm:$0xff]
        %v664 = vld [vmem:[%s656 + $0x38] sm:$0xff]
        %v665 = vld [vmem:[%s656 + $0x40] sm:$0xff]
        %v666 = vld [vmem:[%s656 + $0x48] sm:$0xff]
        %v667 = vld [vmem:[%s656 + $0x50] sm:$0xff]
        %v668 = vld [vmem:[%s656 + $0x58] sm:$0xff]
        %v669 = vld [vmem:[%s656 + $0x60] sm:$0xff]
        %v670 = vld [vmem:[%s656 + $0x68] sm:$0xff]
        %v671 = vld [vmem:[%s656 + $0x70] sm:$0xff]
        %v672 = vld [vmem:[%s656 + $0x78] sm:$0xff]
        %v673 = vld [vmem:[%s656 + $0x80] sm:$0xff]
        %v674 = vld [vmem:[%s656 + $0x88] sm:$0xff]
        %v675 = vld [vmem:[%s656 + $0x90] sm:$0xff]
        %v676 = vld [vmem:[%s656 + $0x98] sm:$0xff]
        %v677 = vld [vmem:[%s656 + $0xa0] sm:$0xff]
        %v678 = vld [vmem:[%s656 + $0xa8] sm:$0xff]
        %v679 = vld [vmem:[%s656 + $0xb0] sm:$0xff]
        %v680 = vld [vmem:[%s656 + $0xb8] sm:$0xff]
        %v681 = vld [vmem:[%s656 + $0xc0] sm:$0xff]
        %v682 = vld [vmem:[%s656 + $0xc8] sm:$0xff]
        %v683 = vld [vmem:[%s656 + $0xd0] sm:$0xff]
        %v684 = vld [vmem:[%s656 + $0xd8] sm:$0xff]
        %v685 = vld [vmem:[%s656 + $0xe0] sm:$0xff]
        %v686 = vld [vmem:[%s656 + $0xe8] sm:$0xff]
        %v687 = vld [vmem:[%s656 + $0xf0] sm:$0xff]
        %v688 = vld [vmem:[%s656 + $0xf8] sm:$0xff]
        %v689 = vld [vmem:[%s656 + $0x100] sm:$0xff]
        %v690 = vld [vmem:[%s656 + $0x108] sm:$0xff]
        %v691 = vld [vmem:[%s656 + $0x110] sm:$0xff]
        %v692 = vld [vmem:[%s656 + $0x118] sm:$0xff]
        %v693 = vld [vmem:[%s656 + $0x120] sm:$0xff]
        %v694 = vld [vmem:[%s656 + $0x128] sm:$0xff]
        %v695 = vld [vmem:[%s656 + $0x130] sm:$0xff]
        %v696 = vld [vmem:[%s656 + $0x138] sm:$0xff]
        %v697 = vld [vmem:[%s656 + $0x140] sm:$0xff]
        %v698 = vld [vmem:[%s656 + $0x148] sm:$0xff]
        %v699 = vld [vmem:[%s656 + $0x150] sm:$0xff]
        %v700 = vld [vmem:[%s656 + $0x158] sm:$0xff]
        %v701 = vld [vmem:[%s656 + $0x160] sm:$0xff]
        %v702 = vld [vmem:[%s656 + $0x168] sm:$0xff]
        %v703 = vld [vmem:[%s656 + $0x170] sm:$0xff]
        %v704 = vld [vmem:[%s656 + $0x178] sm:$0xff]
        %705 = vmatpush.msra.mxu0 %v672
        %706 = vmatpush.msra.mxu0 %v671
        %707 = vmatpush.msra.mxu0 %v670
        %708 = vmatpush.msra.mxu0 %v669
        %709 = vmatpush.msra.mxu0 %v668
        %710 = vmatpush.msra.mxu0 %v667
        %711 = vmatpush.msra.mxu0 %v666
        %712 = vmatpush.msra.mxu0 %v665
        %713 = vmatpush.msra.mxu0 %v664
        %714 = vmatpush.msra.mxu0 %v663
        %715 = vmatpush.msra.mxu0 %v662
        %716 = vmatpush.msra.mxu0 %v661
        %717 = vmatpush.msra.mxu0 %v660
        %718 = vmatpush.msra.mxu0 %v659
        %719 = vmatpush.msra.mxu0 %v658
        %720 = vmatpush.msra.mxu0 %v657
        %721 = vmatmul.f32.gmra.mxu0 %v321
        %v722 = vpop.f32.mrf.mxu0
        %v723 = vadd.f32 0.0, %v722
        %724 = vmatmul.f32.gmra.mxu0 %v322
        %v725 = vpop.f32.mrf.mxu0
        %v726 = vadd.f32 0.0, %v725
        %727 = vmatmul.f32.gmra.mxu0 %v323
        %v728 = vpop.f32.mrf.mxu0
        %v729 = vadd.f32 0.0, %v728
        %730 = vmatmul.f32.gmra.mxu0 %v324
        %v731 = vpop.f32.mrf.mxu0
        %v732 = vadd.f32 0.0, %v731
        %733 = vmatmul.f32.gmra.mxu0 %v325
        %v734 = vpop.f32.mrf.mxu0
        %v735 = vadd.f32 0.0, %v734
        %736 = vmatmul.f32.gmra.mxu0 %v326
        %v737 = vpop.f32.mrf.mxu0
        %v738 = vadd.f32 0.0, %v737
        %739 = vmatmul.f32.gmra.mxu0 %v327
        %v740 = vpop.f32.mrf.mxu0
        %v741 = vadd.f32 0.0, %v740
        %742 = vmatmul.f32.gmra.mxu0 %v328
        %v743 = vpop.f32.mrf.mxu0
        %v744 = vadd.f32 0.0, %v743
        %745 = vmatmul.f32.gmra.mxu0 %v329
        %v746 = vpop.f32.mrf.mxu0
        %v747 = vadd.f32 0.0, %v746
        %748 = vmatmul.f32.gmra.mxu0 %v330
        %v749 = vpop.f32.mrf.mxu0
        %v750 = vadd.f32 0.0, %v749
        %751 = vmatmul.f32.gmra.mxu0 %v331
        %v752 = vpop.f32.mrf.mxu0
        %v753 = vadd.f32 0.0, %v752
        %754 = vmatmul.f32.gmra.mxu0 %v332
        %v755 = vpop.f32.mrf.mxu0
        %v756 = vadd.f32 0.0, %v755
        %757 = vmatmul.f32.gmra.mxu0 %v333
        %v758 = vpop.f32.mrf.mxu0
        %v759 = vadd.f32 0.0, %v758
        %760 = vmatmul.f32.gmra.mxu0 %v334
        %v761 = vpop.f32.mrf.mxu0
        %v762 = vadd.f32 0.0, %v761
        %763 = vmatmul.f32.gmra.mxu0 %v335
        %v764 = vpop.f32.mrf.mxu0
        %v765 = vadd.f32 0.0, %v764
        %766 = vmatmul.f32.gmra.mxu0 %v336
        %v767 = vpop.f32.mrf.mxu0
        %v768 = vadd.f32 0.0, %v767
        %769 = vmatmul.f32.gmra.mxu0 %v337
        %v770 = vpop.f32.mrf.mxu0
        %v771 = vadd.f32 0.0, %v770
        %772 = vmatmul.f32.gmra.mxu0 %v338
        %v773 = vpop.f32.mrf.mxu0
        %v774 = vadd.f32 0.0, %v773
        %775 = vmatmul.f32.gmra.mxu0 %v339
        %v776 = vpop.f32.mrf.mxu0
        %v777 = vadd.f32 0.0, %v776
        %778 = vmatmul.f32.gmra.mxu0 %v340
        %v779 = vpop.f32.mrf.mxu0
        %v780 = vadd.f32 0.0, %v779
        %781 = vmatmul.f32.gmra.mxu0 %v341
        %v782 = vpop.f32.mrf.mxu0
        %v783 = vadd.f32 0.0, %v782
        %784 = vmatmul.f32.gmra.mxu0 %v342
        %v785 = vpop.f32.mrf.mxu0
        %v786 = vadd.f32 0.0, %v785
        %787 = vmatmul.f32.gmra.mxu0 %v343
        %v788 = vpop.f32.mrf.mxu0
        %v789 = vadd.f32 0.0, %v788
        %790 = vmatmul.f32.gmra.mxu0 %v344
        %v791 = vpop.f32.mrf.mxu0
        %v792 = vadd.f32 0.0, %v791
        %793 = vmatmul.f32.gmra.mxu0 %v345
        %v794 = vpop.f32.mrf.mxu0
        %v795 = vadd.f32 0.0, %v794
        %796 = vmatmul.f32.gmra.mxu0 %v346
        %v797 = vpop.f32.mrf.mxu0
        %v798 = vadd.f32 0.0, %v797
        %799 = vmatmul.f32.gmra.mxu0 %v347
        %v800 = vpop.f32.mrf.mxu0
        %v801 = vadd.f32 0.0, %v800
        %802 = vmatmul.f32.gmra.mxu0 %v348
        %v803 = vpop.f32.mrf.mxu0
        %v804 = vadd.f32 0.0, %v803
        %805 = vmatmul.f32.gmra.mxu0 %v349
        %v806 = vpop.f32.mrf.mxu0
        %v807 = vadd.f32 0.0, %v806
        %808 = vmatmul.f32.gmra.mxu0 %v350
        %v809 = vpop.f32.mrf.mxu0
        %v810 = vadd.f32 0.0, %v809
        %811 = vdwg.mxu0
        %812 = vmatpush.msra.mxu0 %v688
        %813 = vmatpush.msra.mxu0 %v687
        %814 = vmatpush.msra.mxu0 %v686
        %815 = vmatpush.msra.mxu0 %v685
        %816 = vmatpush.msra.mxu0 %v684
        %817 = vmatpush.msra.mxu0 %v683
        %818 = vmatpush.msra.mxu0 %v682
        %819 = vmatpush.msra.mxu0 %v681
        %820 = vmatpush.msra.mxu0 %v680
        %821 = vmatpush.msra.mxu0 %v679
        %822 = vmatpush.msra.mxu0 %v678
        %823 = vmatpush.msra.mxu0 %v677
        %824 = vmatpush.msra.mxu0 %v676
        %825 = vmatpush.msra.mxu0 %v675
        %826 = vmatpush.msra.mxu0 %v674
        %827 = vmatpush.msra.mxu0 %v673
        %828 = vmatmul.f32.gmra.mxu0 %v398
        %v829 = vpop.f32.mrf.mxu0
        %v830 = vadd.f32 %v723, %v829
        %831 = vmatmul.f32.gmra.mxu0 %v400
        %v832 = vpop.f32.mrf.mxu0
        %v833 = vadd.f32 %v726, %v832
        %834 = vmatmul.f32.gmra.mxu0 %v488
        %v835 = vpop.f32.mrf.mxu0
        %v836 = vadd.f32 %v729, %v835
        %837 = vmatmul.f32.gmra.mxu0 %v403
        %v838 = vpop.f32.mrf.mxu0
        %v839 = vadd.f32 %v732, %v838
        %840 = vmatmul.f32.gmra.mxu0 %v405
        %v841 = vpop.f32.mrf.mxu0
        %v842 = vadd.f32 %v735, %v841
        %843 = vmatmul.f32.gmra.mxu0 %v489
        %v844 = vpop.f32.mrf.mxu0
        %v845 = vadd.f32 %v738, %v844
        %846 = vmatmul.f32.gmra.mxu0 %v408
        %v847 = vpop.f32.mrf.mxu0
        %v848 = vadd.f32 %v741, %v847
        %849 = vmatmul.f32.gmra.mxu0 %v410
        %v850 = vpop.f32.mrf.mxu0
        %v851 = vadd.f32 %v744, %v850
        %852 = vmatmul.f32.gmra.mxu0 %v490
        %v853 = vpop.f32.mrf.mxu0
        %v854 = vadd.f32 %v747, %v853
        %855 = vmatmul.f32.gmra.mxu0 %v413
        %v856 = vpop.f32.mrf.mxu0
        %v857 = vadd.f32 %v750, %v856
        %858 = vmatmul.f32.gmra.mxu0 %v415
        %v859 = vpop.f32.mrf.mxu0
        %v860 = vadd.f32 %v753, %v859
        %861 = vmatmul.f32.gmra.mxu0 %v491
        %v862 = vpop.f32.mrf.mxu0
        %v863 = vadd.f32 %v756, %v862
        %864 = vmatmul.f32.gmra.mxu0 %v418
        %v865 = vpop.f32.mrf.mxu0
        %v866 = vadd.f32 %v759, %v865
        %867 = vmatmul.f32.gmra.mxu0 %v420
        %v868 = vpop.f32.mrf.mxu0
        %v869 = vadd.f32 %v762, %v868
        %870 = vmatmul.f32.gmra.mxu0 %v492
        %v871 = vpop.f32.mrf.mxu0
        %v872 = vadd.f32 %v765, %v871
        %873 = vmatmul.f32.gmra.mxu0 %v423
        %v874 = vpop.f32.mrf.mxu0
        %v875 = vadd.f32 %v768, %v874
        %876 = vmatmul.f32.gmra.mxu0 %v425
        %v877 = vpop.f32.mrf.mxu0
        %v878 = vadd.f32 %v771, %v877
        %879 = vmatmul.f32.gmra.mxu0 %v493
        %v880 = vpop.f32.mrf.mxu0
        %v881 = vadd.f32 %v774, %v880
        %882 = vmatmul.f32.gmra.mxu0 %v428
        %v883 = vpop.f32.mrf.mxu0
        %v884 = vadd.f32 %v777, %v883
        %885 = vmatmul.f32.gmra.mxu0 %v430
        %v886 = vpop.f32.mrf.mxu0
        %v887 = vadd.f32 %v780, %v886
        %888 = vmatmul.f32.gmra.mxu0 %v494
        %v889 = vpop.f32.mrf.mxu0
        %v890 = vadd.f32 %v783, %v889
        %891 = vmatmul.f32.gmra.mxu0 %v433
        %v892 = vpop.f32.mrf.mxu0
        %v893 = vadd.f32 %v786, %v892
        %894 = vmatmul.f32.gmra.mxu0 %v435
        %v895 = vpop.f32.mrf.mxu0
        %v896 = vadd.f32 %v789, %v895
        %897 = vmatmul.f32.gmra.mxu0 %v495
        %v898 = vpop.f32.mrf.mxu0
        %v899 = vadd.f32 %v792, %v898
        %900 = vmatmul.f32.gmra.mxu0 %v438
        %v901 = vpop.f32.mrf.mxu0
        %v902 = vadd.f32 %v795, %v901
        %903 = vmatmul.f32.gmra.mxu0 %v440
        %v904 = vpop.f32.mrf.mxu0
        %v905 = vadd.f32 %v798, %v904
        %906 = vmatmul.f32.gmra.mxu0 %v496
        %v907 = vpop.f32.mrf.mxu0
        %v908 = vadd.f32 %v801, %v907
        %909 = vmatmul.f32.gmra.mxu0 %v443
        %v910 = vpop.f32.mrf.mxu0
        %v911 = vadd.f32 %v804, %v910
        %912 = vmatmul.f32.gmra.mxu0 %v445
        %v913 = vpop.f32.mrf.mxu0
        %v914 = vadd.f32 %v807, %v913
        %915 = vmatmul.f32.gmra.mxu0 %v497
        %v916 = vpop.f32.mrf.mxu0
        %v917 = vadd.f32 %v810, %v916
        %918 = vdwg.mxu0
        %919 = vmatpush.msra.mxu0 %v704
        %920 = vmatpush.msra.mxu0 %v703
        %921 = vmatpush.msra.mxu0 %v702
        %922 = vmatpush.msra.mxu0 %v701
        %923 = vmatpush.msra.mxu0 %v700
        %924 = vmatpush.msra.mxu0 %v699
        %925 = vmatpush.msra.mxu0 %v698
        %926 = vmatpush.msra.mxu0 %v697
        %927 = vmatpush.msra.mxu0 %v696
        %928 = vmatpush.msra.mxu0 %v695
        %929 = vmatpush.msra.mxu0 %v694
        %930 = vmatpush.msra.mxu0 %v693
        %931 = vmatpush.msra.mxu0 %v692
        %932 = vmatpush.msra.mxu0 %v691
        %933 = vmatpush.msra.mxu0 %v690
        %934 = vmatpush.msra.mxu0 %v689
        %935 = vmatmul.f32.gmra.mxu0 %v507
        %v936 = vpop.f32.mrf.mxu0
        %v937 = vadd.f32 %v830, %v936
        %938 = vmatmul.f32.gmra.mxu0 %v509
        %v939 = vpop.f32.mrf.mxu0
        %v940 = vadd.f32 %v833, %v939
        %941 = vmatmul.f32.gmra.mxu0 %v597
        %v942 = vpop.f32.mrf.mxu0
        %v943 = vadd.f32 %v836, %v942
        %944 = vmatmul.f32.gmra.mxu0 %v512
        %v945 = vpop.f32.mrf.mxu0
        %v946 = vadd.f32 %v839, %v945
        %947 = vmatmul.f32.gmra.mxu0 %v514
        %v948 = vpop.f32.mrf.mxu0
        %v949 = vadd.f32 %v842, %v948
        %950 = vmatmul.f32.gmra.mxu0 %v598
        %v951 = vpop.f32.mrf.mxu0
        %v952 = vadd.f32 %v845, %v951
        %953 = vmatmul.f32.gmra.mxu0 %v517
        %v954 = vpop.f32.mrf.mxu0
        %v955 = vadd.f32 %v848, %v954
        %956 = vmatmul.f32.gmra.mxu0 %v519
        %v957 = vpop.f32.mrf.mxu0
        %v958 = vadd.f32 %v851, %v957
        %959 = vmatmul.f32.gmra.mxu0 %v599
        %v960 = vpop.f32.mrf.mxu0
        %v961 = vadd.f32 %v854, %v960
        %962 = vmatmul.f32.gmra.mxu0 %v522
        %v963 = vpop.f32.mrf.mxu0
        %v964 = vadd.f32 %v857, %v963
        %965 = vmatmul.f32.gmra.mxu0 %v524
        %v966 = vpop.f32.mrf.mxu0
        %v967 = vadd.f32 %v860, %v966
        %968 = vmatmul.f32.gmra.mxu0 %v600
        %v969 = vpop.f32.mrf.mxu0
        %v970 = vadd.f32 %v863, %v969
        %971 = vmatmul.f32.gmra.mxu0 %v527
        %v972 = vpop.f32.mrf.mxu0
        %v973 = vadd.f32 %v866, %v972
        %974 = vmatmul.f32.gmra.mxu0 %v529
        %v975 = vpop.f32.mrf.mxu0
        %v976 = vadd.f32 %v869, %v975
        %977 = vmatmul.f32.gmra.mxu0 %v601
        %v978 = vpop.f32.mrf.mxu0
        %v979 = vadd.f32 %v872, %v978
        %980 = vmatmul.f32.gmra.mxu0 %v532
        %v981 = vpop.f32.mrf.mxu0
        %v982 = vadd.f32 %v875, %v981
        %983 = vmatmul.f32.gmra.mxu0 %v534
        %v984 = vpop.f32.mrf.mxu0
        %v985 = vadd.f32 %v878, %v984
        %986 = vmatmul.f32.gmra.mxu0 %v602
        %v987 = vpop.f32.mrf.mxu0
        %v988 = vadd.f32 %v881, %v987
        %989 = vmatmul.f32.gmra.mxu0 %v537
        %v990 = vpop.f32.mrf.mxu0
        %v991 = vadd.f32 %v884, %v990
        %992 = vmatmul.f32.gmra.mxu0 %v539
        %v993 = vpop.f32.mrf.mxu0
        %v994 = vadd.f32 %v887, %v993
        %995 = vmatmul.f32.gmra.mxu0 %v603
        %v996 = vpop.f32.mrf.mxu0
        %v997 = vadd.f32 %v890, %v996
        %998 = vmatmul.f32.gmra.mxu0 %v542
        %v999 = vpop.f32.mrf.mxu0
        %v1000 = vadd.f32 %v893, %v999
        %1001 = vmatmul.f32.gmra.mxu0 %v544
        %v1002 = vpop.f32.mrf.mxu0
        %v1003 = vadd.f32 %v896, %v1002
        %1004 = vmatmul.f32.gmra.mxu0 %v604
        %v1005 = vpop.f32.mrf.mxu0
        %v1006 = vadd.f32 %v899, %v1005
        %1007 = vmatmul.f32.gmra.mxu0 %v547
        %v1008 = vpop.f32.mrf.mxu0
        %v1009 = vadd.f32 %v902, %v1008
        %1010 = vmatmul.f32.gmra.mxu0 %v549
        %v1011 = vpop.f32.mrf.mxu0
        %v1012 = vadd.f32 %v905, %v1011
        %1013 = vmatmul.f32.gmra.mxu0 %v605
        %v1014 = vpop.f32.mrf.mxu0
        %v1015 = vadd.f32 %v908, %v1014
        %1016 = vmatmul.f32.gmra.mxu0 %v552
        %v1017 = vpop.f32.mrf.mxu0
        %v1018 = vadd.f32 %v911, %v1017
        %1019 = vmatmul.f32.gmra.mxu0 %v554
        %v1020 = vpop.f32.mrf.mxu0
        %v1021 = vadd.f32 %v914, %v1020
        %1022 = vmatmul.f32.gmra.mxu0 %v606
        %v1023 = vpop.f32.mrf.mxu0
        %v1024 = vadd.f32 %v917, %v1023
        %1025 = vdwg.mxu0
        %1026 = vmatpush.msra.mxu0 %v623
        %1027 = vmatpush.msra.mxu0 %v622
        %1028 = vmatpush.msra.mxu0 %v621
        %1029 = vmatpush.msra.mxu0 %v620
        %1030 = vmatpush.msra.mxu0 %v619
        %1031 = vmatpush.msra.mxu0 %v618
        %1032 = vmatpush.msra.mxu0 %v617
        %1033 = vmatpush.msra.mxu0 %v616
        %1034 = vmatpush.msra.mxu0 %v615
        %1035 = vmatpush.msra.mxu0 %v614
        %1036 = vmatpush.msra.mxu0 %v613
        %1037 = vmatpush.msra.mxu0 %v612
        %1038 = vmatpush.msra.mxu0 %v611
        %1039 = vmatpush.msra.mxu0 %v610
        %1040 = vmatpush.msra.mxu0 %v609
        %1041 = vmatpush.msra.mxu0 %v608
        %1042 = vmatmul.f32.gmra.mxu0 %v318
        %v1043 = vpop.f32.mrf.mxu0
        %v1044 = vadd.f32 %v937, %v1043
        %1045 = vmatmul.f32.gmra.mxu0 %v319
        %v1046 = vpop.f32.mrf.mxu0
        %v1047 = vadd.f32 %v940, %v1046
        %1048 = vmatmul.f32.gmra.mxu0 %v320
        %v1049 = vpop.f32.mrf.mxu0
        %v1050 = vadd.f32 %v943, %v1049
        %1051 = vmatmul.f32.gmra.mxu0 %v321
        %v1052 = vpop.f32.mrf.mxu0
        %v1053 = vadd.f32 %v946, %v1052
        %1054 = vmatmul.f32.gmra.mxu0 %v322
        %v1055 = vpop.f32.mrf.mxu0
        %v1056 = vadd.f32 %v949, %v1055
        %1057 = vmatmul.f32.gmra.mxu0 %v323
        %v1058 = vpop.f32.mrf.mxu0
        %v1059 = vadd.f32 %v952, %v1058
        %1060 = vmatmul.f32.gmra.mxu0 %v324
        %v1061 = vpop.f32.mrf.mxu0
        %v1062 = vadd.f32 %v955, %v1061
        %1063 = vmatmul.f32.gmra.mxu0 %v325
        %v1064 = vpop.f32.mrf.mxu0
        %v1065 = vadd.f32 %v958, %v1064
        %1066 = vmatmul.f32.gmra.mxu0 %v326
        %v1067 = vpop.f32.mrf.mxu0
        %v1068 = vadd.f32 %v961, %v1067
        %1069 = vmatmul.f32.gmra.mxu0 %v327
        %v1070 = vpop.f32.mrf.mxu0
        %v1071 = vadd.f32 %v964, %v1070
        %1072 = vmatmul.f32.gmra.mxu0 %v328
        %v1073 = vpop.f32.mrf.mxu0
        %v1074 = vadd.f32 %v967, %v1073
        %1075 = vmatmul.f32.gmra.mxu0 %v329
        %v1076 = vpop.f32.mrf.mxu0
        %v1077 = vadd.f32 %v970, %v1076
        %1078 = vmatmul.f32.gmra.mxu0 %v330
        %v1079 = vpop.f32.mrf.mxu0
        %v1080 = vadd.f32 %v973, %v1079
        %1081 = vmatmul.f32.gmra.mxu0 %v331
        %v1082 = vpop.f32.mrf.mxu0
        %v1083 = vadd.f32 %v976, %v1082
        %1084 = vmatmul.f32.gmra.mxu0 %v332
        %v1085 = vpop.f32.mrf.mxu0
        %v1086 = vadd.f32 %v979, %v1085
        %1087 = vmatmul.f32.gmra.mxu0 %v333
        %v1088 = vpop.f32.mrf.mxu0
        %v1089 = vadd.f32 %v982, %v1088
        %1090 = vmatmul.f32.gmra.mxu0 %v334
        %v1091 = vpop.f32.mrf.mxu0
        %v1092 = vadd.f32 %v985, %v1091
        %1093 = vmatmul.f32.gmra.mxu0 %v335
        %v1094 = vpop.f32.mrf.mxu0
        %v1095 = vadd.f32 %v988, %v1094
        %1096 = vmatmul.f32.gmra.mxu0 %v336
        %v1097 = vpop.f32.mrf.mxu0
        %v1098 = vadd.f32 %v991, %v1097
        %1099 = vmatmul.f32.gmra.mxu0 %v337
        %v1100 = vpop.f32.mrf.mxu0
        %v1101 = vadd.f32 %v994, %v1100
        %1102 = vmatmul.f32.gmra.mxu0 %v338
        %v1103 = vpop.f32.mrf.mxu0
        %v1104 = vadd.f32 %v997, %v1103
        %1105 = vmatmul.f32.gmra.mxu0 %v339
        %v1106 = vpop.f32.mrf.mxu0
        %v1107 = vadd.f32 %v1000, %v1106
        %1108 = vmatmul.f32.gmra.mxu0 %v340
        %v1109 = vpop.f32.mrf.mxu0
        %v1110 = vadd.f32 %v1003, %v1109
        %1111 = vmatmul.f32.gmra.mxu0 %v341
        %v1112 = vpop.f32.mrf.mxu0
        %v1113 = vadd.f32 %v1006, %v1112
        %1114 = vmatmul.f32.gmra.mxu0 %v342
        %v1115 = vpop.f32.mrf.mxu0
        %v1116 = vadd.f32 %v1009, %v1115
        %1117 = vmatmul.f32.gmra.mxu0 %v343
        %v1118 = vpop.f32.mrf.mxu0
        %v1119 = vadd.f32 %v1012, %v1118
        %1120 = vmatmul.f32.gmra.mxu0 %v344
        %v1121 = vpop.f32.mrf.mxu0
        %v1122 = vadd.f32 %v1015, %v1121
        %1123 = vmatmul.f32.gmra.mxu0 %v345
        %v1124 = vpop.f32.mrf.mxu0
        %v1125 = vadd.f32 %v1018, %v1124
        %1126 = vmatmul.f32.gmra.mxu0 %v346
        %v1127 = vpop.f32.mrf.mxu0
        %v1128 = vadd.f32 %v1021, %v1127
        %1129 = vmatmul.f32.gmra.mxu0 %v347
        %v1130 = vpop.f32.mrf.mxu0
        %v1131 = vadd.f32 %v1024, %v1130
        %1132 = vdwg.mxu0
        %1133 = vmatpush.msra.mxu0 %v639
        %1134 = vmatpush.msra.mxu0 %v638
        %1135 = vmatpush.msra.mxu0 %v637
        %1136 = vmatpush.msra.mxu0 %v636
        %1137 = vmatpush.msra.mxu0 %v635
        %1138 = vmatpush.msra.mxu0 %v634
        %1139 = vmatpush.msra.mxu0 %v633
        %1140 = vmatpush.msra.mxu0 %v632
        %1141 = vmatpush.msra.mxu0 %v631
        %1142 = vmatpush.msra.mxu0 %v630
        %1143 = vmatpush.msra.mxu0 %v629
        %1144 = vmatpush.msra.mxu0 %v628
        %1145 = vmatpush.msra.mxu0 %v627
        %1146 = vmatpush.msra.mxu0 %v626
        %1147 = vmatpush.msra.mxu0 %v625
        %1148 = vmatpush.msra.mxu0 %v624
        %1149 = vmatmul.f32.gmra.mxu0 %v393
        %v1150 = vpop.f32.mrf.mxu0
        %v1151 = vadd.f32 %v1044, %v1150
        %1152 = vmatmul.f32.gmra.mxu0 %v395
        %v1153 = vpop.f32.mrf.mxu0
        %v1154 = vadd.f32 %v1047, %v1153
        %1155 = vmatmul.f32.gmra.mxu0 %v487
        %v1156 = vpop.f32.mrf.mxu0
        %v1157 = vadd.f32 %v1050, %v1156
        %1158 = vmatmul.f32.gmra.mxu0 %v398
        %v1159 = vpop.f32.mrf.mxu0
        %v1160 = vadd.f32 %v1053, %v1159
        %1161 = vmatmul.f32.gmra.mxu0 %v400
        %v1162 = vpop.f32.mrf.mxu0
        %v1163 = vadd.f32 %v1056, %v1162
        %1164 = vmatmul.f32.gmra.mxu0 %v488
        %v1165 = vpop.f32.mrf.mxu0
        %v1166 = vadd.f32 %v1059, %v1165
        %1167 = vmatmul.f32.gmra.mxu0 %v403
        %v1168 = vpop.f32.mrf.mxu0
        %v1169 = vadd.f32 %v1062, %v1168
        %1170 = vmatmul.f32.gmra.mxu0 %v405
        %v1171 = vpop.f32.mrf.mxu0
        %v1172 = vadd.f32 %v1065, %v1171
        %1173 = vmatmul.f32.gmra.mxu0 %v489
        %v1174 = vpop.f32.mrf.mxu0
        %v1175 = vadd.f32 %v1068, %v1174
        %1176 = vmatmul.f32.gmra.mxu0 %v408
        %v1177 = vpop.f32.mrf.mxu0
        %v1178 = vadd.f32 %v1071, %v1177
        %1179 = vmatmul.f32.gmra.mxu0 %v410
        %v1180 = vpop.f32.mrf.mxu0
        %v1181 = vadd.f32 %v1074, %v1180
        %1182 = vmatmul.f32.gmra.mxu0 %v490
        %v1183 = vpop.f32.mrf.mxu0
        %v1184 = vadd.f32 %v1077, %v1183
        %1185 = vmatmul.f32.gmra.mxu0 %v413
        %v1186 = vpop.f32.mrf.mxu0
        %v1187 = vadd.f32 %v1080, %v1186
        %1188 = vmatmul.f32.gmra.mxu0 %v415
        %v1189 = vpop.f32.mrf.mxu0
        %v1190 = vadd.f32 %v1083, %v1189
        %1191 = vmatmul.f32.gmra.mxu0 %v491
        %v1192 = vpop.f32.mrf.mxu0
        %v1193 = vadd.f32 %v1086, %v1192
        %1194 = vmatmul.f32.gmra.mxu0 %v418
        %v1195 = vpop.f32.mrf.mxu0
        %v1196 = vadd.f32 %v1089, %v1195
        %1197 = vmatmul.f32.gmra.mxu0 %v420
        %v1198 = vpop.f32.mrf.mxu0
        %v1199 = vadd.f32 %v1092, %v1198
        %1200 = vmatmul.f32.gmra.mxu0 %v492
        %v1201 = vpop.f32.mrf.mxu0
        %v1202 = vadd.f32 %v1095, %v1201
        %1203 = vmatmul.f32.gmra.mxu0 %v423
        %v1204 = vpop.f32.mrf.mxu0
        %v1205 = vadd.f32 %v1098, %v1204
        %1206 = vmatmul.f32.gmra.mxu0 %v425
        %v1207 = vpop.f32.mrf.mxu0
        %v1208 = vadd.f32 %v1101, %v1207
        %1209 = vmatmul.f32.gmra.mxu0 %v493
        %v1210 = vpop.f32.mrf.mxu0
        %v1211 = vadd.f32 %v1104, %v1210
        %1212 = vmatmul.f32.gmra.mxu0 %v428
        %v1213 = vpop.f32.mrf.mxu0
        %v1214 = vadd.f32 %v1107, %v1213
        %1215 = vmatmul.f32.gmra.mxu0 %v430
        %v1216 = vpop.f32.mrf.mxu0
        %v1217 = vadd.f32 %v1110, %v1216
        %1218 = vmatmul.f32.gmra.mxu0 %v494
        %v1219 = vpop.f32.mrf.mxu0
        %v1220 = vadd.f32 %v1113, %v1219
        %1221 = vmatmul.f32.gmra.mxu0 %v433
        %v1222 = vpop.f32.mrf.mxu0
        %v1223 = vadd.f32 %v1116, %v1222
        %1224 = vmatmul.f32.gmra.mxu0 %v435
        %v1225 = vpop.f32.mrf.mxu0
        %v1226 = vadd.f32 %v1119, %v1225
        %1227 = vmatmul.f32.gmra.mxu0 %v495
        %v1228 = vpop.f32.mrf.mxu0
        %v1229 = vadd.f32 %v1122, %v1228
        %1230 = vmatmul.f32.gmra.mxu0 %v438
        %v1231 = vpop.f32.mrf.mxu0
        %v1232 = vadd.f32 %v1125, %v1231
        %1233 = vmatmul.f32.gmra.mxu0 %v440
        %v1234 = vpop.f32.mrf.mxu0
        %v1235 = vadd.f32 %v1128, %v1234
        %1236 = vmatmul.f32.gmra.mxu0 %v496
        %v1237 = vpop.f32.mrf.mxu0
        %v1238 = vadd.f32 %v1131, %v1237
        %1239 = vdwg.mxu0
        %1240 = vmatpush.msra.mxu0 %v655
        %1241 = vmatpush.msra.mxu0 %v654
        %1242 = vmatpush.msra.mxu0 %v653
        %1243 = vmatpush.msra.mxu0 %v652
        %1244 = vmatpush.msra.mxu0 %v651
        %1245 = vmatpush.msra.mxu0 %v650
        %1246 = vmatpush.msra.mxu0 %v649
        %1247 = vmatpush.msra.mxu0 %v648
        %1248 = vmatpush.msra.mxu0 %v647
        %1249 = vmatpush.msra.mxu0 %v646
        %1250 = vmatpush.msra.mxu0 %v645
        %1251 = vmatpush.msra.mxu0 %v644
        %1252 = vmatpush.msra.mxu0 %v643
        %1253 = vmatpush.msra.mxu0 %v642
        %1254 = vmatpush.msra.mxu0 %v641
        %1255 = vmatpush.msra.mxu0 %v640
        %1256 = vmatmul.f32.gmra.mxu0 %v502
        %v1257 = vpop.f32.mrf.mxu0
        %v1258 = vadd.f32 %v1151, %v1257
        %1259 = vmatmul.f32.gmra.mxu0 %v504
        %v1260 = vpop.f32.mrf.mxu0
        %v1261 = vadd.f32 %v1154, %v1260
        %1262 = vmatmul.f32.gmra.mxu0 %v596
        %v1263 = vpop.f32.mrf.mxu0
        %v1264 = vadd.f32 %v1157, %v1263
        %1265 = vmatmul.f32.gmra.mxu0 %v507
        %v1266 = vpop.f32.mrf.mxu0
        %v1267 = vadd.f32 %v1160, %v1266
        %1268 = vmatmul.f32.gmra.mxu0 %v509
        %v1269 = vpop.f32.mrf.mxu0
        %v1270 = vadd.f32 %v1163, %v1269
        %1271 = vmatmul.f32.gmra.mxu0 %v597
        %v1272 = vpop.f32.mrf.mxu0
        %v1273 = vadd.f32 %v1166, %v1272
        %1274 = vmatmul.f32.gmra.mxu0 %v512
        %v1275 = vpop.f32.mrf.mxu0
        %v1276 = vadd.f32 %v1169, %v1275
        %1277 = vmatmul.f32.gmra.mxu0 %v514
        %v1278 = vpop.f32.mrf.mxu0
        %v1279 = vadd.f32 %v1172, %v1278
        %1280 = vmatmul.f32.gmra.mxu0 %v598
        %v1281 = vpop.f32.mrf.mxu0
        %v1282 = vadd.f32 %v1175, %v1281
        %1283 = vmatmul.f32.gmra.mxu0 %v517
        %v1284 = vpop.f32.mrf.mxu0
        %v1285 = vadd.f32 %v1178, %v1284
        %1286 = vmatmul.f32.gmra.mxu0 %v519
        %v1287 = vpop.f32.mrf.mxu0
        %v1288 = vadd.f32 %v1181, %v1287
        %1289 = vmatmul.f32.gmra.mxu0 %v599
        %v1290 = vpop.f32.mrf.mxu0
        %v1291 = vadd.f32 %v1184, %v1290
        %1292 = vmatmul.f32.gmra.mxu0 %v522
        %v1293 = vpop.f32.mrf.mxu0
        %v1294 = vadd.f32 %v1187, %v1293
        %1295 = vmatmul.f32.gmra.mxu0 %v524
        %v1296 = vpop.f32.mrf.mxu0
        %v1297 = vadd.f32 %v1190, %v1296
        %1298 = vmatmul.f32.gmra.mxu0 %v600
        %v1299 = vpop.f32.mrf.mxu0
        %v1300 = vadd.f32 %v1193, %v1299
        %1301 = vmatmul.f32.gmra.mxu0 %v527
        %v1302 = vpop.f32.mrf.mxu0
        %v1303 = vadd.f32 %v1196, %v1302
        %1304 = vmatmul.f32.gmra.mxu0 %v529
        %v1305 = vpop.f32.mrf.mxu0
        %v1306 = vadd.f32 %v1199, %v1305
        %1307 = vmatmul.f32.gmra.mxu0 %v601
        %v1308 = vpop.f32.mrf.mxu0
        %v1309 = vadd.f32 %v1202, %v1308
        %1310 = vmatmul.f32.gmra.mxu0 %v532
        %v1311 = vpop.f32.mrf.mxu0
        %v1312 = vadd.f32 %v1205, %v1311
        %1313 = vmatmul.f32.gmra.mxu0 %v534
        %v1314 = vpop.f32.mrf.mxu0
        %v1315 = vadd.f32 %v1208, %v1314
        %1316 = vmatmul.f32.gmra.mxu0 %v602
        %v1317 = vpop.f32.mrf.mxu0
        %v1318 = vadd.f32 %v1211, %v1317
        %1319 = vmatmul.f32.gmra.mxu0 %v537
        %v1320 = vpop.f32.mrf.mxu0
        %v1321 = vadd.f32 %v1214, %v1320
        %1322 = vmatmul.f32.gmra.mxu0 %v539
        %v1323 = vpop.f32.mrf.mxu0
        %v1324 = vadd.f32 %v1217, %v1323
        %1325 = vmatmul.f32.gmra.mxu0 %v603
        %v1326 = vpop.f32.mrf.mxu0
        %v1327 = vadd.f32 %v1220, %v1326
        %1328 = vmatmul.f32.gmra.mxu0 %v542
        %v1329 = vpop.f32.mrf.mxu0
        %v1330 = vadd.f32 %v1223, %v1329
        %1331 = vmatmul.f32.gmra.mxu0 %v544
        %v1332 = vpop.f32.mrf.mxu0
        %v1333 = vadd.f32 %v1226, %v1332
        %1334 = vmatmul.f32.gmra.mxu0 %v604
        %v1335 = vpop.f32.mrf.mxu0
        %v1336 = vadd.f32 %v1229, %v1335
        %1337 = vmatmul.f32.gmra.mxu0 %v547
        %v1338 = vpop.f32.mrf.mxu0
        %v1339 = vadd.f32 %v1232, %v1338
        %1340 = vmatmul.f32.gmra.mxu0 %v549
        %v1341 = vpop.f32.mrf.mxu0
        %v1342 = vadd.f32 %v1235, %v1341
        %1343 = vmatmul.f32.gmra.mxu0 %v605
        %v1344 = vpop.f32.mrf.mxu0
        %v1345 = vadd.f32 %v1238, %v1344
        %1346 = vdwg.mxu0
        %s1347 = scalar_lea.vmem [#allocation4], 768
        %v1348 = vld [vmem:[%s1347] sm:$0xff]
        %v1349 = vld [vmem:[%s1347 + $0x8] sm:$0xff]
        %v1350 = vld [vmem:[%s1347 + $0x10] sm:$0xff]
        %v1351 = vld [vmem:[%s1347 + $0x18] sm:$0xff]
        %v1352 = vld [vmem:[%s1347 + $0x20] sm:$0xff]
        %v1353 = vld [vmem:[%s1347 + $0x28] sm:$0xff]
        %v1354 = vld [vmem:[%s1347 + $0x30] sm:$0xff]
        %v1355 = vld [vmem:[%s1347 + $0x38] sm:$0xff]
        %v1356 = vld [vmem:[%s1347 + $0x40] sm:$0xff]
        %v1357 = vld [vmem:[%s1347 + $0x48] sm:$0xff]
        %v1358 = vld [vmem:[%s1347 + $0x50] sm:$0xff]
        %v1359 = vld [vmem:[%s1347 + $0x58] sm:$0xff]
        %v1360 = vld [vmem:[%s1347 + $0x60] sm:$0xff]
        %v1361 = vld [vmem:[%s1347 + $0x68] sm:$0xff]
        %v1362 = vld [vmem:[%s1347 + $0x70] sm:$0xff]
        %v1363 = vld [vmem:[%s1347 + $0x78] sm:$0xff]
        %v1364 = vld [vmem:[%s1347 + $0x80] sm:$0xff]
        %v1365 = vld [vmem:[%s1347 + $0x88] sm:$0xff]
        %v1366 = vld [vmem:[%s1347 + $0x90] sm:$0xff]
        %v1367 = vld [vmem:[%s1347 + $0x98] sm:$0xff]
        %v1368 = vld [vmem:[%s1347 + $0xa0] sm:$0xff]
        %v1369 = vld [vmem:[%s1347 + $0xa8] sm:$0xff]
        %v1370 = vld [vmem:[%s1347 + $0xb0] sm:$0xff]
        %v1371 = vld [vmem:[%s1347 + $0xb8] sm:$0xff]
        %v1372 = vld [vmem:[%s1347 + $0xc0] sm:$0xff]
        %v1373 = vld [vmem:[%s1347 + $0xc8] sm:$0xff]
        %v1374 = vld [vmem:[%s1347 + $0xd0] sm:$0xff]
        %v1375 = vld [vmem:[%s1347 + $0xd8] sm:$0xff]
        %v1376 = vld [vmem:[%s1347 + $0xe0] sm:$0xff]
        %v1377 = vld [vmem:[%s1347 + $0xe8] sm:$0xff]
        %v1378 = vld [vmem:[%s1347 + $0xf0] sm:$0xff]
        %v1379 = vld [vmem:[%s1347 + $0xf8] sm:$0xff]
        %v1380 = vld [vmem:[%s1347 + $0x100] sm:$0xff]
        %v1381 = vld [vmem:[%s1347 + $0x108] sm:$0xff]
        %v1382 = vld [vmem:[%s1347 + $0x110] sm:$0xff]
        %v1383 = vld [vmem:[%s1347 + $0x118] sm:$0xff]
        %v1384 = vld [vmem:[%s1347 + $0x120] sm:$0xff]
        %v1385 = vld [vmem:[%s1347 + $0x128] sm:$0xff]
        %v1386 = vld [vmem:[%s1347 + $0x130] sm:$0xff]
        %v1387 = vld [vmem:[%s1347 + $0x138] sm:$0xff]
        %v1388 = vld [vmem:[%s1347 + $0x140] sm:$0xff]
        %v1389 = vld [vmem:[%s1347 + $0x148] sm:$0xff]
        %v1390 = vld [vmem:[%s1347 + $0x150] sm:$0xff]
        %v1391 = vld [vmem:[%s1347 + $0x158] sm:$0xff]
        %v1392 = vld [vmem:[%s1347 + $0x160] sm:$0xff]
        %v1393 = vld [vmem:[%s1347 + $0x168] sm:$0xff]
        %v1394 = vld [vmem:[%s1347 + $0x170] sm:$0xff]
        %v1395 = vld [vmem:[%s1347 + $0x178] sm:$0xff]
        %1396 = vmatpush.msra.mxu0 %v1363
        %1397 = vmatpush.msra.mxu0 %v1362
        %1398 = vmatpush.msra.mxu0 %v1361
        %1399 = vmatpush.msra.mxu0 %v1360
        %1400 = vmatpush.msra.mxu0 %v1359
        %1401 = vmatpush.msra.mxu0 %v1358
        %1402 = vmatpush.msra.mxu0 %v1357
        %1403 = vmatpush.msra.mxu0 %v1356
        %1404 = vmatpush.msra.mxu0 %v1355
        %1405 = vmatpush.msra.mxu0 %v1354
        %1406 = vmatpush.msra.mxu0 %v1353
        %1407 = vmatpush.msra.mxu0 %v1352
        %1408 = vmatpush.msra.mxu0 %v1351
        %1409 = vmatpush.msra.mxu0 %v1350
        %1410 = vmatpush.msra.mxu0 %v1349
        %1411 = vmatpush.msra.mxu0 %v1348
        %1412 = vmatmul.f32.gmra.mxu0 %v324
        %v1413 = vpop.f32.mrf.mxu0
        %v1414 = vadd.f32 0.0, %v1413
        %1415 = vmatmul.f32.gmra.mxu0 %v325
        %v1416 = vpop.f32.mrf.mxu0
        %v1417 = vadd.f32 0.0, %v1416
        %1418 = vmatmul.f32.gmra.mxu0 %v326
        %v1419 = vpop.f32.mrf.mxu0
        %v1420 = vadd.f32 0.0, %v1419
        %1421 = vmatmul.f32.gmra.mxu0 %v327
        %v1422 = vpop.f32.mrf.mxu0
        %v1423 = vadd.f32 0.0, %v1422
        %1424 = vmatmul.f32.gmra.mxu0 %v328
        %v1425 = vpop.f32.mrf.mxu0
        %v1426 = vadd.f32 0.0, %v1425
        %1427 = vmatmul.f32.gmra.mxu0 %v329
        %v1428 = vpop.f32.mrf.mxu0
        %v1429 = vadd.f32 0.0, %v1428
        %1430 = vmatmul.f32.gmra.mxu0 %v330
        %v1431 = vpop.f32.mrf.mxu0
        %v1432 = vadd.f32 0.0, %v1431
        %1433 = vmatmul.f32.gmra.mxu0 %v331
        %v1434 = vpop.f32.mrf.mxu0
        %v1435 = vadd.f32 0.0, %v1434
        %1436 = vmatmul.f32.gmra.mxu0 %v332
        %v1437 = vpop.f32.mrf.mxu0
        %v1438 = vadd.f32 0.0, %v1437
        %1439 = vmatmul.f32.gmra.mxu0 %v333
        %v1440 = vpop.f32.mrf.mxu0
        %v1441 = vadd.f32 0.0, %v1440
        %1442 = vmatmul.f32.gmra.mxu0 %v334
        %v1443 = vpop.f32.mrf.mxu0
        %v1444 = vadd.f32 0.0, %v1443
        %1445 = vmatmul.f32.gmra.mxu0 %v335
        %v1446 = vpop.f32.mrf.mxu0
        %v1447 = vadd.f32 0.0, %v1446
        %1448 = vmatmul.f32.gmra.mxu0 %v336
        %v1449 = vpop.f32.mrf.mxu0
        %v1450 = vadd.f32 0.0, %v1449
        %1451 = vmatmul.f32.gmra.mxu0 %v337
        %v1452 = vpop.f32.mrf.mxu0
        %v1453 = vadd.f32 0.0, %v1452
        %1454 = vmatmul.f32.gmra.mxu0 %v338
        %v1455 = vpop.f32.mrf.mxu0
        %v1456 = vadd.f32 0.0, %v1455
        %1457 = vmatmul.f32.gmra.mxu0 %v339
        %v1458 = vpop.f32.mrf.mxu0
        %v1459 = vadd.f32 0.0, %v1458
        %1460 = vmatmul.f32.gmra.mxu0 %v340
        %v1461 = vpop.f32.mrf.mxu0
        %v1462 = vadd.f32 0.0, %v1461
        %1463 = vmatmul.f32.gmra.mxu0 %v341
        %v1464 = vpop.f32.mrf.mxu0
        %v1465 = vadd.f32 0.0, %v1464
        %1466 = vmatmul.f32.gmra.mxu0 %v342
        %v1467 = vpop.f32.mrf.mxu0
        %v1468 = vadd.f32 0.0, %v1467
        %1469 = vmatmul.f32.gmra.mxu0 %v343
        %v1470 = vpop.f32.mrf.mxu0
        %v1471 = vadd.f32 0.0, %v1470
        %1472 = vmatmul.f32.gmra.mxu0 %v344
        %v1473 = vpop.f32.mrf.mxu0
        %v1474 = vadd.f32 0.0, %v1473
        %1475 = vmatmul.f32.gmra.mxu0 %v345
        %v1476 = vpop.f32.mrf.mxu0
        %v1477 = vadd.f32 0.0, %v1476
        %1478 = vmatmul.f32.gmra.mxu0 %v346
        %v1479 = vpop.f32.mrf.mxu0
        %v1480 = vadd.f32 0.0, %v1479
        %1481 = vmatmul.f32.gmra.mxu0 %v347
        %v1482 = vpop.f32.mrf.mxu0
        %v1483 = vadd.f32 0.0, %v1482
        %1484 = vmatmul.f32.gmra.mxu0 %v348
        %v1485 = vpop.f32.mrf.mxu0
        %v1486 = vadd.f32 0.0, %v1485
        %1487 = vmatmul.f32.gmra.mxu0 %v349
        %v1488 = vpop.f32.mrf.mxu0
        %v1489 = vadd.f32 0.0, %v1488
        %1490 = vmatmul.f32.gmra.mxu0 %v350
        %v1491 = vpop.f32.mrf.mxu0
        %v1492 = vadd.f32 0.0, %v1491
        %1493 = vmatmul.f32.gmra.mxu0 %v351
        %v1494 = vpop.f32.mrf.mxu0
        %v1495 = vadd.f32 0.0, %v1494
        %1496 = vmatmul.f32.gmra.mxu0 %v352
        %v1497 = vpop.f32.mrf.mxu0
        %v1498 = vadd.f32 0.0, %v1497
        %1499 = vmatmul.f32.gmra.mxu0 %v353
        %v1500 = vpop.f32.mrf.mxu0
        %v1501 = vadd.f32 0.0, %v1500
        %1502 = vdwg.mxu0
        %1503 = vmatpush.msra.mxu0 %v1379
        %1504 = vmatpush.msra.mxu0 %v1378
        %1505 = vmatpush.msra.mxu0 %v1377
        %1506 = vmatpush.msra.mxu0 %v1376
        %1507 = vmatpush.msra.mxu0 %v1375
        %1508 = vmatpush.msra.mxu0 %v1374
        %1509 = vmatpush.msra.mxu0 %v1373
        %1510 = vmatpush.msra.mxu0 %v1372
        %1511 = vmatpush.msra.mxu0 %v1371
        %1512 = vmatpush.msra.mxu0 %v1370
        %1513 = vmatpush.msra.mxu0 %v1369
        %1514 = vmatpush.msra.mxu0 %v1368
        %1515 = vmatpush.msra.mxu0 %v1367
        %1516 = vmatpush.msra.mxu0 %v1366
        %1517 = vmatpush.msra.mxu0 %v1365
        %1518 = vmatpush.msra.mxu0 %v1364
        %1519 = vmatmul.f32.gmra.mxu0 %v403
        %v1520 = vpop.f32.mrf.mxu0
        %v1521 = vadd.f32 %v1414, %v1520
        %1522 = vmatmul.f32.gmra.mxu0 %v405
        %v1523 = vpop.f32.mrf.mxu0
        %v1524 = vadd.f32 %v1417, %v1523
        %1525 = vmatmul.f32.gmra.mxu0 %v489
        %v1526 = vpop.f32.mrf.mxu0
        %v1527 = vadd.f32 %v1420, %v1526
        %1528 = vmatmul.f32.gmra.mxu0 %v408
        %v1529 = vpop.f32.mrf.mxu0
        %v1530 = vadd.f32 %v1423, %v1529
        %1531 = vmatmul.f32.gmra.mxu0 %v410
        %v1532 = vpop.f32.mrf.mxu0
        %v1533 = vadd.f32 %v1426, %v1532
        %1534 = vmatmul.f32.gmra.mxu0 %v490
        %v1535 = vpop.f32.mrf.mxu0
        %v1536 = vadd.f32 %v1429, %v1535
        %1537 = vmatmul.f32.gmra.mxu0 %v413
        %v1538 = vpop.f32.mrf.mxu0
        %v1539 = vadd.f32 %v1432, %v1538
        %1540 = vmatmul.f32.gmra.mxu0 %v415
        %v1541 = vpop.f32.mrf.mxu0
        %v1542 = vadd.f32 %v1435, %v1541
        %1543 = vmatmul.f32.gmra.mxu0 %v491
        %v1544 = vpop.f32.mrf.mxu0
        %v1545 = vadd.f32 %v1438, %v1544
        %1546 = vmatmul.f32.gmra.mxu0 %v418
        %v1547 = vpop.f32.mrf.mxu0
        %v1548 = vadd.f32 %v1441, %v1547
        %1549 = vmatmul.f32.gmra.mxu0 %v420
        %v1550 = vpop.f32.mrf.mxu0
        %v1551 = vadd.f32 %v1444, %v1550
        %1552 = vmatmul.f32.gmra.mxu0 %v492
        %v1553 = vpop.f32.mrf.mxu0
        %v1554 = vadd.f32 %v1447, %v1553
        %1555 = vmatmul.f32.gmra.mxu0 %v423
        %v1556 = vpop.f32.mrf.mxu0
        %v1557 = vadd.f32 %v1450, %v1556
        %1558 = vmatmul.f32.gmra.mxu0 %v425
        %v1559 = vpop.f32.mrf.mxu0
        %v1560 = vadd.f32 %v1453, %v1559
        %1561 = vmatmul.f32.gmra.mxu0 %v493
        %v1562 = vpop.f32.mrf.mxu0
        %v1563 = vadd.f32 %v1456, %v1562
        %1564 = vmatmul.f32.gmra.mxu0 %v428
        %v1565 = vpop.f32.mrf.mxu0
        %v1566 = vadd.f32 %v1459, %v1565
        %1567 = vmatmul.f32.gmra.mxu0 %v430
        %v1568 = vpop.f32.mrf.mxu0
        %v1569 = vadd.f32 %v1462, %v1568
        %1570 = vmatmul.f32.gmra.mxu0 %v494
        %v1571 = vpop.f32.mrf.mxu0
        %v1572 = vadd.f32 %v1465, %v1571
        %1573 = vmatmul.f32.gmra.mxu0 %v433
        %v1574 = vpop.f32.mrf.mxu0
        %v1575 = vadd.f32 %v1468, %v1574
        %1576 = vmatmul.f32.gmra.mxu0 %v435
        %v1577 = vpop.f32.mrf.mxu0
        %v1578 = vadd.f32 %v1471, %v1577
        %1579 = vmatmul.f32.gmra.mxu0 %v495
        %v1580 = vpop.f32.mrf.mxu0
        %v1581 = vadd.f32 %v1474, %v1580
        %1582 = vmatmul.f32.gmra.mxu0 %v438
        %v1583 = vpop.f32.mrf.mxu0
        %v1584 = vadd.f32 %v1477, %v1583
        %1585 = vmatmul.f32.gmra.mxu0 %v440
        %v1586 = vpop.f32.mrf.mxu0
        %v1587 = vadd.f32 %v1480, %v1586
        %1588 = vmatmul.f32.gmra.mxu0 %v496
        %v1589 = vpop.f32.mrf.mxu0
        %v1590 = vadd.f32 %v1483, %v1589
        %1591 = vmatmul.f32.gmra.mxu0 %v443
        %v1592 = vpop.f32.mrf.mxu0
        %v1593 = vadd.f32 %v1486, %v1592
        %1594 = vmatmul.f32.gmra.mxu0 %v445
        %v1595 = vpop.f32.mrf.mxu0
        %v1596 = vadd.f32 %v1489, %v1595
        %1597 = vmatmul.f32.gmra.mxu0 %v497
        %v1598 = vpop.f32.mrf.mxu0
        %v1599 = vadd.f32 %v1492, %v1598
        %1600 = vmatmul.f32.gmra.mxu0 %v448
        %v1601 = vpop.f32.mrf.mxu0
        %v1602 = vadd.f32 %v1495, %v1601
        %1603 = vmatmul.f32.gmra.mxu0 %v450
        %v1604 = vpop.f32.mrf.mxu0
        %v1605 = vadd.f32 %v1498, %v1604
        %1606 = vmatmul.f32.gmra.mxu0 %v498
        %v1607 = vpop.f32.mrf.mxu0
        %v1608 = vadd.f32 %v1501, %v1607
        %1609 = vdwg.mxu0
        %1610 = vmatpush.msra.mxu0 %v1395
        %1611 = vmatpush.msra.mxu0 %v1394
        %1612 = vmatpush.msra.mxu0 %v1393
        %1613 = vmatpush.msra.mxu0 %v1392
        %1614 = vmatpush.msra.mxu0 %v1391
        %1615 = vmatpush.msra.mxu0 %v1390
        %1616 = vmatpush.msra.mxu0 %v1389
        %1617 = vmatpush.msra.mxu0 %v1388
        %1618 = vmatpush.msra.mxu0 %v1387
        %1619 = vmatpush.msra.mxu0 %v1386
        %1620 = vmatpush.msra.mxu0 %v1385
        %1621 = vmatpush.msra.mxu0 %v1384
        %1622 = vmatpush.msra.mxu0 %v1383
        %1623 = vmatpush.msra.mxu0 %v1382
        %1624 = vmatpush.msra.mxu0 %v1381
        %1625 = vmatpush.msra.mxu0 %v1380
        %1626 = vmatmul.f32.gmra.mxu0 %v512
        %v1627 = vpop.f32.mrf.mxu0
        %v1628 = vadd.f32 %v1521, %v1627
        %1629 = vmatmul.f32.gmra.mxu0 %v514
        %v1630 = vpop.f32.mrf.mxu0
        %v1631 = vadd.f32 %v1524, %v1630
        %1632 = vmatmul.f32.gmra.mxu0 %v598
        %v1633 = vpop.f32.mrf.mxu0
        %v1634 = vadd.f32 %v1527, %v1633
        %1635 = vmatmul.f32.gmra.mxu0 %v517
        %v1636 = vpop.f32.mrf.mxu0
        %v1637 = vadd.f32 %v1530, %v1636
        %1638 = vmatmul.f32.gmra.mxu0 %v519
        %v1639 = vpop.f32.mrf.mxu0
        %v1640 = vadd.f32 %v1533, %v1639
        %1641 = vmatmul.f32.gmra.mxu0 %v599
        %v1642 = vpop.f32.mrf.mxu0
        %v1643 = vadd.f32 %v1536, %v1642
        %1644 = vmatmul.f32.gmra.mxu0 %v522
        %v1645 = vpop.f32.mrf.mxu0
        %v1646 = vadd.f32 %v1539, %v1645
        %1647 = vmatmul.f32.gmra.mxu0 %v524
        %v1648 = vpop.f32.mrf.mxu0
        %v1649 = vadd.f32 %v1542, %v1648
        %1650 = vmatmul.f32.gmra.mxu0 %v600
        %v1651 = vpop.f32.mrf.mxu0
        %v1652 = vadd.f32 %v1545, %v1651
        %1653 = vmatmul.f32.gmra.mxu0 %v527
        %v1654 = vpop.f32.mrf.mxu0
        %v1655 = vadd.f32 %v1548, %v1654
        %1656 = vmatmul.f32.gmra.mxu0 %v529
        %v1657 = vpop.f32.mrf.mxu0
        %v1658 = vadd.f32 %v1551, %v1657
        %1659 = vmatmul.f32.gmra.mxu0 %v601
        %v1660 = vpop.f32.mrf.mxu0
        %v1661 = vadd.f32 %v1554, %v1660
        %1662 = vmatmul.f32.gmra.mxu0 %v532
        %v1663 = vpop.f32.mrf.mxu0
        %v1664 = vadd.f32 %v1557, %v1663
        %1665 = vmatmul.f32.gmra.mxu0 %v534
        %v1666 = vpop.f32.mrf.mxu0
        %v1667 = vadd.f32 %v1560, %v1666
        %1668 = vmatmul.f32.gmra.mxu0 %v602
        %v1669 = vpop.f32.mrf.mxu0
        %v1670 = vadd.f32 %v1563, %v1669
        %1671 = vmatmul.f32.gmra.mxu0 %v537
        %v1672 = vpop.f32.mrf.mxu0
        %v1673 = vadd.f32 %v1566, %v1672
        %1674 = vmatmul.f32.gmra.mxu0 %v539
        %v1675 = vpop.f32.mrf.mxu0
        %v1676 = vadd.f32 %v1569, %v1675
        %1677 = vmatmul.f32.gmra.mxu0 %v603
        %v1678 = vpop.f32.mrf.mxu0
        %v1679 = vadd.f32 %v1572, %v1678
        %1680 = vmatmul.f32.gmra.mxu0 %v542
        %v1681 = vpop.f32.mrf.mxu0
        %v1682 = vadd.f32 %v1575, %v1681
        %1683 = vmatmul.f32.gmra.mxu0 %v544
        %v1684 = vpop.f32.mrf.mxu0
        %v1685 = vadd.f32 %v1578, %v1684
        %1686 = vmatmul.f32.gmra.mxu0 %v604
        %v1687 = vpop.f32.mrf.mxu0
        %v1688 = vadd.f32 %v1581, %v1687
        %1689 = vmatmul.f32.gmra.mxu0 %v547
        %v1690 = vpop.f32.mrf.mxu0
        %v1691 = vadd.f32 %v1584, %v1690
        %1692 = vmatmul.f32.gmra.mxu0 %v549
        %v1693 = vpop.f32.mrf.mxu0
        %v1694 = vadd.f32 %v1587, %v1693
        %1695 = vmatmul.f32.gmra.mxu0 %v605
        %v1696 = vpop.f32.mrf.mxu0
        %v1697 = vadd.f32 %v1590, %v1696
        %1698 = vmatmul.f32.gmra.mxu0 %v552
        %v1699 = vpop.f32.mrf.mxu0
        %v1700 = vadd.f32 %v1593, %v1699
        %1701 = vmatmul.f32.gmra.mxu0 %v554
        %v1702 = vpop.f32.mrf.mxu0
        %v1703 = vadd.f32 %v1596, %v1702
        %1704 = vmatmul.f32.gmra.mxu0 %v606
        %v1705 = vpop.f32.mrf.mxu0
        %v1706 = vadd.f32 %v1599, %v1705
        %1707 = vmatmul.f32.gmra.mxu0 %v557
        %v1708 = vpop.f32.mrf.mxu0
        %v1709 = vadd.f32 %v1602, %v1708
        %1710 = vmatmul.f32.gmra.mxu0 %v559
        %v1711 = vpop.f32.mrf.mxu0
        %v1712 = vadd.f32 %v1605, %v1711
        %1713 = vmatmul.f32.gmra.mxu0 %v607
        %v1714 = vpop.f32.mrf.mxu0
        %v1715 = vadd.f32 %v1608, %v1714
        %1716 = vdwg.mxu0
        %v1717 = vadd.f32 %v1258, %v1628
        %v1718 = vadd.f32 %v1261, %v1631
        %v1719 = vadd.f32 %v1264, %v1634
        %v1720 = vadd.f32 %v1267, %v1637
        %v1721 = vadd.f32 %v1270, %v1640
        %v1722 = vadd.f32 %v1273, %v1643
        %v1723 = vadd.f32 %v1276, %v1646
        %v1724 = vadd.f32 %v1279, %v1649
        %v1725 = vadd.f32 %v1282, %v1652
        %v1726 = vadd.f32 %v1285, %v1655
        %v1727 = vadd.f32 %v1288, %v1658
        %v1728 = vadd.f32 %v1291, %v1661
        %v1729 = vadd.f32 %v1294, %v1664
        %v1730 = vadd.f32 %v1297, %v1667
        %v1731 = vadd.f32 %v1300, %v1670
        %v1732 = vadd.f32 %v1303, %v1673
        %v1733 = vadd.f32 %v1306, %v1676
        %v1734 = vadd.f32 %v1309, %v1679
        %v1735 = vadd.f32 %v1312, %v1682
        %v1736 = vadd.f32 %v1315, %v1685
        %v1737 = vadd.f32 %v1318, %v1688
        %v1738 = vadd.f32 %v1321, %v1691
        %v1739 = vadd.f32 %v1324, %v1694
        %v1740 = vadd.f32 %v1327, %v1697
        %v1741 = vadd.f32 %v1330, %v1700
        %v1742 = vadd.f32 %v1333, %v1703
        %v1743 = vadd.f32 %v1336, %v1706
        %v1744 = vadd.f32 %v1339, %v1709
        %v1745 = vadd.f32 %v1342, %v1712
        %v1746 = vadd.f32 %v1345, %v1715
        %v1747 = vld [vmem:[%s2] sm:$0x1]
        %v1749 = vperm.slane %v1747, 0
        %v1751 = vadd.f32 %v1717, %v1749
        %v1752 = vadd.f32 %v1718, %v1749
        %v1753 = vadd.f32 %v1719, %v1749
        %v1754 = vadd.f32 %v1720, %v1749
        %v1755 = vadd.f32 %v1721, %v1749
        %v1756 = vadd.f32 %v1722, %v1749
        %v1757 = vadd.f32 %v1723, %v1749
        %v1758 = vadd.f32 %v1724, %v1749
        %v1759 = vadd.f32 %v1725, %v1749
        %v1760 = vadd.f32 %v1726, %v1749
        %v1761 = vadd.f32 %v1727, %v1749
        %v1762 = vadd.f32 %v1728, %v1749
        %v1763 = vadd.f32 %v1729, %v1749
        %v1764 = vadd.f32 %v1730, %v1749
        %v1765 = vadd.f32 %v1731, %v1749
        %v1766 = vadd.f32 %v1732, %v1749
        %v1767 = vadd.f32 %v1733, %v1749
        %v1768 = vadd.f32 %v1734, %v1749
        %v1769 = vadd.f32 %v1735, %v1749
        %v1770 = vadd.f32 %v1736, %v1749
        %v1771 = vadd.f32 %v1737, %v1749
        %v1772 = vadd.f32 %v1738, %v1749
        %v1773 = vadd.f32 %v1739, %v1749
        %v1774 = vadd.f32 %v1740, %v1749
        %v1775 = vadd.f32 %v1741, %v1749
        %v1776 = vadd.f32 %v1742, %v1749
        %v1777 = vadd.f32 %v1743, %v1749
        %v1778 = vadd.f32 %v1744, %v1749
        %v1779 = vadd.f32 %v1745, %v1749
        %v1780 = vadd.f32 %v1746, %v1749
        %v1781 = vmax.f32 %v1751, 0.0
        %v1782 = vmax.f32 %v1752, 0.0
        %v1783 = vmax.f32 %v1753, 0.0
        %v1784 = vmax.f32 %v1754, 0.0
        %v1785 = vmax.f32 %v1755, 0.0
        %v1786 = vmax.f32 %v1756, 0.0
        %v1787 = vmax.f32 %v1757, 0.0
        %v1788 = vmax.f32 %v1758, 0.0
        %v1789 = vmax.f32 %v1759, 0.0
        %v1790 = vmax.f32 %v1760, 0.0
        %v1791 = vmax.f32 %v1761, 0.0
        %v1792 = vmax.f32 %v1762, 0.0
        %v1793 = vmax.f32 %v1763, 0.0
        %v1794 = vmax.f32 %v1764, 0.0
        %v1795 = vmax.f32 %v1765, 0.0
        %v1796 = vmax.f32 %v1766, 0.0
        %v1797 = vmax.f32 %v1767, 0.0
        %v1798 = vmax.f32 %v1768, 0.0
        %v1799 = vmax.f32 %v1769, 0.0
        %v1800 = vmax.f32 %v1770, 0.0
        %v1801 = vmax.f32 %v1771, 0.0
        %v1802 = vmax.f32 %v1772, 0.0
        %v1803 = vmax.f32 %v1773, 0.0
        %v1804 = vmax.f32 %v1774, 0.0
        %v1805 = vmax.f32 %v1775, 0.0
        %v1806 = vmax.f32 %v1776, 0.0
        %v1807 = vmax.f32 %v1777, 0.0
        %v1808 = vmax.f32 %v1778, 0.0
        %v1809 = vmax.f32 %v1779, 0.0
        %v1810 = vmax.f32 %v1780, 0.0
        %v1811 = vlaneseq
        %v1812 = vshrl.u32 %v1811, 7
        %v1813 = vadd.s32 %v1812, 8
        %v1814 = vadd.s32 %v1812, 16
        %s1815 = ssub.s32 %s221, 1
        %v1816 = vstv %s1815
        %v1817 = vadd.s32 %v1816, 1
        %v1818 = vadd.s32 %v1816, 2
        %v1819 = vadd.s32 %v1816, 3
        %v1820 = vadd.s32 %v1816, 4
        %v1821 = vadd.s32 %v1816, 5
        %v1822 = vadd.s32 %v1816, 6
        %v1823 = vadd.s32 %v1816, 7
        %v1824 = vadd.s32 %v1816, 8
        %v1825 = vadd.s32 %v1816, 9
        %vm1826 = vcmp.ge.s32.totalorder %v1816, 0
        %vm1827 = vcmp.ge.s32.totalorder %v1817, 0
        %vm1828 = vcmp.ge.s32.totalorder %v1818, 0
        %vm1829 = vcmp.ge.s32.totalorder %v1819, 0
        %vm1830 = vcmp.ge.s32.totalorder %v1820, 0
        %vm1831 = vcmp.ge.s32.totalorder %v1821, 0
        %vm1832 = vcmp.ge.s32.totalorder %v1822, 0
        %vm1833 = vcmp.ge.s32.totalorder %v1823, 0
        %vm1834 = vcmp.ge.s32.totalorder %v1824, 0
        %vm1835 = vcmp.ge.s32.totalorder %v1825, 0
        %vm1836 = vcmp.lt.s32.totalorder %v1816, 16
        %vm1837 = vcmp.lt.s32.totalorder %v1817, 16
        %vm1838 = vcmp.lt.s32.totalorder %v1818, 16
        %vm1839 = vcmp.lt.s32.totalorder %v1819, 16
        %vm1840 = vcmp.lt.s32.totalorder %v1820, 16
        %vm1841 = vcmp.lt.s32.totalorder %v1821, 16
        %vm1842 = vcmp.lt.s32.totalorder %v1822, 16
        %vm1843 = vcmp.lt.s32.totalorder %v1823, 16
        %vm1844 = vcmp.lt.s32.totalorder %v1824, 16
        %vm1845 = vcmp.lt.s32.totalorder %v1825, 16
        %vm1846 = vmand %vm1826, %vm1836
        %vm1847 = vmand %vm1827, %vm1837
        %vm1848 = vmand %vm1828, %vm1838
        %vm1849 = vmand %vm1829, %vm1839
        %vm1850 = vmand %vm1830, %vm1840
        %vm1851 = vmand %vm1831, %vm1841
        %vm1852 = vmand %vm1832, %vm1842
        %vm1853 = vmand %vm1833, %vm1843
        %vm1854 = vmand %vm1834, %vm1844
        %vm1855 = vmand %vm1835, %vm1845
        %vm1856 = vcmp.ge.s32.totalorder %v1812, 1
        %vm1857 = vcmp.ge.s32.totalorder %v1813, 1
        %vm1858 = vcmp.ge.s32.totalorder %v1814, 1
        %vm1859 = vmand %vm1846, %vm1856
        %vm1860 = vmand %vm1846, %vm1857
        %vm1861 = vmand %vm1846, %vm1858
        %vm1862 = vmand %vm1847, %vm1856
        %vm1863 = vmand %vm1847, %vm1857
        %vm1864 = vmand %vm1847, %vm1858
        %vm1865 = vmand %vm1848, %vm1856
        %vm1866 = vmand %vm1848, %vm1857
        %vm1867 = vmand %vm1848, %vm1858
        %vm1868 = vmand %vm1849, %vm1856
        %vm1869 = vmand %vm1849, %vm1857
        %vm1870 = vmand %vm1849, %vm1858
        %vm1871 = vmand %vm1850, %vm1856
        %vm1872 = vmand %vm1850, %vm1857
        %vm1873 = vmand %vm1850, %vm1858
        %vm1874 = vmand %vm1851, %vm1856
        %vm1875 = vmand %vm1851, %vm1857
        %vm1876 = vmand %vm1851, %vm1858
        %vm1877 = vmand %vm1852, %vm1856
        %vm1878 = vmand %vm1852, %vm1857
        %vm1879 = vmand %vm1852, %vm1858
        %vm1880 = vmand %vm1853, %vm1856
        %vm1881 = vmand %vm1853, %vm1857
        %vm1882 = vmand %vm1853, %vm1858
        %vm1883 = vmand %vm1854, %vm1856
        %vm1884 = vmand %vm1854, %vm1857
        %vm1885 = vmand %vm1854, %vm1858
        %vm1886 = vmand %vm1855, %vm1856
        %vm1887 = vmand %vm1855, %vm1857
        %vm1888 = vmand %vm1855, %vm1858
        %vm1889 = vcmp.le.s32.totalorder %v1812, 16
        %vm1890 = vcmp.le.s32.totalorder %v1813, 16
        %vm1891 = vcmp.le.s32.totalorder %v1814, 16
        %vm1892 = vmand %vm1859, %vm1889
        %vm1893 = vmand %vm1860, %vm1890
        %vm1894 = vmand %vm1861, %vm1891
        %vm1895 = vmand %vm1862, %vm1889
        %vm1896 = vmand %vm1863, %vm1890
        %vm1897 = vmand %vm1864, %vm1891
        %vm1898 = vmand %vm1865, %vm1889
        %vm1899 = vmand %vm1866, %vm1890
        %vm1900 = vmand %vm1867, %vm1891
        %vm1901 = vmand %vm1868, %vm1889
        %vm1902 = vmand %vm1869, %vm1890
        %vm1903 = vmand %vm1870, %vm1891
        %vm1904 = vmand %vm1871, %vm1889
        %vm1905 = vmand %vm1872, %vm1890
        %vm1906 = vmand %vm1873, %vm1891
        %vm1907 = vmand %vm1874, %vm1889
        %vm1908 = vmand %vm1875, %vm1890
        %vm1909 = vmand %vm1876, %vm1891
        %vm1910 = vmand %vm1877, %vm1889
        %vm1911 = vmand %vm1878, %vm1890
        %vm1912 = vmand %vm1879, %vm1891
        %vm1913 = vmand %vm1880, %vm1889
        %vm1914 = vmand %vm1881, %vm1890
        %vm1915 = vmand %vm1882, %vm1891
        %vm1916 = vmand %vm1883, %vm1889
        %vm1917 = vmand %vm1884, %vm1890
        %vm1918 = vmand %vm1885, %vm1891
        %vm1919 = vmand %vm1886, %vm1889
        %vm1920 = vmand %vm1887, %vm1890
        %vm1921 = vmand %vm1888, %vm1891
        %v1922 = vsel %vm1892, %v1781, 0.0
        %v1923 = vsel %vm1893, %v1782, 0.0
        %v1924 = vsel %vm1894, %v1783, 0.0
        %v1925 = vsel %vm1895, %v1784, 0.0
        %v1926 = vsel %vm1896, %v1785, 0.0
        %v1927 = vsel %vm1897, %v1786, 0.0
        %v1928 = vsel %vm1898, %v1787, 0.0
        %v1929 = vsel %vm1899, %v1788, 0.0
        %v1930 = vsel %vm1900, %v1789, 0.0
        %v1931 = vsel %vm1901, %v1790, 0.0
        %v1932 = vsel %vm1902, %v1791, 0.0
        %v1933 = vsel %vm1903, %v1792, 0.0
        %v1934 = vsel %vm1904, %v1793, 0.0
        %v1935 = vsel %vm1905, %v1794, 0.0
        %v1936 = vsel %vm1906, %v1795, 0.0
        %v1937 = vsel %vm1907, %v1796, 0.0
        %v1938 = vsel %vm1908, %v1797, 0.0
        %v1939 = vsel %vm1909, %v1798, 0.0
        %v1940 = vsel %vm1910, %v1799, 0.0
        %v1941 = vsel %vm1911, %v1800, 0.0
        %v1942 = vsel %vm1912, %v1801, 0.0
        %v1943 = vsel %vm1913, %v1802, 0.0
        %v1944 = vsel %vm1914, %v1803, 0.0
        %v1945 = vsel %vm1915, %v1804, 0.0
        %v1946 = vsel %vm1916, %v1805, 0.0
        %v1947 = vsel %vm1917, %v1806, 0.0
        %v1948 = vsel %vm1918, %v1807, 0.0
        %v1949 = vsel %vm1919, %v1808, 0.0
        %v1950 = vsel %vm1920, %v1809, 0.0
        %v1951 = vsel %vm1921, %v1810, 0.0
        %v1982 = vrot.slane %v1922, 1
        %v1983 = vrot.slane %v1923, 1
        %v1984 = vsel %vm390, %v1982, %v1983
        %v1985 = vrot.slane %v1924, 1
        %v1986 = vsel %vm390, %v1983, %v1985
        %v1987 = vrot.slane %v1925, 1
        %v1988 = vrot.slane %v1926, 1
        %v1989 = vsel %vm390, %v1987, %v1988
        %v1990 = vrot.slane %v1927, 1
        %v1991 = vsel %vm390, %v1988, %v1990
        %v1992 = vrot.slane %v1928, 1
        %v1993 = vrot.slane %v1929, 1
        %v1994 = vsel %vm390, %v1992, %v1993
        %v1995 = vrot.slane %v1930, 1
        %v1996 = vsel %vm390, %v1993, %v1995
        %v1997 = vrot.slane %v1931, 1
        %v1998 = vrot.slane %v1932, 1
        %v1999 = vsel %vm390, %v1997, %v1998
        %v2000 = vrot.slane %v1933, 1
        %v2001 = vsel %vm390, %v1998, %v2000
        %v2002 = vrot.slane %v1934, 1
        %v2003 = vrot.slane %v1935, 1
        %v2004 = vsel %vm390, %v2002, %v2003
        %v2005 = vrot.slane %v1936, 1
        %v2006 = vsel %vm390, %v2003, %v2005
        %v2007 = vrot.slane %v1937, 1
        %v2008 = vrot.slane %v1938, 1
        %v2009 = vsel %vm390, %v2007, %v2008
        %v2010 = vrot.slane %v1939, 1
        %v2011 = vsel %vm390, %v2008, %v2010
        %v2012 = vrot.slane %v1940, 1
        %v2013 = vrot.slane %v1941, 1
        %v2014 = vsel %vm390, %v2012, %v2013
        %v2015 = vrot.slane %v1942, 1
        %v2016 = vsel %vm390, %v2013, %v2015
        %v2017 = vrot.slane %v1943, 1
        %v2018 = vrot.slane %v1944, 1
        %v2019 = vsel %vm390, %v2017, %v2018
        %v2020 = vrot.slane %v1945, 1
        %v2021 = vsel %vm390, %v2018, %v2020
        %v2022 = vrot.slane %v1946, 1
        %v2023 = vrot.slane %v1947, 1
        %v2024 = vsel %vm390, %v2022, %v2023
        %v2025 = vrot.slane %v1948, 1
        %v2026 = vsel %vm390, %v2023, %v2025
        %v2027 = vrot.slane %v1949, 1
        %v2028 = vrot.slane %v1950, 1
        %v2029 = vsel %vm390, %v2027, %v2028
        %v2030 = vrot.slane %v1951, 1
        %v2031 = vsel %vm390, %v2028, %v2030
        %v2062 = vsel %vm390, %v1985, 0.0
        %v2063 = vsel %vm390, %v1990, 0.0
        %v2064 = vsel %vm390, %v1995, 0.0
        %v2065 = vsel %vm390, %v2000, 0.0
        %v2066 = vsel %vm390, %v2005, 0.0
        %v2067 = vsel %vm390, %v2010, 0.0
        %v2068 = vsel %vm390, %v2015, 0.0
        %v2069 = vsel %vm390, %v2020, 0.0
        %v2070 = vsel %vm390, %v2025, 0.0
        %v2071 = vsel %vm390, %v2030, 0.0
        %v2072 = vrot.slane %v1922, 2
        %v2073 = vrot.slane %v1923, 2
        %v2074 = vsel %vm499, %v2072, %v2073
        %v2075 = vrot.slane %v1924, 2
        %v2076 = vsel %vm499, %v2073, %v2075
        %v2077 = vrot.slane %v1925, 2
        %v2078 = vrot.slane %v1926, 2
        %v2079 = vsel %vm499, %v2077, %v2078
        %v2080 = vrot.slane %v1927, 2
        %v2081 = vsel %vm499, %v2078, %v2080
        %v2082 = vrot.slane %v1928, 2
        %v2083 = vrot.slane %v1929, 2
        %v2084 = vsel %vm499, %v2082, %v2083
        %v2085 = vrot.slane %v1930, 2
        %v2086 = vsel %vm499, %v2083, %v2085
        %v2087 = vrot.slane %v1931, 2
        %v2088 = vrot.slane %v1932, 2
        %v2089 = vsel %vm499, %v2087, %v2088
        %v2090 = vrot.slane %v1933, 2
        %v2091 = vsel %vm499, %v2088, %v2090
        %v2092 = vrot.slane %v1934, 2
        %v2093 = vrot.slane %v1935, 2
        %v2094 = vsel %vm499, %v2092, %v2093
        %v2095 = vrot.slane %v1936, 2
        %v2096 = vsel %vm499, %v2093, %v2095
        %v2097 = vrot.slane %v1937, 2
        %v2098 = vrot.slane %v1938, 2
        %v2099 = vsel %vm499, %v2097, %v2098
        %v2100 = vrot.slane %v1939, 2
        %v2101 = vsel %vm499, %v2098, %v2100
        %v2102 = vrot.slane %v1940, 2
        %v2103 = vrot.slane %v1941, 2
        %v2104 = vsel %vm499, %v2102, %v2103
        %v2105 = vrot.slane %v1942, 2
        %v2106 = vsel %vm499, %v2103, %v2105
        %v2107 = vrot.slane %v1943, 2
        %v2108 = vrot.slane %v1944, 2
        %v2109 = vsel %vm499, %v2107, %v2108
        %v2110 = vrot.slane %v1945, 2
        %v2111 = vsel %vm499, %v2108, %v2110
        %v2112 = vrot.slane %v1946, 2
        %v2113 = vrot.slane %v1947, 2
        %v2114 = vsel %vm499, %v2112, %v2113
        %v2115 = vrot.slane %v1948, 2
        %v2116 = vsel %vm499, %v2113, %v2115
        %v2117 = vrot.slane %v1949, 2
        %v2118 = vrot.slane %v1950, 2
        %v2119 = vsel %vm499, %v2117, %v2118
        %v2120 = vrot.slane %v1951, 2
        %v2121 = vsel %vm499, %v2118, %v2120
        %v2152 = vsel %vm499, %v2075, 0.0
        %v2153 = vsel %vm499, %v2080, 0.0
        %v2154 = vsel %vm499, %v2085, 0.0
        %v2155 = vsel %vm499, %v2090, 0.0
        %v2156 = vsel %vm499, %v2095, 0.0
        %v2157 = vsel %vm499, %v2100, 0.0
        %v2158 = vsel %vm499, %v2105, 0.0
        %v2159 = vsel %vm499, %v2110, 0.0
        %v2160 = vsel %vm499, %v2115, 0.0
        %v2161 = vsel %vm499, %v2120, 0.0
        %v2162 = vld [vmem:[%s3] sm:$0xff]
        %v2163 = vld [vmem:[%s3 + $0x8] sm:$0xff]
        %v2164 = vld [vmem:[%s3 + $0x10] sm:$0xff]
        %v2165 = vld [vmem:[%s3 + $0x18] sm:$0xff]
        %v2166 = vld [vmem:[%s3 + $0x20] sm:$0xff]
        %v2167 = vld [vmem:[%s3 + $0x28] sm:$0xff]
        %v2168 = vld [vmem:[%s3 + $0x30] sm:$0xff]
        %v2169 = vld [vmem:[%s3 + $0x38] sm:$0xff]
        %v2170 = vld [vmem:[%s3 + $0x40] sm:$0xff]
        %v2171 = vld [vmem:[%s3 + $0x48] sm:$0xff]
        %v2172 = vld [vmem:[%s3 + $0x50] sm:$0xff]
        %v2173 = vld [vmem:[%s3 + $0x58] sm:$0xff]
        %v2174 = vld [vmem:[%s3 + $0x60] sm:$0xff]
        %v2175 = vld [vmem:[%s3 + $0x68] sm:$0xff]
        %v2176 = vld [vmem:[%s3 + $0x70] sm:$0xff]
        %v2177 = vld [vmem:[%s3 + $0x78] sm:$0xff]
        %v2178 = vld [vmem:[%s3 + $0x80] sm:$0xff]
        %v2179 = vld [vmem:[%s3 + $0x88] sm:$0xff]
        %v2180 = vld [vmem:[%s3 + $0x90] sm:$0xff]
        %v2181 = vld [vmem:[%s3 + $0x98] sm:$0xff]
        %v2182 = vld [vmem:[%s3 + $0xa0] sm:$0xff]
        %v2183 = vld [vmem:[%s3 + $0xa8] sm:$0xff]
        %v2184 = vld [vmem:[%s3 + $0xb0] sm:$0xff]
        %v2185 = vld [vmem:[%s3 + $0xb8] sm:$0xff]
        %v2186 = vld [vmem:[%s3 + $0xc0] sm:$0xff]
        %v2187 = vld [vmem:[%s3 + $0xc8] sm:$0xff]
        %v2188 = vld [vmem:[%s3 + $0xd0] sm:$0xff]
        %v2189 = vld [vmem:[%s3 + $0xd8] sm:$0xff]
        %v2190 = vld [vmem:[%s3 + $0xe0] sm:$0xff]
        %v2191 = vld [vmem:[%s3 + $0xe8] sm:$0xff]
        %v2192 = vld [vmem:[%s3 + $0xf0] sm:$0xff]
        %v2193 = vld [vmem:[%s3 + $0xf8] sm:$0xff]
        %v2194 = vld [vmem:[%s3 + $0x100] sm:$0xff]
        %v2195 = vld [vmem:[%s3 + $0x108] sm:$0xff]
        %v2196 = vld [vmem:[%s3 + $0x110] sm:$0xff]
        %v2197 = vld [vmem:[%s3 + $0x118] sm:$0xff]
        %v2198 = vld [vmem:[%s3 + $0x120] sm:$0xff]
        %v2199 = vld [vmem:[%s3 + $0x128] sm:$0xff]
        %v2200 = vld [vmem:[%s3 + $0x130] sm:$0xff]
        %v2201 = vld [vmem:[%s3 + $0x138] sm:$0xff]
        %v2202 = vld [vmem:[%s3 + $0x140] sm:$0xff]
        %v2203 = vld [vmem:[%s3 + $0x148] sm:$0xff]
        %v2204 = vld [vmem:[%s3 + $0x150] sm:$0xff]
        %v2205 = vld [vmem:[%s3 + $0x158] sm:$0xff]
        %v2206 = vld [vmem:[%s3 + $0x160] sm:$0xff]
        %v2207 = vld [vmem:[%s3 + $0x168] sm:$0xff]
        %v2208 = vld [vmem:[%s3 + $0x170] sm:$0xff]
        %v2209 = vld [vmem:[%s3 + $0x178] sm:$0xff]
        %s2210 = scalar_lea.vmem %s3, 384
        %v2211 = vld [vmem:[%s2210] sm:$0xff]
        %v2212 = vld [vmem:[%s2210 + $0x8] sm:$0xff]
        %v2213 = vld [vmem:[%s2210 + $0x10] sm:$0xff]
        %v2214 = vld [vmem:[%s2210 + $0x18] sm:$0xff]
        %v2215 = vld [vmem:[%s2210 + $0x20] sm:$0xff]
        %v2216 = vld [vmem:[%s2210 + $0x28] sm:$0xff]
        %v2217 = vld [vmem:[%s2210 + $0x30] sm:$0xff]
        %v2218 = vld [vmem:[%s2210 + $0x38] sm:$0xff]
        %v2219 = vld [vmem:[%s2210 + $0x40] sm:$0xff]
        %v2220 = vld [vmem:[%s2210 + $0x48] sm:$0xff]
        %v2221 = vld [vmem:[%s2210 + $0x50] sm:$0xff]
        %v2222 = vld [vmem:[%s2210 + $0x58] sm:$0xff]
        %v2223 = vld [vmem:[%s2210 + $0x60] sm:$0xff]
        %v2224 = vld [vmem:[%s2210 + $0x68] sm:$0xff]
        %v2225 = vld [vmem:[%s2210 + $0x70] sm:$0xff]
        %v2226 = vld [vmem:[%s2210 + $0x78] sm:$0xff]
        %v2227 = vld [vmem:[%s2210 + $0x80] sm:$0xff]
        %v2228 = vld [vmem:[%s2210 + $0x88] sm:$0xff]
        %v2229 = vld [vmem:[%s2210 + $0x90] sm:$0xff]
        %v2230 = vld [vmem:[%s2210 + $0x98] sm:$0xff]
        %v2231 = vld [vmem:[%s2210 + $0xa0] sm:$0xff]
        %v2232 = vld [vmem:[%s2210 + $0xa8] sm:$0xff]
        %v2233 = vld [vmem:[%s2210 + $0xb0] sm:$0xff]
        %v2234 = vld [vmem:[%s2210 + $0xb8] sm:$0xff]
        %v2235 = vld [vmem:[%s2210 + $0xc0] sm:$0xff]
        %v2236 = vld [vmem:[%s2210 + $0xc8] sm:$0xff]
        %v2237 = vld [vmem:[%s2210 + $0xd0] sm:$0xff]
        %v2238 = vld [vmem:[%s2210 + $0xd8] sm:$0xff]
        %v2239 = vld [vmem:[%s2210 + $0xe0] sm:$0xff]
        %v2240 = vld [vmem:[%s2210 + $0xe8] sm:$0xff]
        %v2241 = vld [vmem:[%s2210 + $0xf0] sm:$0xff]
        %v2242 = vld [vmem:[%s2210 + $0xf8] sm:$0xff]
        %v2243 = vld [vmem:[%s2210 + $0x100] sm:$0xff]
        %v2244 = vld [vmem:[%s2210 + $0x108] sm:$0xff]
        %v2245 = vld [vmem:[%s2210 + $0x110] sm:$0xff]
        %v2246 = vld [vmem:[%s2210 + $0x118] sm:$0xff]
        %v2247 = vld [vmem:[%s2210 + $0x120] sm:$0xff]
        %v2248 = vld [vmem:[%s2210 + $0x128] sm:$0xff]
        %v2249 = vld [vmem:[%s2210 + $0x130] sm:$0xff]
        %v2250 = vld [vmem:[%s2210 + $0x138] sm:$0xff]
        %v2251 = vld [vmem:[%s2210 + $0x140] sm:$0xff]
        %v2252 = vld [vmem:[%s2210 + $0x148] sm:$0xff]
        %v2253 = vld [vmem:[%s2210 + $0x150] sm:$0xff]
        %v2254 = vld [vmem:[%s2210 + $0x158] sm:$0xff]
        %v2255 = vld [vmem:[%s2210 + $0x160] sm:$0xff]
        %v2256 = vld [vmem:[%s2210 + $0x168] sm:$0xff]
        %v2257 = vld [vmem:[%s2210 + $0x170] sm:$0xff]
        %v2258 = vld [vmem:[%s2210 + $0x178] sm:$0xff]
        %2259 = vmatpush.msra.mxu0 %v2226
        %2260 = vmatpush.msra.mxu0 %v2225
        %2261 = vmatpush.msra.mxu0 %v2224
        %2262 = vmatpush.msra.mxu0 %v2223
        %2263 = vmatpush.msra.mxu0 %v2222
        %2264 = vmatpush.msra.mxu0 %v2221
        %2265 = vmatpush.msra.mxu0 %v2220
        %2266 = vmatpush.msra.mxu0 %v2219
        %2267 = vmatpush.msra.mxu0 %v2218
        %2268 = vmatpush.msra.mxu0 %v2217
        %2269 = vmatpush.msra.mxu0 %v2216
        %2270 = vmatpush.msra.mxu0 %v2215
        %2271 = vmatpush.msra.mxu0 %v2214
        %2272 = vmatpush.msra.mxu0 %v2213
        %2273 = vmatpush.msra.mxu0 %v2212
        %2274 = vmatpush.msra.mxu0 %v2211
        %2275 = vmatmul.f32.gmra.mxu0 %v1925
        %v2276 = vpop.f32.mrf.mxu0
        %v2277 = vadd.f32 0.0, %v2276
        %2278 = vmatmul.f32.gmra.mxu0 %v1926
        %v2279 = vpop.f32.mrf.mxu0
        %v2280 = vadd.f32 0.0, %v2279
        %2281 = vmatmul.f32.gmra.mxu0 %v1927
        %v2282 = vpop.f32.mrf.mxu0
        %v2283 = vadd.f32 0.0, %v2282
        %2284 = vmatmul.f32.gmra.mxu0 %v1928
        %v2285 = vpop.f32.mrf.mxu0
        %v2286 = vadd.f32 0.0, %v2285
        %2287 = vmatmul.f32.gmra.mxu0 %v1929
        %v2288 = vpop.f32.mrf.mxu0
        %v2289 = vadd.f32 0.0, %v2288
        %2290 = vmatmul.f32.gmra.mxu0 %v1930
        %v2291 = vpop.f32.mrf.mxu0
        %v2292 = vadd.f32 0.0, %v2291
        %2293 = vmatmul.f32.gmra.mxu0 %v1931
        %v2294 = vpop.f32.mrf.mxu0
        %v2295 = vadd.f32 0.0, %v2294
        %2296 = vmatmul.f32.gmra.mxu0 %v1932
        %v2297 = vpop.f32.mrf.mxu0
        %v2298 = vadd.f32 0.0, %v2297
        %2299 = vmatmul.f32.gmra.mxu0 %v1933
        %v2300 = vpop.f32.mrf.mxu0
        %v2301 = vadd.f32 0.0, %v2300
        %2302 = vmatmul.f32.gmra.mxu0 %v1934
        %v2303 = vpop.f32.mrf.mxu0
        %v2304 = vadd.f32 0.0, %v2303
        %2305 = vmatmul.f32.gmra.mxu0 %v1935
        %v2306 = vpop.f32.mrf.mxu0
        %v2307 = vadd.f32 0.0, %v2306
        %2308 = vmatmul.f32.gmra.mxu0 %v1936
        %v2309 = vpop.f32.mrf.mxu0
        %v2310 = vadd.f32 0.0, %v2309
        %2311 = vmatmul.f32.gmra.mxu0 %v1937
        %v2312 = vpop.f32.mrf.mxu0
        %v2313 = vadd.f32 0.0, %v2312
        %2314 = vmatmul.f32.gmra.mxu0 %v1938
        %v2315 = vpop.f32.mrf.mxu0
        %v2316 = vadd.f32 0.0, %v2315
        %2317 = vmatmul.f32.gmra.mxu0 %v1939
        %v2318 = vpop.f32.mrf.mxu0
        %v2319 = vadd.f32 0.0, %v2318
        %2320 = vmatmul.f32.gmra.mxu0 %v1940
        %v2321 = vpop.f32.mrf.mxu0
        %v2322 = vadd.f32 0.0, %v2321
        %2323 = vmatmul.f32.gmra.mxu0 %v1941
        %v2324 = vpop.f32.mrf.mxu0
        %v2325 = vadd.f32 0.0, %v2324
        %2326 = vmatmul.f32.gmra.mxu0 %v1942
        %v2327 = vpop.f32.mrf.mxu0
        %v2328 = vadd.f32 0.0, %v2327
        %2329 = vmatmul.f32.gmra.mxu0 %v1943
        %v2330 = vpop.f32.mrf.mxu0
        %v2331 = vadd.f32 0.0, %v2330
        %2332 = vmatmul.f32.gmra.mxu0 %v1944
        %v2333 = vpop.f32.mrf.mxu0
        %v2334 = vadd.f32 0.0, %v2333
        %2335 = vmatmul.f32.gmra.mxu0 %v1945
        %v2336 = vpop.f32.mrf.mxu0
        %v2337 = vadd.f32 0.0, %v2336
        %2338 = vmatmul.f32.gmra.mxu0 %v1946
        %v2339 = vpop.f32.mrf.mxu0
        %v2340 = vadd.f32 0.0, %v2339
        %2341 = vmatmul.f32.gmra.mxu0 %v1947
        %v2342 = vpop.f32.mrf.mxu0
        %v2343 = vadd.f32 0.0, %v2342
        %2344 = vmatmul.f32.gmra.mxu0 %v1948
        %v2345 = vpop.f32.mrf.mxu0
        %v2346 = vadd.f32 0.0, %v2345
        %2347 = vdwg.mxu0
        %2348 = vmatpush.msra.mxu0 %v2242
        %2349 = vmatpush.msra.mxu0 %v2241
        %2350 = vmatpush.msra.mxu0 %v2240
        %2351 = vmatpush.msra.mxu0 %v2239
        %2352 = vmatpush.msra.mxu0 %v2238
        %2353 = vmatpush.msra.mxu0 %v2237
        %2354 = vmatpush.msra.mxu0 %v2236
        %2355 = vmatpush.msra.mxu0 %v2235
        %2356 = vmatpush.msra.mxu0 %v2234
        %2357 = vmatpush.msra.mxu0 %v2233
        %2358 = vmatpush.msra.mxu0 %v2232
        %2359 = vmatpush.msra.mxu0 %v2231
        %2360 = vmatpush.msra.mxu0 %v2230
        %2361 = vmatpush.msra.mxu0 %v2229
        %2362 = vmatpush.msra.mxu0 %v2228
        %2363 = vmatpush.msra.mxu0 %v2227
        %2364 = vmatmul.f32.gmra.mxu0 %v1989
        %v2365 = vpop.f32.mrf.mxu0
        %v2366 = vadd.f32 %v2277, %v2365
        %2367 = vmatmul.f32.gmra.mxu0 %v1991
        %v2368 = vpop.f32.mrf.mxu0
        %v2369 = vadd.f32 %v2280, %v2368
        %2370 = vmatmul.f32.gmra.mxu0 %v2063
        %v2371 = vpop.f32.mrf.mxu0
        %v2372 = vadd.f32 %v2283, %v2371
        %2373 = vmatmul.f32.gmra.mxu0 %v1994
        %v2374 = vpop.f32.mrf.mxu0
        %v2375 = vadd.f32 %v2286, %v2374
        %2376 = vmatmul.f32.gmra.mxu0 %v1996
        %v2377 = vpop.f32.mrf.mxu0
        %v2378 = vadd.f32 %v2289, %v2377
        %2379 = vmatmul.f32.gmra.mxu0 %v2064
        %v2380 = vpop.f32.mrf.mxu0
        %v2381 = vadd.f32 %v2292, %v2380
        %2382 = vmatmul.f32.gmra.mxu0 %v1999
        %v2383 = vpop.f32.mrf.mxu0
        %v2384 = vadd.f32 %v2295, %v2383
        %2385 = vmatmul.f32.gmra.mxu0 %v2001
        %v2386 = vpop.f32.mrf.mxu0
        %v2387 = vadd.f32 %v2298, %v2386
        %2388 = vmatmul.f32.gmra.mxu0 %v2065
        %v2389 = vpop.f32.mrf.mxu0
        %v2390 = vadd.f32 %v2301, %v2389
        %2391 = vmatmul.f32.gmra.mxu0 %v2004
        %v2392 = vpop.f32.mrf.mxu0
        %v2393 = vadd.f32 %v2304, %v2392
        %2394 = vmatmul.f32.gmra.mxu0 %v2006
        %v2395 = vpop.f32.mrf.mxu0
        %v2396 = vadd.f32 %v2307, %v2395
        %2397 = vmatmul.f32.gmra.mxu0 %v2066
        %v2398 = vpop.f32.mrf.mxu0
        %v2399 = vadd.f32 %v2310, %v2398
        %2400 = vmatmul.f32.gmra.mxu0 %v2009
        %v2401 = vpop.f32.mrf.mxu0
        %v2402 = vadd.f32 %v2313, %v2401
        %2403 = vmatmul.f32.gmra.mxu0 %v2011
        %v2404 = vpop.f32.mrf.mxu0
        %v2405 = vadd.f32 %v2316, %v2404
        %2406 = vmatmul.f32.gmra.mxu0 %v2067
        %v2407 = vpop.f32.mrf.mxu0
        %v2408 = vadd.f32 %v2319, %v2407
        %2409 = vmatmul.f32.gmra.mxu0 %v2014
        %v2410 = vpop.f32.mrf.mxu0
        %v2411 = vadd.f32 %v2322, %v2410
        %2412 = vmatmul.f32.gmra.mxu0 %v2016
        %v2413 = vpop.f32.mrf.mxu0
        %v2414 = vadd.f32 %v2325, %v2413
        %2415 = vmatmul.f32.gmra.mxu0 %v2068
        %v2416 = vpop.f32.mrf.mxu0
        %v2417 = vadd.f32 %v2328, %v2416
        %2418 = vmatmul.f32.gmra.mxu0 %v2019
        %v2419 = vpop.f32.mrf.mxu0
        %v2420 = vadd.f32 %v2331, %v2419
        %2421 = vmatmul.f32.gmra.mxu0 %v2021
        %v2422 = vpop.f32.mrf.mxu0
        %v2423 = vadd.f32 %v2334, %v2422
        %2424 = vmatmul.f32.gmra.mxu0 %v2069
        %v2425 = vpop.f32.mrf.mxu0
        %v2426 = vadd.f32 %v2337, %v2425
        %2427 = vmatmul.f32.gmra.mxu0 %v2024
        %v2428 = vpop.f32.mrf.mxu0
        %v2429 = vadd.f32 %v2340, %v2428
        %2430 = vmatmul.f32.gmra.mxu0 %v2026
        %v2431 = vpop.f32.mrf.mxu0
        %v2432 = vadd.f32 %v2343, %v2431
        %2433 = vmatmul.f32.gmra.mxu0 %v2070
        %v2434 = vpop.f32.mrf.mxu0
        %v2435 = vadd.f32 %v2346, %v2434
        %2436 = vdwg.mxu0
        %2437 = vmatpush.msra.mxu0 %v2258
        %2438 = vmatpush.msra.mxu0 %v2257
        %2439 = vmatpush.msra.mxu0 %v2256
        %2440 = vmatpush.msra.mxu0 %v2255
        %2441 = vmatpush.msra.mxu0 %v2254
        %2442 = vmatpush.msra.mxu0 %v2253
        %2443 = vmatpush.msra.mxu0 %v2252
        %2444 = vmatpush.msra.mxu0 %v2251
        %2445 = vmatpush.msra.mxu0 %v2250
        %2446 = vmatpush.msra.mxu0 %v2249
        %2447 = vmatpush.msra.mxu0 %v2248
        %2448 = vmatpush.msra.mxu0 %v2247
        %2449 = vmatpush.msra.mxu0 %v2246
        %2450 = vmatpush.msra.mxu0 %v2245
        %2451 = vmatpush.msra.mxu0 %v2244
        %2452 = vmatpush.msra.mxu0 %v2243
        %2453 = vmatmul.f32.gmra.mxu0 %v2079
        %v2454 = vpop.f32.mrf.mxu0
        %v2455 = vadd.f32 %v2366, %v2454
        %2456 = vmatmul.f32.gmra.mxu0 %v2081
        %v2457 = vpop.f32.mrf.mxu0
        %v2458 = vadd.f32 %v2369, %v2457
        %2459 = vmatmul.f32.gmra.mxu0 %v2153
        %v2460 = vpop.f32.mrf.mxu0
        %v2461 = vadd.f32 %v2372, %v2460
        %2462 = vmatmul.f32.gmra.mxu0 %v2084
        %v2463 = vpop.f32.mrf.mxu0
        %v2464 = vadd.f32 %v2375, %v2463
        %2465 = vmatmul.f32.gmra.mxu0 %v2086
        %v2466 = vpop.f32.mrf.mxu0
        %v2467 = vadd.f32 %v2378, %v2466
        %2468 = vmatmul.f32.gmra.mxu0 %v2154
        %v2469 = vpop.f32.mrf.mxu0
        %v2470 = vadd.f32 %v2381, %v2469
        %2471 = vmatmul.f32.gmra.mxu0 %v2089
        %v2472 = vpop.f32.mrf.mxu0
        %v2473 = vadd.f32 %v2384, %v2472
        %2474 = vmatmul.f32.gmra.mxu0 %v2091
        %v2475 = vpop.f32.mrf.mxu0
        %v2476 = vadd.f32 %v2387, %v2475
        %2477 = vmatmul.f32.gmra.mxu0 %v2155
        %v2478 = vpop.f32.mrf.mxu0
        %v2479 = vadd.f32 %v2390, %v2478
        %2480 = vmatmul.f32.gmra.mxu0 %v2094
        %v2481 = vpop.f32.mrf.mxu0
        %v2482 = vadd.f32 %v2393, %v2481
        %2483 = vmatmul.f32.gmra.mxu0 %v2096
        %v2484 = vpop.f32.mrf.mxu0
        %v2485 = vadd.f32 %v2396, %v2484
        %2486 = vmatmul.f32.gmra.mxu0 %v2156
        %v2487 = vpop.f32.mrf.mxu0
        %v2488 = vadd.f32 %v2399, %v2487
        %2489 = vmatmul.f32.gmra.mxu0 %v2099
        %v2490 = vpop.f32.mrf.mxu0
        %v2491 = vadd.f32 %v2402, %v2490
        %2492 = vmatmul.f32.gmra.mxu0 %v2101
        %v2493 = vpop.f32.mrf.mxu0
        %v2494 = vadd.f32 %v2405, %v2493
        %2495 = vmatmul.f32.gmra.mxu0 %v2157
        %v2496 = vpop.f32.mrf.mxu0
        %v2497 = vadd.f32 %v2408, %v2496
        %2498 = vmatmul.f32.gmra.mxu0 %v2104
        %v2499 = vpop.f32.mrf.mxu0
        %v2500 = vadd.f32 %v2411, %v2499
        %2501 = vmatmul.f32.gmra.mxu0 %v2106
        %v2502 = vpop.f32.mrf.mxu0
        %v2503 = vadd.f32 %v2414, %v2502
        %2504 = vmatmul.f32.gmra.mxu0 %v2158
        %v2505 = vpop.f32.mrf.mxu0
        %v2506 = vadd.f32 %v2417, %v2505
        %2507 = vmatmul.f32.gmra.mxu0 %v2109
        %v2508 = vpop.f32.mrf.mxu0
        %v2509 = vadd.f32 %v2420, %v2508
        %2510 = vmatmul.f32.gmra.mxu0 %v2111
        %v2511 = vpop.f32.mrf.mxu0
        %v2512 = vadd.f32 %v2423, %v2511
        %2513 = vmatmul.f32.gmra.mxu0 %v2159
        %v2514 = vpop.f32.mrf.mxu0
        %v2515 = vadd.f32 %v2426, %v2514
        %2516 = vmatmul.f32.gmra.mxu0 %v2114
        %v2517 = vpop.f32.mrf.mxu0
        %v2518 = vadd.f32 %v2429, %v2517
        %2519 = vmatmul.f32.gmra.mxu0 %v2116
        %v2520 = vpop.f32.mrf.mxu0
        %v2521 = vadd.f32 %v2432, %v2520
        %2522 = vmatmul.f32.gmra.mxu0 %v2160
        %v2523 = vpop.f32.mrf.mxu0
        %v2524 = vadd.f32 %v2435, %v2523
        %2525 = vdwg.mxu0
        %2526 = vmatpush.msra.mxu0 %v2177
        %2527 = vmatpush.msra.mxu0 %v2176
        %2528 = vmatpush.msra.mxu0 %v2175
        %2529 = vmatpush.msra.mxu0 %v2174
        %2530 = vmatpush.msra.mxu0 %v2173
        %2531 = vmatpush.msra.mxu0 %v2172
        %2532 = vmatpush.msra.mxu0 %v2171
        %2533 = vmatpush.msra.mxu0 %v2170
        %2534 = vmatpush.msra.mxu0 %v2169
        %2535 = vmatpush.msra.mxu0 %v2168
        %2536 = vmatpush.msra.mxu0 %v2167
        %2537 = vmatpush.msra.mxu0 %v2166
        %2538 = vmatpush.msra.mxu0 %v2165
        %2539 = vmatpush.msra.mxu0 %v2164
        %2540 = vmatpush.msra.mxu0 %v2163
        %2541 = vmatpush.msra.mxu0 %v2162
        %2542 = vmatmul.f32.gmra.mxu0 %v1922
        %v2543 = vpop.f32.mrf.mxu0
        %v2544 = vadd.f32 %v2455, %v2543
        %2545 = vmatmul.f32.gmra.mxu0 %v1923
        %v2546 = vpop.f32.mrf.mxu0
        %v2547 = vadd.f32 %v2458, %v2546
        %2548 = vmatmul.f32.gmra.mxu0 %v1924
        %v2549 = vpop.f32.mrf.mxu0
        %v2550 = vadd.f32 %v2461, %v2549
        %2551 = vmatmul.f32.gmra.mxu0 %v1925
        %v2552 = vpop.f32.mrf.mxu0
        %v2553 = vadd.f32 %v2464, %v2552
        %2554 = vmatmul.f32.gmra.mxu0 %v1926
        %v2555 = vpop.f32.mrf.mxu0
        %v2556 = vadd.f32 %v2467, %v2555
        %2557 = vmatmul.f32.gmra.mxu0 %v1927
        %v2558 = vpop.f32.mrf.mxu0
        %v2559 = vadd.f32 %v2470, %v2558
        %2560 = vmatmul.f32.gmra.mxu0 %v1928
        %v2561 = vpop.f32.mrf.mxu0
        %v2562 = vadd.f32 %v2473, %v2561
        %2563 = vmatmul.f32.gmra.mxu0 %v1929
        %v2564 = vpop.f32.mrf.mxu0
        %v2565 = vadd.f32 %v2476, %v2564
        %2566 = vmatmul.f32.gmra.mxu0 %v1930
        %v2567 = vpop.f32.mrf.mxu0
        %v2568 = vadd.f32 %v2479, %v2567
        %2569 = vmatmul.f32.gmra.mxu0 %v1931
        %v2570 = vpop.f32.mrf.mxu0
        %v2571 = vadd.f32 %v2482, %v2570
        %2572 = vmatmul.f32.gmra.mxu0 %v1932
        %v2573 = vpop.f32.mrf.mxu0
        %v2574 = vadd.f32 %v2485, %v2573
        %2575 = vmatmul.f32.gmra.mxu0 %v1933
        %v2576 = vpop.f32.mrf.mxu0
        %v2577 = vadd.f32 %v2488, %v2576
        %2578 = vmatmul.f32.gmra.mxu0 %v1934
        %v2579 = vpop.f32.mrf.mxu0
        %v2580 = vadd.f32 %v2491, %v2579
        %2581 = vmatmul.f32.gmra.mxu0 %v1935
        %v2582 = vpop.f32.mrf.mxu0
        %v2583 = vadd.f32 %v2494, %v2582
        %2584 = vmatmul.f32.gmra.mxu0 %v1936
        %v2585 = vpop.f32.mrf.mxu0
        %v2586 = vadd.f32 %v2497, %v2585
        %2587 = vmatmul.f32.gmra.mxu0 %v1937
        %v2588 = vpop.f32.mrf.mxu0
        %v2589 = vadd.f32 %v2500, %v2588
        %2590 = vmatmul.f32.gmra.mxu0 %v1938
        %v2591 = vpop.f32.mrf.mxu0
        %v2592 = vadd.f32 %v2503, %v2591
        %2593 = vmatmul.f32.gmra.mxu0 %v1939
        %v2594 = vpop.f32.mrf.mxu0
        %v2595 = vadd.f32 %v2506, %v2594
        %2596 = vmatmul.f32.gmra.mxu0 %v1940
        %v2597 = vpop.f32.mrf.mxu0
        %v2598 = vadd.f32 %v2509, %v2597
        %2599 = vmatmul.f32.gmra.mxu0 %v1941
        %v2600 = vpop.f32.mrf.mxu0
        %v2601 = vadd.f32 %v2512, %v2600
        %2602 = vmatmul.f32.gmra.mxu0 %v1942
        %v2603 = vpop.f32.mrf.mxu0
        %v2604 = vadd.f32 %v2515, %v2603
        %2605 = vmatmul.f32.gmra.mxu0 %v1943
        %v2606 = vpop.f32.mrf.mxu0
        %v2607 = vadd.f32 %v2518, %v2606
        %2608 = vmatmul.f32.gmra.mxu0 %v1944
        %v2609 = vpop.f32.mrf.mxu0
        %v2610 = vadd.f32 %v2521, %v2609
        %2611 = vmatmul.f32.gmra.mxu0 %v1945
        %v2612 = vpop.f32.mrf.mxu0
        %v2613 = vadd.f32 %v2524, %v2612
        %2614 = vdwg.mxu0
        %2615 = vmatpush.msra.mxu0 %v2193
        %2616 = vmatpush.msra.mxu0 %v2192
        %2617 = vmatpush.msra.mxu0 %v2191
        %2618 = vmatpush.msra.mxu0 %v2190
        %2619 = vmatpush.msra.mxu0 %v2189
        %2620 = vmatpush.msra.mxu0 %v2188
        %2621 = vmatpush.msra.mxu0 %v2187
        %2622 = vmatpush.msra.mxu0 %v2186
        %2623 = vmatpush.msra.mxu0 %v2185
        %2624 = vmatpush.msra.mxu0 %v2184
        %2625 = vmatpush.msra.mxu0 %v2183
        %2626 = vmatpush.msra.mxu0 %v2182
        %2627 = vmatpush.msra.mxu0 %v2181
        %2628 = vmatpush.msra.mxu0 %v2180
        %2629 = vmatpush.msra.mxu0 %v2179
        %2630 = vmatpush.msra.mxu0 %v2178
        %2631 = vmatmul.f32.gmra.mxu0 %v1984
        %v2632 = vpop.f32.mrf.mxu0
        %v2633 = vadd.f32 %v2544, %v2632
        %2634 = vmatmul.f32.gmra.mxu0 %v1986
        %v2635 = vpop.f32.mrf.mxu0
        %v2636 = vadd.f32 %v2547, %v2635
        %2637 = vmatmul.f32.gmra.mxu0 %v2062
        %v2638 = vpop.f32.mrf.mxu0
        %v2639 = vadd.f32 %v2550, %v2638
        %2640 = vmatmul.f32.gmra.mxu0 %v1989
        %v2641 = vpop.f32.mrf.mxu0
        %v2642 = vadd.f32 %v2553, %v2641
        %2643 = vmatmul.f32.gmra.mxu0 %v1991
        %v2644 = vpop.f32.mrf.mxu0
        %v2645 = vadd.f32 %v2556, %v2644
        %2646 = vmatmul.f32.gmra.mxu0 %v2063
        %v2647 = vpop.f32.mrf.mxu0
        %v2648 = vadd.f32 %v2559, %v2647
        %2649 = vmatmul.f32.gmra.mxu0 %v1994
        %v2650 = vpop.f32.mrf.mxu0
        %v2651 = vadd.f32 %v2562, %v2650
        %2652 = vmatmul.f32.gmra.mxu0 %v1996
        %v2653 = vpop.f32.mrf.mxu0
        %v2654 = vadd.f32 %v2565, %v2653
        %2655 = vmatmul.f32.gmra.mxu0 %v2064
        %v2656 = vpop.f32.mrf.mxu0
        %v2657 = vadd.f32 %v2568, %v2656
        %2658 = vmatmul.f32.gmra.mxu0 %v1999
        %v2659 = vpop.f32.mrf.mxu0
        %v2660 = vadd.f32 %v2571, %v2659
        %2661 = vmatmul.f32.gmra.mxu0 %v2001
        %v2662 = vpop.f32.mrf.mxu0
        %v2663 = vadd.f32 %v2574, %v2662
        %2664 = vmatmul.f32.gmra.mxu0 %v2065
        %v2665 = vpop.f32.mrf.mxu0
        %v2666 = vadd.f32 %v2577, %v2665
        %2667 = vmatmul.f32.gmra.mxu0 %v2004
        %v2668 = vpop.f32.mrf.mxu0
        %v2669 = vadd.f32 %v2580, %v2668
        %2670 = vmatmul.f32.gmra.mxu0 %v2006
        %v2671 = vpop.f32.mrf.mxu0
        %v2672 = vadd.f32 %v2583, %v2671
        %2673 = vmatmul.f32.gmra.mxu0 %v2066
        %v2674 = vpop.f32.mrf.mxu0
        %v2675 = vadd.f32 %v2586, %v2674
        %2676 = vmatmul.f32.gmra.mxu0 %v2009
        %v2677 = vpop.f32.mrf.mxu0
        %v2678 = vadd.f32 %v2589, %v2677
        %2679 = vmatmul.f32.gmra.mxu0 %v2011
        %v2680 = vpop.f32.mrf.mxu0
        %v2681 = vadd.f32 %v2592, %v2680
        %2682 = vmatmul.f32.gmra.mxu0 %v2067
        %v2683 = vpop.f32.mrf.mxu0
        %v2684 = vadd.f32 %v2595, %v2683
        %2685 = vmatmul.f32.gmra.mxu0 %v2014
        %v2686 = vpop.f32.mrf.mxu0
        %v2687 = vadd.f32 %v2598, %v2686
        %2688 = vmatmul.f32.gmra.mxu0 %v2016
        %v2689 = vpop.f32.mrf.mxu0
        %v2690 = vadd.f32 %v2601, %v2689
        %2691 = vmatmul.f32.gmra.mxu0 %v2068
        %v2692 = vpop.f32.mrf.mxu0
        %v2693 = vadd.f32 %v2604, %v2692
        %2694 = vmatmul.f32.gmra.mxu0 %v2019
        %v2695 = vpop.f32.mrf.mxu0
        %v2696 = vadd.f32 %v2607, %v2695
        %2697 = vmatmul.f32.gmra.mxu0 %v2021
        %v2698 = vpop.f32.mrf.mxu0
        %v2699 = vadd.f32 %v2610, %v2698
        %2700 = vmatmul.f32.gmra.mxu0 %v2069
        %v2701 = vpop.f32.mrf.mxu0
        %v2702 = vadd.f32 %v2613, %v2701
        %2703 = vdwg.mxu0
        %2704 = vmatpush.msra.mxu0 %v2209
        %2705 = vmatpush.msra.mxu0 %v2208
        %2706 = vmatpush.msra.mxu0 %v2207
        %2707 = vmatpush.msra.mxu0 %v2206
        %2708 = vmatpush.msra.mxu0 %v2205
        %2709 = vmatpush.msra.mxu0 %v2204
        %2710 = vmatpush.msra.mxu0 %v2203
        %2711 = vmatpush.msra.mxu0 %v2202
        %2712 = vmatpush.msra.mxu0 %v2201
        %2713 = vmatpush.msra.mxu0 %v2200
        %2714 = vmatpush.msra.mxu0 %v2199
        %2715 = vmatpush.msra.mxu0 %v2198
        %2716 = vmatpush.msra.mxu0 %v2197
        %2717 = vmatpush.msra.mxu0 %v2196
        %2718 = vmatpush.msra.mxu0 %v2195
        %2719 = vmatpush.msra.mxu0 %v2194
        %2720 = vmatmul.f32.gmra.mxu0 %v2074
        %v2721 = vpop.f32.mrf.mxu0
        %v2722 = vadd.f32 %v2633, %v2721
        %2723 = vmatmul.f32.gmra.mxu0 %v2076
        %v2724 = vpop.f32.mrf.mxu0
        %v2725 = vadd.f32 %v2636, %v2724
        %2726 = vmatmul.f32.gmra.mxu0 %v2152
        %v2727 = vpop.f32.mrf.mxu0
        %v2728 = vadd.f32 %v2639, %v2727
        %2729 = vmatmul.f32.gmra.mxu0 %v2079
        %v2730 = vpop.f32.mrf.mxu0
        %v2731 = vadd.f32 %v2642, %v2730
        %2732 = vmatmul.f32.gmra.mxu0 %v2081
        %v2733 = vpop.f32.mrf.mxu0
        %v2734 = vadd.f32 %v2645, %v2733
        %2735 = vmatmul.f32.gmra.mxu0 %v2153
        %v2736 = vpop.f32.mrf.mxu0
        %v2737 = vadd.f32 %v2648, %v2736
        %2738 = vmatmul.f32.gmra.mxu0 %v2084
        %v2739 = vpop.f32.mrf.mxu0
        %v2740 = vadd.f32 %v2651, %v2739
        %2741 = vmatmul.f32.gmra.mxu0 %v2086
        %v2742 = vpop.f32.mrf.mxu0
        %v2743 = vadd.f32 %v2654, %v2742
        %2744 = vmatmul.f32.gmra.mxu0 %v2154
        %v2745 = vpop.f32.mrf.mxu0
        %v2746 = vadd.f32 %v2657, %v2745
        %2747 = vmatmul.f32.gmra.mxu0 %v2089
        %v2748 = vpop.f32.mrf.mxu0
        %v2749 = vadd.f32 %v2660, %v2748
        %2750 = vmatmul.f32.gmra.mxu0 %v2091
        %v2751 = vpop.f32.mrf.mxu0
        %v2752 = vadd.f32 %v2663, %v2751
        %2753 = vmatmul.f32.gmra.mxu0 %v2155
        %v2754 = vpop.f32.mrf.mxu0
        %v2755 = vadd.f32 %v2666, %v2754
        %2756 = vmatmul.f32.gmra.mxu0 %v2094
        %v2757 = vpop.f32.mrf.mxu0
        %v2758 = vadd.f32 %v2669, %v2757
        %2759 = vmatmul.f32.gmra.mxu0 %v2096
        %v2760 = vpop.f32.mrf.mxu0
        %v2761 = vadd.f32 %v2672, %v2760
        %2762 = vmatmul.f32.gmra.mxu0 %v2156
        %v2763 = vpop.f32.mrf.mxu0
        %v2764 = vadd.f32 %v2675, %v2763
        %2765 = vmatmul.f32.gmra.mxu0 %v2099
        %v2766 = vpop.f32.mrf.mxu0
        %v2767 = vadd.f32 %v2678, %v2766
        %2768 = vmatmul.f32.gmra.mxu0 %v2101
        %v2769 = vpop.f32.mrf.mxu0
        %v2770 = vadd.f32 %v2681, %v2769
        %2771 = vmatmul.f32.gmra.mxu0 %v2157
        %v2772 = vpop.f32.mrf.mxu0
        %v2773 = vadd.f32 %v2684, %v2772
        %2774 = vmatmul.f32.gmra.mxu0 %v2104
        %v2775 = vpop.f32.mrf.mxu0
        %v2776 = vadd.f32 %v2687, %v2775
        %2777 = vmatmul.f32.gmra.mxu0 %v2106
        %v2778 = vpop.f32.mrf.mxu0
        %v2779 = vadd.f32 %v2690, %v2778
        %2780 = vmatmul.f32.gmra.mxu0 %v2158
        %v2781 = vpop.f32.mrf.mxu0
        %v2782 = vadd.f32 %v2693, %v2781
        %2783 = vmatmul.f32.gmra.mxu0 %v2109
        %v2784 = vpop.f32.mrf.mxu0
        %v2785 = vadd.f32 %v2696, %v2784
        %2786 = vmatmul.f32.gmra.mxu0 %v2111
        %v2787 = vpop.f32.mrf.mxu0
        %v2788 = vadd.f32 %v2699, %v2787
        %2789 = vmatmul.f32.gmra.mxu0 %v2159
        %v2790 = vpop.f32.mrf.mxu0
        %v2791 = vadd.f32 %v2702, %v2790
        %2792 = vdwg.mxu0
        %s2793 = scalar_lea.vmem %s3, 768
        %v2794 = vld [vmem:[%s2793] sm:$0xff]
        %v2795 = vld [vmem:[%s2793 + $0x8] sm:$0xff]
        %v2796 = vld [vmem:[%s2793 + $0x10] sm:$0xff]
        %v2797 = vld [vmem:[%s2793 + $0x18] sm:$0xff]
        %v2798 = vld [vmem:[%s2793 + $0x20] sm:$0xff]
        %v2799 = vld [vmem:[%s2793 + $0x28] sm:$0xff]
        %v2800 = vld [vmem:[%s2793 + $0x30] sm:$0xff]
        %v2801 = vld [vmem:[%s2793 + $0x38] sm:$0xff]
        %v2802 = vld [vmem:[%s2793 + $0x40] sm:$0xff]
        %v2803 = vld [vmem:[%s2793 + $0x48] sm:$0xff]
        %v2804 = vld [vmem:[%s2793 + $0x50] sm:$0xff]
        %v2805 = vld [vmem:[%s2793 + $0x58] sm:$0xff]
        %v2806 = vld [vmem:[%s2793 + $0x60] sm:$0xff]
        %v2807 = vld [vmem:[%s2793 + $0x68] sm:$0xff]
        %v2808 = vld [vmem:[%s2793 + $0x70] sm:$0xff]
        %v2809 = vld [vmem:[%s2793 + $0x78] sm:$0xff]
        %v2810 = vld [vmem:[%s2793 + $0x80] sm:$0xff]
        %v2811 = vld [vmem:[%s2793 + $0x88] sm:$0xff]
        %v2812 = vld [vmem:[%s2793 + $0x90] sm:$0xff]
        %v2813 = vld [vmem:[%s2793 + $0x98] sm:$0xff]
        %v2814 = vld [vmem:[%s2793 + $0xa0] sm:$0xff]
        %v2815 = vld [vmem:[%s2793 + $0xa8] sm:$0xff]
        %v2816 = vld [vmem:[%s2793 + $0xb0] sm:$0xff]
        %v2817 = vld [vmem:[%s2793 + $0xb8] sm:$0xff]
        %v2818 = vld [vmem:[%s2793 + $0xc0] sm:$0xff]
        %v2819 = vld [vmem:[%s2793 + $0xc8] sm:$0xff]
        %v2820 = vld [vmem:[%s2793 + $0xd0] sm:$0xff]
        %v2821 = vld [vmem:[%s2793 + $0xd8] sm:$0xff]
        %v2822 = vld [vmem:[%s2793 + $0xe0] sm:$0xff]
        %v2823 = vld [vmem:[%s2793 + $0xe8] sm:$0xff]
        %v2824 = vld [vmem:[%s2793 + $0xf0] sm:$0xff]
        %v2825 = vld [vmem:[%s2793 + $0xf8] sm:$0xff]
        %v2826 = vld [vmem:[%s2793 + $0x100] sm:$0xff]
        %v2827 = vld [vmem:[%s2793 + $0x108] sm:$0xff]
        %v2828 = vld [vmem:[%s2793 + $0x110] sm:$0xff]
        %v2829 = vld [vmem:[%s2793 + $0x118] sm:$0xff]
        %v2830 = vld [vmem:[%s2793 + $0x120] sm:$0xff]
        %v2831 = vld [vmem:[%s2793 + $0x128] sm:$0xff]
        %v2832 = vld [vmem:[%s2793 + $0x130] sm:$0xff]
        %v2833 = vld [vmem:[%s2793 + $0x138] sm:$0xff]
        %v2834 = vld [vmem:[%s2793 + $0x140] sm:$0xff]
        %v2835 = vld [vmem:[%s2793 + $0x148] sm:$0xff]
        %v2836 = vld [vmem:[%s2793 + $0x150] sm:$0xff]
        %v2837 = vld [vmem:[%s2793 + $0x158] sm:$0xff]
        %v2838 = vld [vmem:[%s2793 + $0x160] sm:$0xff]
        %v2839 = vld [vmem:[%s2793 + $0x168] sm:$0xff]
        %v2840 = vld [vmem:[%s2793 + $0x170] sm:$0xff]
        %v2841 = vld [vmem:[%s2793 + $0x178] sm:$0xff]
        %2842 = vmatpush.msra.mxu0 %v2809
        %2843 = vmatpush.msra.mxu0 %v2808
        %2844 = vmatpush.msra.mxu0 %v2807
        %2845 = vmatpush.msra.mxu0 %v2806
        %2846 = vmatpush.msra.mxu0 %v2805
        %2847 = vmatpush.msra.mxu0 %v2804
        %2848 = vmatpush.msra.mxu0 %v2803
        %2849 = vmatpush.msra.mxu0 %v2802
        %2850 = vmatpush.msra.mxu0 %v2801
        %2851 = vmatpush.msra.mxu0 %v2800
        %2852 = vmatpush.msra.mxu0 %v2799
        %2853 = vmatpush.msra.mxu0 %v2798
        %2854 = vmatpush.msra.mxu0 %v2797
        %2855 = vmatpush.msra.mxu0 %v2796
        %2856 = vmatpush.msra.mxu0 %v2795
        %2857 = vmatpush.msra.mxu0 %v2794
        %2858 = vmatmul.f32.gmra.mxu0 %v1928
        %v2859 = vpop.f32.mrf.mxu0
        %v2860 = vadd.f32 0.0, %v2859
        %2861 = vmatmul.f32.gmra.mxu0 %v1929
        %v2862 = vpop.f32.mrf.mxu0
        %v2863 = vadd.f32 0.0, %v2862
        %2864 = vmatmul.f32.gmra.mxu0 %v1930
        %v2865 = vpop.f32.mrf.mxu0
        %v2866 = vadd.f32 0.0, %v2865
        %2867 = vmatmul.f32.gmra.mxu0 %v1931
        %v2868 = vpop.f32.mrf.mxu0
        %v2869 = vadd.f32 0.0, %v2868
        %2870 = vmatmul.f32.gmra.mxu0 %v1932
        %v2871 = vpop.f32.mrf.mxu0
        %v2872 = vadd.f32 0.0, %v2871
        %2873 = vmatmul.f32.gmra.mxu0 %v1933
        %v2874 = vpop.f32.mrf.mxu0
        %v2875 = vadd.f32 0.0, %v2874
        %2876 = vmatmul.f32.gmra.mxu0 %v1934
        %v2877 = vpop.f32.mrf.mxu0
        %v2878 = vadd.f32 0.0, %v2877
        %2879 = vmatmul.f32.gmra.mxu0 %v1935
        %v2880 = vpop.f32.mrf.mxu0
        %v2881 = vadd.f32 0.0, %v2880
        %2882 = vmatmul.f32.gmra.mxu0 %v1936
        %v2883 = vpop.f32.mrf.mxu0
        %v2884 = vadd.f32 0.0, %v2883
        %2885 = vmatmul.f32.gmra.mxu0 %v1937
        %v2886 = vpop.f32.mrf.mxu0
        %v2887 = vadd.f32 0.0, %v2886
        %2888 = vmatmul.f32.gmra.mxu0 %v1938
        %v2889 = vpop.f32.mrf.mxu0
        %v2890 = vadd.f32 0.0, %v2889
        %2891 = vmatmul.f32.gmra.mxu0 %v1939
        %v2892 = vpop.f32.mrf.mxu0
        %v2893 = vadd.f32 0.0, %v2892
        %2894 = vmatmul.f32.gmra.mxu0 %v1940
        %v2895 = vpop.f32.mrf.mxu0
        %v2896 = vadd.f32 0.0, %v2895
        %2897 = vmatmul.f32.gmra.mxu0 %v1941
        %v2898 = vpop.f32.mrf.mxu0
        %v2899 = vadd.f32 0.0, %v2898
        %2900 = vmatmul.f32.gmra.mxu0 %v1942
        %v2901 = vpop.f32.mrf.mxu0
        %v2902 = vadd.f32 0.0, %v2901
        %2903 = vmatmul.f32.gmra.mxu0 %v1943
        %v2904 = vpop.f32.mrf.mxu0
        %v2905 = vadd.f32 0.0, %v2904
        %2906 = vmatmul.f32.gmra.mxu0 %v1944
        %v2907 = vpop.f32.mrf.mxu0
        %v2908 = vadd.f32 0.0, %v2907
        %2909 = vmatmul.f32.gmra.mxu0 %v1945
        %v2910 = vpop.f32.mrf.mxu0
        %v2911 = vadd.f32 0.0, %v2910
        %2912 = vmatmul.f32.gmra.mxu0 %v1946
        %v2913 = vpop.f32.mrf.mxu0
        %v2914 = vadd.f32 0.0, %v2913
        %2915 = vmatmul.f32.gmra.mxu0 %v1947
        %v2916 = vpop.f32.mrf.mxu0
        %v2917 = vadd.f32 0.0, %v2916
        %2918 = vmatmul.f32.gmra.mxu0 %v1948
        %v2919 = vpop.f32.mrf.mxu0
        %v2920 = vadd.f32 0.0, %v2919
        %2921 = vmatmul.f32.gmra.mxu0 %v1949
        %v2922 = vpop.f32.mrf.mxu0
        %v2923 = vadd.f32 0.0, %v2922
        %2924 = vmatmul.f32.gmra.mxu0 %v1950
        %v2925 = vpop.f32.mrf.mxu0
        %v2926 = vadd.f32 0.0, %v2925
        %2927 = vmatmul.f32.gmra.mxu0 %v1951
        %v2928 = vpop.f32.mrf.mxu0
        %v2929 = vadd.f32 0.0, %v2928
        %2930 = vdwg.mxu0
        %2931 = vmatpush.msra.mxu0 %v2825
        %2932 = vmatpush.msra.mxu0 %v2824
        %2933 = vmatpush.msra.mxu0 %v2823
        %2934 = vmatpush.msra.mxu0 %v2822
        %2935 = vmatpush.msra.mxu0 %v2821
        %2936 = vmatpush.msra.mxu0 %v2820
        %2937 = vmatpush.msra.mxu0 %v2819
        %2938 = vmatpush.msra.mxu0 %v2818
        %2939 = vmatpush.msra.mxu0 %v2817
        %2940 = vmatpush.msra.mxu0 %v2816
        %2941 = vmatpush.msra.mxu0 %v2815
        %2942 = vmatpush.msra.mxu0 %v2814
        %2943 = vmatpush.msra.mxu0 %v2813
        %2944 = vmatpush.msra.mxu0 %v2812
        %2945 = vmatpush.msra.mxu0 %v2811
        %2946 = vmatpush.msra.mxu0 %v2810
        %2947 = vmatmul.f32.gmra.mxu0 %v1994
        %v2948 = vpop.f32.mrf.mxu0
        %v2949 = vadd.f32 %v2860, %v2948
        %2950 = vmatmul.f32.gmra.mxu0 %v1996
        %v2951 = vpop.f32.mrf.mxu0
        %v2952 = vadd.f32 %v2863, %v2951
        %2953 = vmatmul.f32.gmra.mxu0 %v2064
        %v2954 = vpop.f32.mrf.mxu0
        %v2955 = vadd.f32 %v2866, %v2954
        %2956 = vmatmul.f32.gmra.mxu0 %v1999
        %v2957 = vpop.f32.mrf.mxu0
        %v2958 = vadd.f32 %v2869, %v2957
        %2959 = vmatmul.f32.gmra.mxu0 %v2001
        %v2960 = vpop.f32.mrf.mxu0
        %v2961 = vadd.f32 %v2872, %v2960
        %2962 = vmatmul.f32.gmra.mxu0 %v2065
        %v2963 = vpop.f32.mrf.mxu0
        %v2964 = vadd.f32 %v2875, %v2963
        %2965 = vmatmul.f32.gmra.mxu0 %v2004
        %v2966 = vpop.f32.mrf.mxu0
        %v2967 = vadd.f32 %v2878, %v2966
        %2968 = vmatmul.f32.gmra.mxu0 %v2006
        %v2969 = vpop.f32.mrf.mxu0
        %v2970 = vadd.f32 %v2881, %v2969
        %2971 = vmatmul.f32.gmra.mxu0 %v2066
        %v2972 = vpop.f32.mrf.mxu0
        %v2973 = vadd.f32 %v2884, %v2972
        %2974 = vmatmul.f32.gmra.mxu0 %v2009
        %v2975 = vpop.f32.mrf.mxu0
        %v2976 = vadd.f32 %v2887, %v2975
        %2977 = vmatmul.f32.gmra.mxu0 %v2011
        %v2978 = vpop.f32.mrf.mxu0
        %v2979 = vadd.f32 %v2890, %v2978
        %2980 = vmatmul.f32.gmra.mxu0 %v2067
        %v2981 = vpop.f32.mrf.mxu0
        %v2982 = vadd.f32 %v2893, %v2981
        %2983 = vmatmul.f32.gmra.mxu0 %v2014
        %v2984 = vpop.f32.mrf.mxu0
        %v2985 = vadd.f32 %v2896, %v2984
        %2986 = vmatmul.f32.gmra.mxu0 %v2016
        %v2987 = vpop.f32.mrf.mxu0
        %v2988 = vadd.f32 %v2899, %v2987
        %2989 = vmatmul.f32.gmra.mxu0 %v2068
        %v2990 = vpop.f32.mrf.mxu0
        %v2991 = vadd.f32 %v2902, %v2990
        %2992 = vmatmul.f32.gmra.mxu0 %v2019
        %v2993 = vpop.f32.mrf.mxu0
        %v2994 = vadd.f32 %v2905, %v2993
        %2995 = vmatmul.f32.gmra.mxu0 %v2021
        %v2996 = vpop.f32.mrf.mxu0
        %v2997 = vadd.f32 %v2908, %v2996
        %2998 = vmatmul.f32.gmra.mxu0 %v2069
        %v2999 = vpop.f32.mrf.mxu0
        %v3000 = vadd.f32 %v2911, %v2999
        %3001 = vmatmul.f32.gmra.mxu0 %v2024
        %v3002 = vpop.f32.mrf.mxu0
        %v3003 = vadd.f32 %v2914, %v3002
        %3004 = vmatmul.f32.gmra.mxu0 %v2026
        %v3005 = vpop.f32.mrf.mxu0
        %v3006 = vadd.f32 %v2917, %v3005
        %3007 = vmatmul.f32.gmra.mxu0 %v2070
        %v3008 = vpop.f32.mrf.mxu0
        %v3009 = vadd.f32 %v2920, %v3008
        %3010 = vmatmul.f32.gmra.mxu0 %v2029
        %v3011 = vpop.f32.mrf.mxu0
        %v3012 = vadd.f32 %v2923, %v3011
        %3013 = vmatmul.f32.gmra.mxu0 %v2031
        %v3014 = vpop.f32.mrf.mxu0
        %v3015 = vadd.f32 %v2926, %v3014
        %3016 = vmatmul.f32.gmra.mxu0 %v2071
        %v3017 = vpop.f32.mrf.mxu0
        %v3018 = vadd.f32 %v2929, %v3017
        %3019 = vdwg.mxu0
        %3020 = vmatpush.msra.mxu0 %v2841
        %3021 = vmatpush.msra.mxu0 %v2840
        %3022 = vmatpush.msra.mxu0 %v2839
        %3023 = vmatpush.msra.mxu0 %v2838
        %3024 = vmatpush.msra.mxu0 %v2837
        %3025 = vmatpush.msra.mxu0 %v2836
        %3026 = vmatpush.msra.mxu0 %v2835
        %3027 = vmatpush.msra.mxu0 %v2834
        %3028 = vmatpush.msra.mxu0 %v2833
        %3029 = vmatpush.msra.mxu0 %v2832
        %3030 = vmatpush.msra.mxu0 %v2831
        %3031 = vmatpush.msra.mxu0 %v2830
        %3032 = vmatpush.msra.mxu0 %v2829
        %3033 = vmatpush.msra.mxu0 %v2828
        %3034 = vmatpush.msra.mxu0 %v2827
        %3035 = vmatpush.msra.mxu0 %v2826
        %3036 = vmatmul.f32.gmra.mxu0 %v2084
        %v3037 = vpop.f32.mrf.mxu0
        %v3038 = vadd.f32 %v2949, %v3037
        %3039 = vmatmul.f32.gmra.mxu0 %v2086
        %v3040 = vpop.f32.mrf.mxu0
        %v3041 = vadd.f32 %v2952, %v3040
        %3042 = vmatmul.f32.gmra.mxu0 %v2154
        %v3043 = vpop.f32.mrf.mxu0
        %v3044 = vadd.f32 %v2955, %v3043
        %3045 = vmatmul.f32.gmra.mxu0 %v2089
        %v3046 = vpop.f32.mrf.mxu0
        %v3047 = vadd.f32 %v2958, %v3046
        %3048 = vmatmul.f32.gmra.mxu0 %v2091
        %v3049 = vpop.f32.mrf.mxu0
        %v3050 = vadd.f32 %v2961, %v3049
        %3051 = vmatmul.f32.gmra.mxu0 %v2155
        %v3052 = vpop.f32.mrf.mxu0
        %v3053 = vadd.f32 %v2964, %v3052
        %3054 = vmatmul.f32.gmra.mxu0 %v2094
        %v3055 = vpop.f32.mrf.mxu0
        %v3056 = vadd.f32 %v2967, %v3055
        %3057 = vmatmul.f32.gmra.mxu0 %v2096
        %v3058 = vpop.f32.mrf.mxu0
        %v3059 = vadd.f32 %v2970, %v3058
        %3060 = vmatmul.f32.gmra.mxu0 %v2156
        %v3061 = vpop.f32.mrf.mxu0
        %v3062 = vadd.f32 %v2973, %v3061
        %3063 = vmatmul.f32.gmra.mxu0 %v2099
        %v3064 = vpop.f32.mrf.mxu0
        %v3065 = vadd.f32 %v2976, %v3064
        %3066 = vmatmul.f32.gmra.mxu0 %v2101
        %v3067 = vpop.f32.mrf.mxu0
        %v3068 = vadd.f32 %v2979, %v3067
        %3069 = vmatmul.f32.gmra.mxu0 %v2157
        %v3070 = vpop.f32.mrf.mxu0
        %v3071 = vadd.f32 %v2982, %v3070
        %3072 = vmatmul.f32.gmra.mxu0 %v2104
        %v3073 = vpop.f32.mrf.mxu0
        %v3074 = vadd.f32 %v2985, %v3073
        %3075 = vmatmul.f32.gmra.mxu0 %v2106
        %v3076 = vpop.f32.mrf.mxu0
        %v3077 = vadd.f32 %v2988, %v3076
        %3078 = vmatmul.f32.gmra.mxu0 %v2158
        %v3079 = vpop.f32.mrf.mxu0
        %v3080 = vadd.f32 %v2991, %v3079
        %3081 = vmatmul.f32.gmra.mxu0 %v2109
        %v3082 = vpop.f32.mrf.mxu0
        %v3083 = vadd.f32 %v2994, %v3082
        %3084 = vmatmul.f32.gmra.mxu0 %v2111
        %v3085 = vpop.f32.mrf.mxu0
        %v3086 = vadd.f32 %v2997, %v3085
        %3087 = vmatmul.f32.gmra.mxu0 %v2159
        %v3088 = vpop.f32.mrf.mxu0
        %v3089 = vadd.f32 %v3000, %v3088
        %3090 = vmatmul.f32.gmra.mxu0 %v2114
        %v3091 = vpop.f32.mrf.mxu0
        %v3092 = vadd.f32 %v3003, %v3091
        %3093 = vmatmul.f32.gmra.mxu0 %v2116
        %v3094 = vpop.f32.mrf.mxu0
        %v3095 = vadd.f32 %v3006, %v3094
        %3096 = vmatmul.f32.gmra.mxu0 %v2160
        %v3097 = vpop.f32.mrf.mxu0
        %v3098 = vadd.f32 %v3009, %v3097
        %3099 = vmatmul.f32.gmra.mxu0 %v2119
        %v3100 = vpop.f32.mrf.mxu0
        %v3101 = vadd.f32 %v3012, %v3100
        %3102 = vmatmul.f32.gmra.mxu0 %v2121
        %v3103 = vpop.f32.mrf.mxu0
        %v3104 = vadd.f32 %v3015, %v3103
        %3105 = vmatmul.f32.gmra.mxu0 %v2161
        %v3106 = vpop.f32.mrf.mxu0
        %v3107 = vadd.f32 %v3018, %v3106
        %3108 = vdwg.mxu0
        %v3109 = vadd.f32 %v2722, %v3038
        %v3110 = vadd.f32 %v2725, %v3041
        %v3111 = vadd.f32 %v2728, %v3044
        %v3112 = vadd.f32 %v2731, %v3047
        %v3113 = vadd.f32 %v2734, %v3050
        %v3114 = vadd.f32 %v2737, %v3053
        %v3115 = vadd.f32 %v2740, %v3056
        %v3116 = vadd.f32 %v2743, %v3059
        %v3117 = vadd.f32 %v2746, %v3062
        %v3118 = vadd.f32 %v2749, %v3065
        %v3119 = vadd.f32 %v2752, %v3068
        %v3120 = vadd.f32 %v2755, %v3071
        %v3121 = vadd.f32 %v2758, %v3074
        %v3122 = vadd.f32 %v2761, %v3077
        %v3123 = vadd.f32 %v2764, %v3080
        %v3124 = vadd.f32 %v2767, %v3083
        %v3125 = vadd.f32 %v2770, %v3086
        %v3126 = vadd.f32 %v2773, %v3089
        %v3127 = vadd.f32 %v2776, %v3092
        %v3128 = vadd.f32 %v2779, %v3095
        %v3129 = vadd.f32 %v2782, %v3098
        %v3130 = vadd.f32 %v2785, %v3101
        %v3131 = vadd.f32 %v2788, %v3104
        %v3132 = vadd.f32 %v2791, %v3107
        %v3133 = vld [vmem:[%s4] sm:$0x1]
        %v3135 = vperm.slane %v3133, 0
        %v3137 = vadd.f32 %v3109, %v3135
        %v3138 = vadd.f32 %v3110, %v3135
        %v3139 = vadd.f32 %v3111, %v3135
        %v3140 = vadd.f32 %v3112, %v3135
        %v3141 = vadd.f32 %v3113, %v3135
        %v3142 = vadd.f32 %v3114, %v3135
        %v3143 = vadd.f32 %v3115, %v3135
        %v3144 = vadd.f32 %v3116, %v3135
        %v3145 = vadd.f32 %v3117, %v3135
        %v3146 = vadd.f32 %v3118, %v3135
        %v3147 = vadd.f32 %v3119, %v3135
        %v3148 = vadd.f32 %v3120, %v3135
        %v3149 = vadd.f32 %v3121, %v3135
        %v3150 = vadd.f32 %v3122, %v3135
        %v3151 = vadd.f32 %v3123, %v3135
        %v3152 = vadd.f32 %v3124, %v3135
        %v3153 = vadd.f32 %v3125, %v3135
        %v3154 = vadd.f32 %v3126, %v3135
        %v3155 = vadd.f32 %v3127, %v3135
        %v3156 = vadd.f32 %v3128, %v3135
        %v3157 = vadd.f32 %v3129, %v3135
        %v3158 = vadd.f32 %v3130, %v3135
        %v3159 = vadd.f32 %v3131, %v3135
        %v3160 = vadd.f32 %v3132, %v3135
        %v3161 = vmax.f32 %v3137, 0.0
        %v3162 = vmax.f32 %v3138, 0.0
        %v3163 = vmax.f32 %v3139, 0.0
        %v3164 = vmax.f32 %v3140, 0.0
        %v3165 = vmax.f32 %v3141, 0.0
        %v3166 = vmax.f32 %v3142, 0.0
        %v3167 = vmax.f32 %v3143, 0.0
        %v3168 = vmax.f32 %v3144, 0.0
        %v3169 = vmax.f32 %v3145, 0.0
        %v3170 = vmax.f32 %v3146, 0.0
        %v3171 = vmax.f32 %v3147, 0.0
        %v3172 = vmax.f32 %v3148, 0.0
        %v3173 = vmax.f32 %v3149, 0.0
        %v3174 = vmax.f32 %v3150, 0.0
        %v3175 = vmax.f32 %v3151, 0.0
        %v3176 = vmax.f32 %v3152, 0.0
        %v3177 = vmax.f32 %v3153, 0.0
        %v3178 = vmax.f32 %v3154, 0.0
        %v3179 = vmax.f32 %v3155, 0.0
        %v3180 = vmax.f32 %v3156, 0.0
        %v3181 = vmax.f32 %v3157, 0.0
        %v3182 = vmax.f32 %v3158, 0.0
        %v3183 = vmax.f32 %v3159, 0.0
        %v3184 = vmax.f32 %v3160, 0.0
        %3185 = vst [vmem:[%s219] sm:$0xff] %v3161
        %3186 = vst [vmem:[%s219 + $0x8] sm:$0xff] %v3162
        %3187 = vst [vmem:[%s219 + $0x10] sm:$0xff] %v3163
        %3188 = vst [vmem:[%s219 + $0x18] sm:$0xff] %v3164
        %3189 = vst [vmem:[%s219 + $0x20] sm:$0xff] %v3165
        %3190 = vst [vmem:[%s219 + $0x28] sm:$0xff] %v3166
        %3191 = vst [vmem:[%s219 + $0x30] sm:$0xff] %v3167
        %3192 = vst [vmem:[%s219 + $0x38] sm:$0xff] %v3168
        %3193 = vst [vmem:[%s219 + $0x40] sm:$0xff] %v3169
        %3194 = vst [vmem:[%s219 + $0x48] sm:$0xff] %v3170
        %3195 = vst [vmem:[%s219 + $0x50] sm:$0xff] %v3171
        %3196 = vst [vmem:[%s219 + $0x58] sm:$0xff] %v3172
        %3197 = vst [vmem:[%s219 + $0x60] sm:$0xff] %v3173
        %3198 = vst [vmem:[%s219 + $0x68] sm:$0xff] %v3174
        %3199 = vst [vmem:[%s219 + $0x70] sm:$0xff] %v3175
        %3200 = vst [vmem:[%s219 + $0x78] sm:$0xff] %v3176
        %3201 = vst [vmem:[%s219 + $0x80] sm:$0xff] %v3177
        %3202 = vst [vmem:[%s219 + $0x88] sm:$0xff] %v3178
        %3203 = vst [vmem:[%s219 + $0x90] sm:$0xff] %v3179
        %3204 = vst [vmem:[%s219 + $0x98] sm:$0xff] %v3180
        %3205 = vst [vmem:[%s219 + $0xa0] sm:$0xff] %v3181
        %3206 = vst [vmem:[%s219 + $0xa8] sm:$0xff] %v3182
        %3207 = vst [vmem:[%s219 + $0xb0] sm:$0xff] %v3183
        %3208 = vst [vmem:[%s219 + $0xb8] sm:$0xff] %v3184
        %s3209 = smul.u32 8, %s22
        %p3210 = scmp.lt.s32.totalorder %s21, 1
        %s3211 = scalar_select %p3210, %s21, 1
        %p3212 = scmp.lt.s32.totalorder %s3209, 15
        %s3213 = scalar_select %p3212, %s3209, 15
        %s3214 = smul.addr %s3213, 3
        %s3215 = smul.addr %s3211, 48
        %s3216 = sadd.s32 %s3214, %s3215
        %s3217 = smul.addr %s3216, 8
        %s3218 = scalar_lea.vmem %s5, %s3217
        // Predicated region
        $region60: #{double_convolution.1} parent=35 // pred_check
          %p3219 = pneg %p133
        $region61: #{double_convolution.1} parent=35 // pred_check_branch
          %3221 = sbr.rel (%p3219) target = $region63
        $region62: #{double_convolution.1} parent=35 // pred_region
          %s3222 = smul.u32 8, %s22
        $region63: #{double_convolution.1} parent=35 // pred_fallthru
          _
      $region36: #{double_convolution.1} parent=5 // pred_fallthru
        _
      %p3223 = scmp.le.s32.totalorder 2, %s12
      // Predicated region
      $region64: #{double_convolution.1} parent=5 // pred_check
        %p3224 = pneg %p3223
      $region65: #{double_convolution.1} parent=5 // pred_check_branch
        %3226 = sbr.rel (%p3224) target = $region67
      $region66: #{double_convolution.1} parent=5 // pred_region
        %s3227 = ssub.s32 %s12, 2
        // Predicated region
        $region68: #{double_convolution.1} parent=66 // pred_check
          %p3228 = pneg %p139
        $region69: #{double_convolution.1} parent=66 // pred_check_branch
          %3230 = sbr.rel (%p3228) target = $region71
        $region70: #{double_convolution.1} parent=66 // pred_region
          %s3231 = smul.u32 8, %s24
          %p3232 = scmp.lt.s32.totalorder %s23, 1
          %s3233 = scalar_select %p3232, %s23, 1
          %p3234 = scmp.lt.s32.totalorder %s3231, 15
          %s3235 = scalar_select %p3234, %s3231, 15
          %s3236 = smul.addr %s3235, 3
          %s3237 = smul.addr %s3233, 48
          %s3238 = sadd.s32 %s3236, %s3237
          %s3239 = smul.addr %s3238, 8
          %s3240 = scalar_lea.vmem %s5, %s3239
        $region71: #{double_convolution.1} parent=66 // pred_fallthru
          _
      $region67: #{double_convolution.1} parent=5 // pred_fallthru
        _
    $region6: #{double_convolution.1} parent=1 // loop_footer
      %s16 = sadd.s32 1, %s12
    $region7: #{double_convolution.1} parent=1 // loop_footer_branch
      %11 = sbr.rel target = $region3
    $region8: #{double_convolution.1} parent=1 // loop_exit
      _
    %3241 = vsyncpa [#allocation5], 1
    %s3242 = scalar_lea.sflag [#allocation5], 1
    %3243 = vsyncpa %s3242, 1
  %3244 = vsyncmov [#allocation3]
  %s3245 = vpop.sfrf %3244
  %p3246 = scmp.eq.s32.totalorder %s3245, 0
  %p3247 = pneg %p3246
  %3249 = shalt.err (%p3247)

</llo_original>
